<compile_context>
chip_gen: v5e
topology: v5e:2x2
jax: 0.10.0
libtpu: 0.0.40
codegen_flags: <defaults>
</compile_context>

<pallas_src>
import functools

import jax
import jax.numpy as jnp
from jax.experimental import pallas as pl
from jax.experimental.pallas import tpu as pltpu


C_PAD = 128                                    # lane-dense channel width
STEM_OUT = 8
STAGES = [(16, 2), (24, 2), (32, 2), (48, 2)]  # (real out_channels, stride)
EXPAND = 4


def _same_pad(size, k, stride):
    out = -(-size // stride)
    pad = max((out - 1) * stride + k - size, 0)
    return pad // 2, pad - pad // 2


def _swish(y):
    # TODO(synk): if the EUP slot binds (v5e), switch to
    #   y * pl.reciprocal(1.0 + jnp.exp(-y), approx=True)
    return y * jax.nn.sigmoid(y)


# ----------------------------------------------------------------------------
# Kernel 1: plain matmul + BN + activation (used for the stem conv)
# ----------------------------------------------------------------------------
def _matmul_bn_act_kernel(x_ref, w_ref, s_ref, b_ref, o_ref, *, act):
    acc = jnp.dot(x_ref[...], w_ref[...], preferred_element_type=jnp.float32)
    y = acc * s_ref[...] + b_ref[...]
    if act == "swish":
        y = _swish(y)
    o_ref[...] = y.astype(o_ref.dtype)


def matmul_bn_act(x, w, scale, bias, act="none", tm_max=1024):
    """y = act(x @ w * scale + bias).  x:(M,K) bf16, w:(K,Co) bf16."""
    M, K = x.shape
    Co = w.shape[1]
    # largest row tile <= tm_max that divides M (no hard assert, no partial tiles)
    tm = M
    for cand in (tm_max, 512, 256, 128, 64, 32, 16, 8):
        if cand <= M and M % cand == 0:
            tm = cand
            break
    return pl.pallas_call(
        functools.partial(_matmul_bn_act_kernel, act=act),
        out_shape=jax.ShapeDtypeStruct((M, Co), jnp.bfloat16),
        grid=(M // tm,),
        in_specs=[
            pl.BlockSpec((tm, K), lambda m: (m, 0)),
            pl.BlockSpec((K, Co), lambda m: (0, 0)),
            pl.BlockSpec((1, Co), lambda m: (0, 0)),
            pl.BlockSpec((1, Co), lambda m: (0, 0)),
        ],
        out_specs=pl.BlockSpec((tm, Co), lambda m: (m, 0)),
        compiler_params=pltpu.CompilerParams(
            dimension_semantics=("parallel",)),
    )(x, w, scale.reshape(1, Co), bias.reshape(1, Co))


# ----------------------------------------------------------------------------
# Kernel 2: fully fused MBConv stage (stride 2)
#   expand 1x1 -> depthwise 3x3/s2 -> SE -> gated projection 1x1
# ----------------------------------------------------------------------------
def _mbconv_kernel(x_ref, we_ref, se_ref, be_ref, wd_ref, sd_ref, bd_ref,
                   w1_ref, b1_ref, w2_ref, b2_ref, wp_ref, sp_ref, bp_ref,
                   o_ref, e00, e01, e10, e11):
    Ho, Wo, C = o_ref.shape[1], o_ref.shape[2], o_ref.shape[3]
    planes = ((e00, e01), (e10, e11))   # planes[py][px]: pixels with y%2==py, x%2==px

    # ---- expand 1x1 conv + BN + swish ------------------------------------
    # Written into four parity-deinterleaved, zero-padded VMEM planes of shape
    # (Ho+1, Wo+1, C).  Zeroing the planes provides the SAME-padding halo, so
    # no XLA jnp.pad and no HBM round trip of the expanded tensor.
    for py in range(2):
        for px in range(2):
            pref = planes[py][px]
            pref[...] = jnp.zeros(pref.shape, pref.dtype)

    x4 = x_ref[0].reshape(Ho, 2, Wo, 2, C)          # (H,W,C) -> parity view
    for py in range(2):
        for px in range(2):
            xpl = x4[:, py, :, px, :].reshape(Ho * Wo, C)        # bf16
            acc = jnp.dot(xpl, we_ref[...], preferred_element_type=jnp.float32)
            y = acc * se_ref[...] + be_ref[...]
            y = _swish(y)
            planes[py][px][0:Ho, 0:Wo, :] = (
                y.reshape(Ho, Wo, C).astype(jnp.bfloat16))

    # ---- depthwise 3x3, stride 2, BN + swish ------------------------------
    # Output pixel (oy,ox) tap (kh,kw) reads padded pixel (2*oy+kh, 2*ox+kw),
    # i.e. plane (kh%2, kw%2) at (oy+kh//2, ox+kw//2): unit-stride slabs only.
    acc = jnp.zeros((Ho, Wo, C), jnp.float32)
    for kh in range(3):
        dy, py = divmod(kh, 2)
        for kw in range(3):
            dx, px = divmod(kw, 2)
            tap = planes[py][px][dy:dy + Ho, dx:dx + Wo, :]
            wk = wd_ref[kh:kh + 1, kw:kw + 1, :]                  # (1,1,C) f32
            acc = acc + tap.astype(jnp.float32) * wk
    h = acc * sd_ref[...].reshape(1, 1, C) + bd_ref[...].reshape(1, 1, C)
    h = _swish(h)                                                 # (Ho,Wo,C) f32

    # ---- SE: global average pool -> FC1 swish -> FC2 sigmoid -> gate ------
    pooled = jnp.sum(jnp.sum(h, axis=0), axis=0, keepdims=True)   # (1, C)
    pooled = pooled * (1.0 / float(Ho * Wo))
    h1 = jnp.dot(pooled.astype(jnp.bfloat16), w1_ref[...],
                 preferred_element_type=jnp.float32) + b1_ref[...]
    h1 = _swish(h1)
    h2 = jnp.dot(h1.astype(jnp.bfloat16), w2_ref[...],
                 preferred_element_type=jnp.float32) + b2_ref[...]
    # padded gate lanes are sigmoid(0)=0.5: harmless only because padded lanes
    # of h and padded rows of w_proj are exactly zero (see invariant above).
    gate = jax.nn.sigmoid(h2).astype(jnp.bfloat16)                # (1, C)

    # ---- gated projection 1x1 conv + BN (no activation) -------------------
    hg = h.astype(jnp.bfloat16).reshape(Ho * Wo, C) * gate        # bf16 multiply
    out = jnp.dot(hg, wp_ref[...], preferred_element_type=jnp.float32)
    out = out * sp_ref[...] + bp_ref[...]
    o_ref[0] = out.reshape(Ho, Wo, C).astype(o_ref.dtype)


def mbconv_stage(x, p):
    """One fused MBConv stage (stride 2).  x:(N,H,W,C_PAD) bf16 -> (N,H/2,W/2,C_PAD)."""
    N, H, W, C = x.shape
    assert C == C_PAD
    assert H % 2 == 0 and W % 2 == 0, "stride-2 stage expects even spatial dims"
    Ho, Wo = H // 2, W // 2
    vec = lambda a: a.reshape(1, C)
    plane = pltpu.VMEM((Ho + 1, Wo + 1, C), jnp.bfloat16)
    return pl.pallas_call(
        _mbconv_kernel,
        out_shape=jax.ShapeDtypeStruct((N, Ho, Wo, C), jnp.bfloat16),
        grid=(N,),
        in_specs=[
            pl.BlockSpec((1, H, W, C), lambda b: (b, 0, 0, 0)),   # x
            pl.BlockSpec((C, C), lambda b: (0, 0)),               # w_exp
            pl.BlockSpec((1, C), lambda b: (0, 0)),               # s_exp
            pl.BlockSpec((1, C), lambda b: (0, 0)),               # b_exp
            pl.BlockSpec((3, 3, C), lambda b: (0, 0, 0)),         # w_dw
            pl.BlockSpec((1, C), lambda b: (0, 0)),               # s_dw
            pl.BlockSpec((1, C), lambda b: (0, 0)),               # b_dw
            pl.BlockSpec((C, C), lambda b: (0, 0)),               # w_se1
            pl.BlockSpec((1, C), lambda b: (0, 0)),               # b_se1
            pl.BlockSpec((C, C), lambda b: (0, 0)),               # w_se2
            pl.BlockSpec((1, C), lambda b: (0, 0)),               # b_se2
            pl.BlockSpec((C, C), lambda b: (0, 0)),               # w_proj
            pl.BlockSpec((1, C), lambda b: (0, 0)),               # s_proj
            pl.BlockSpec((1, C), lambda b: (0, 0)),               # b_proj
        ],
        out_specs=pl.BlockSpec((1, Ho, Wo, C), lambda b: (b, 0, 0, 0)),
        scratch_shapes=[plane, plane, plane, plane],
        compiler_params=pltpu.CompilerParams(
            dimension_semantics=("parallel",)),
    )(x, p["w_exp"], vec(p["s_exp"]), vec(p["b_exp"]),
      p["w_dw"], vec(p["s_dw"]), vec(p["b_dw"]),
      p["w_se1"], vec(p["b_se1"]), p["w_se2"], vec(p["b_se2"]),
      p["w_proj"], vec(p["s_proj"]), vec(p["b_proj"]))


# ----------------------------------------------------------------------------
# Stem: 3x3/s2 conv via bf16 im2col (XLA glue) + one Pallas matmul
# ----------------------------------------------------------------------------
def conv_stem(x, w, scale, bias, stride=2):
    """x:(N,H,W,3) f32, w:(32,C_PAD) bf16 (K padded 27->32)."""
    N, H, W, Cin = x.shape
    xp = jnp.pad(x, ((0, 0), _same_pad(H, 3, stride),
                     _same_pad(W, 3, stride), (0, 0)))
    Ho = (xp.shape[1] - 3) // stride + 1
    Wo = (xp.shape[2] - 3) // stride + 1
    cols = []
    for i in range(3):
        for j in range(3):
            cols.append(jax.lax.slice(
                xp, (0, i, j, 0),
                (N, i + (Ho - 1) * stride + 1, j + (Wo - 1) * stride + 1, Cin),
                (1, stride, stride, 1)))
    patches = jnp.concatenate(cols, axis=-1)                  # (N,Ho,Wo,27)
    patches = jnp.pad(patches, ((0, 0), (0, 0), (0, 0), (0, 32 - 9 * Cin)))
    xm = patches.reshape(N * Ho * Wo, 32).astype(jnp.bfloat16)
    y = matmul_bn_act(xm, w, scale, bias, act="swish")        # batch folded in rows
    return y.reshape(N, Ho, Wo, C_PAD)


# ----------------------------------------------------------------------------
# Parameter initialization (deterministic, synthetic, zero-padded to C_PAD)
# ----------------------------------------------------------------------------
def init_params(key):
    def nrm(k, shape, s=0.1):
        return s * jax.random.normal(k, shape, jnp.float32)

    def pad2(a, rows, cols):
        return jnp.pad(a, ((0, rows - a.shape[0]), (0, cols - a.shape[1])))

    def pad1(a, n):
        return jnp.pad(a, ((0, n - a.shape[0]),))

    keys = iter(jax.random.split(key, 64))
    params = {}
    # stem flatten order (kh, kw, cin) matches the im2col concat order above.
    w_stem = nrm(next(keys), (3, 3, 3, STEM_OUT)).reshape(27, STEM_OUT)
    s_stem = 1.0 + 0.01 * jax.random.normal(next(keys), (STEM_OUT,), jnp.float32)
    b_stem = nrm(next(keys), (STEM_OUT,), 0.01)
    params["stem"] = {
        "w": pad2(w_stem, 32, C_PAD).astype(jnp.bfloat16),
        "s": pad1(s_stem, C_PAD),                 # padded scale/bias stay 0
        "b": pad1(b_stem, C_PAD),
    }

    cin = STEM_OUT
    stages = []
    for cout, _stride in STAGES:
        cmid = cin * EXPAND
        cse = max(1, cin // 4)
        stages.append({
            "w_exp": pad2(nrm(next(keys), (cin, cmid)), C_PAD, C_PAD).astype(jnp.bfloat16),
            "s_exp": pad1(1.0 + 0.01 * jax.random.normal(next(keys), (cmid,), jnp.float32), C_PAD),
            "b_exp": pad1(nrm(next(keys), (cmid,), 0.01), C_PAD),
            "w_dw": jnp.pad(nrm(next(keys), (3, 3, cmid)), ((0, 0), (0, 0), (0, C_PAD - cmid))),
            "s_dw": pad1(1.0 + 0.01 * jax.random.normal(next(keys), (cmid,), jnp.float32), C_PAD),
            "b_dw": pad1(nrm(next(keys), (cmid,), 0.01), C_PAD),
            "w_se1": pad2(nrm(next(keys), (cmid, cse)), C_PAD, C_PAD).astype(jnp.bfloat16),
            "b_se1": pad1(nrm(next(keys), (cse,), 0.01), C_PAD),
            "w_se2": pad2(nrm(next(keys), (cse, cmid)), C_PAD, C_PAD).astype(jnp.bfloat16),
            "b_se2": pad1(nrm(next(keys), (cmid,), 0.01), C_PAD),
            "w_proj": pad2(nrm(next(keys), (cmid, cout)), C_PAD, C_PAD).astype(jnp.bfloat16),
            "s_proj": pad1(1.0 + 0.01 * jax.random.normal(next(keys), (cout,), jnp.float32), C_PAD),
            "b_proj": pad1(nrm(next(keys), (cout,), 0.01), C_PAD),
        })
        cin = cout
    params["stages"] = stages
    return params


# ----------------------------------------------------------------------------
# EfficientNetBackbone forward
# ----------------------------------------------------------------------------
def efficientnet_backbone_forward(params, inputs, ret_layers=1):
    assert 0 < ret_layers < 4
    images = inputs["images"]                           # (..., 3, H, W) NCHW
    images = images.reshape((-1,) + images.shape[-3:])
    x = jnp.transpose(images, (0, 2, 3, 1))             # NCHW -> NHWC

    st = params["stem"]
    x = conv_stem(x, st["w"], st["s"], st["b"], stride=2)   # reduction_1 (skipped)

    endpoints = []                                      # reduction_2 .. reduction_5
    for p, (cout, _stride) in zip(params["stages"], STAGES):
        x = mbconv_stage(x, p)
        endpoints.append((x, cout))

    picked = endpoints[-ret_layers:]
    # strip the zero channel padding and return NCHW / f32 like the module
    bkb_features = [
        jnp.transpose(f[..., :c].astype(jnp.float32), (0, 3, 1, 2))
        for f, c in picked
    ]
    nek_features = None                                 # fpn_kwarg is None
    return {"im_bkb_features": bkb_features, "im_nek_features": nek_features}


# ----------------------------------------------------------------------------
if __name__ == "__main__":
    key = jax.random.PRNGKey(0)
    pkey, xkey = jax.random.split(key)
    params = init_params(pkey)

    # (batch, num_cams, 3, H, W) -> forward views to (batch*num_cams, 3, H, W)
    images = jax.random.normal(xkey, (1, 2, 3, 64, 64), jnp.float32)
    inputs = {"images": images}

    out = efficientnet_backbone_forward(params, inputs, ret_layers=1)
    feats = [jax.block_until_ready(f) for f in out["im_bkb_features"]]
    assert out["im_nek_features"] is None
    assert feats[-1].shape == (2, STAGES[-1][0], 2, 2), feats[-1].shape
    assert all(bool(jnp.all(jnp.isfinite(f))) for f in feats)
    print("KERNEL_OK")
</pallas_src>

<mosaic_0001>
module attributes {stable_mosaic.version = 11 : i64} {
  func.func @_matmul_bn_act_kernel(%arg0: i32, %arg1: memref<1024x32xbf16, #tpu.memory_space<vmem>>, %arg2: memref<32x128xbf16, #tpu.memory_space<vmem>>, %arg3: memref<1x128xf32, #tpu.memory_space<vmem>>, %arg4: memref<1x128xf32, #tpu.memory_space<vmem>>, %arg5: memref<1024x128xbf16, #tpu.memory_space<vmem>>) attributes {dimension_semantics = [#tpu.dimension_semantics<parallel>], iteration_bounds = array<i64: 2>, scalar_prefetch = 0 : i64, scratch_operands = 0 : i64, tpu.core_type = #tpu.core_type<tc>, window_params = [{transform_indices = @transform_0, window_bounds = array<i64: 1024, 32>}, {pipeline_mode = #tpu.pipeline_mode<synchronous>, transform_indices = @transform_1, window_bounds = array<i64: 32, 128>}, {pipeline_mode = #tpu.pipeline_mode<synchronous>, transform_indices = @transform_2, window_bounds = array<i64: 1, 128>}, {pipeline_mode = #tpu.pipeline_mode<synchronous>, transform_indices = @transform_3, window_bounds = array<i64: 1, 128>}, {transform_indices = @transform_4, window_bounds = array<i64: 1024, 128>}]} {
    %c0 = arith.constant 0 : index
    %c0_0 = arith.constant 0 : index
    %0 = vector.load %arg1[%c0, %c0_0] : memref<1024x32xbf16, #tpu.memory_space<vmem>>, vector<1024x32xbf16>
    %c0_1 = arith.constant 0 : index
    %c0_2 = arith.constant 0 : index
    %1 = vector.load %arg2[%c0_1, %c0_2] : memref<32x128xbf16, #tpu.memory_space<vmem>>, vector<32x128xbf16>
    %cst = arith.constant dense<0.000000e+00> : vector<1024x128xf32>
    %2 = tpu.matmul %0, %1, %cst {dimension_numbers = #tpu.dot_dimension_numbers<[1], [0], [0], [1], [0, 0, 1, 1], [], []>} : vector<1024x32xbf16>, vector<32x128xbf16>, vector<1024x128xf32> -> vector<1024x128xf32>
    %c0_3 = arith.constant 0 : index
    %c0_4 = arith.constant 0 : index
    %3 = vector.load %arg3[%c0_3, %c0_4] : memref<1x128xf32, #tpu.memory_space<vmem>>, vector<1x128xf32>
    %4 = vector.broadcast %3 : vector<1x128xf32> to vector<1024x128xf32>
    %5 = arith.mulf %2, %4 : vector<1024x128xf32>
    %c0_5 = arith.constant 0 : index
    %c0_6 = arith.constant 0 : index
    %6 = vector.load %arg4[%c0_5, %c0_6] : memref<1x128xf32, #tpu.memory_space<vmem>>, vector<1x128xf32>
    %7 = vector.broadcast %6 : vector<1x128xf32> to vector<1024x128xf32>
    %8 = arith.addf %5, %7 : vector<1024x128xf32>
    %9 = arith.negf %8 : vector<1024x128xf32>
    %10 = math.exp %9 : vector<1024x128xf32>
    %cst_7 = arith.constant 1.000000e+00 : f32
    %11 = vector.broadcast %cst_7 : f32 to vector<1024x128xf32>
    %12 = arith.addf %11, %10 : vector<1024x128xf32>
    %13 = arith.divf %11, %12 : vector<1024x128xf32>
    %14 = arith.mulf %8, %13 : vector<1024x128xf32>
    %15 = arith.truncf %14 : vector<1024x128xf32> to vector<1024x128xbf16>
    %c0_8 = arith.constant 0 : index
    %c0_9 = arith.constant 0 : index
    %16 = vector.load %arg5[%c0_8, %c0_9] : memref<1024x128xbf16, #tpu.memory_space<vmem>>, vector<1024x128xbf16>
    tpu.vector_store %arg5[%c0_8, %c0_9], %15 {strides = array<i32>} : memref<1024x128xbf16, #tpu.memory_space<vmem>>, vector<1024x128xbf16>,
    return
  }
  func.func @transform_0(%arg0: i32) -> (i32, i32) {
    %c0_i32 = arith.constant 0 : i32
    %c0_i32_0 = arith.constant 0 : i32
    return %arg0, %c0_i32 : i32, i32
  }
  func.func @transform_1(%arg0: i32) -> (i32, i32) {
    %c0_i32 = arith.constant 0 : i32
    %c0_i32_0 = arith.constant 0 : i32
    %c0_i32_1 = arith.constant 0 : i32
    return %c0_i32, %c0_i32_0 : i32, i32
  }
  func.func @transform_2(%arg0: i32) -> (i32, i32) {
    %c0_i32 = arith.constant 0 : i32
    %c0_i32_0 = arith.constant 0 : i32
    %c0_i32_1 = arith.constant 0 : i32
    return %c0_i32, %c0_i32_0 : i32, i32
  }
  func.func @transform_3(%arg0: i32) -> (i32, i32) {
    %c0_i32 = arith.constant 0 : i32
    %c0_i32_0 = arith.constant 0 : i32
    %c0_i32_1 = arith.constant 0 : i32
    return %c0_i32, %c0_i32_0 : i32, i32
  }
  func.func @transform_4(%arg0: i32) -> (i32, i32) {
    %c0_i32 = arith.constant 0 : i32
    %c0_i32_0 = arith.constant 0 : i32
    return %arg0, %c0_i32 : i32, i32
  }
}

</mosaic_0001>

<llo_original>
// kernel: tpu_custom_call.1
$region0: #{tpu_custom_call.1}
  #allocation0 [shape = 'u32[]', space=smem, size = 0x4, offset = 0x4, fixed_abs, tag = 'smem constant byte address 0x4 - core index']
  #allocation1 [shape = 'u32[72,128]{1,0:T(1,128)}', space=vmem, size = 0x9000, scoped, tag = 'internal scratch']
  %s0 = inlined_call_operand.vmem [shape: bf16[2048,32], index: 0, kind: input, shape index: {}]
  %s1 = inlined_call_operand.vmem [shape: bf16[32,128], index: 1, kind: input, shape index: {}]
  %s2 = inlined_call_operand.vmem [shape: f32[1,128], index: 2, kind: input, shape index: {}]
  %s3 = inlined_call_operand.vmem [shape: f32[1,128], index: 3, kind: input, shape index: {}]
  %s4 = inlined_call_operand.hbm [shape: bf16[2048,128], index: 4, kind: output, shape index: {}]
  %s5 = sld [smem:[#allocation0]]
  $region49: #{tpu_custom_call.1} parent=0
    _
  %s7 = ssub.s32 1, %s5
  %s8 = scalar_select 0, %s7, %s5
  $region1: #{tpu_custom_call.1} parent=0
    #allocation2 [shape = 'u8[524288]{0}', space=vmem, size = 0x80000, scoped, tag = 'output window, operand 0']
    #allocation3 [shape = 's32[2]{0}', space=sflag, size = 0x8, scoped, tag = 'scoped memory for tpu_custom_call.1']
    %9 = vsyncpa [#allocation3], 0
    %s10 = scalar_lea.sflag [#allocation3], 1
    %11 = vsyncpa %s10, 0
    loop: start=0, step=1, limit=4
    $region2: #{tpu_custom_call.1} parent=1 // loop_pre_header
      _
    $region3: #{tpu_custom_call.1} parent=1 // loop_header
      %s13 = sphi 0, %s17
      %p14 = scmp.ge.s32.totalorder %s13, 4
      %s23 = sphi 0, %s25
      %s26 = sphi 0, %s23
      %s27 = sphi 0, %s26
      %s43 = sphi 0, %s27
      %s47 = sphi 0, %s47
      %s49 = sphi 0, %s47
      %s50 = sphi 0, %s49
      %s64 = sphi 0, %s50
      %s68 = sphi 0, %s68
      %s70 = sphi 0, %s68
      %s71 = sphi 0, %s70
      %s85 = sphi 0, %s71
      %s89 = sphi 0, %s89
      %s91 = sphi 0, %s89
      %s92 = sphi 0, %s91
      %s106 = sphi 0, %s92
      %s112 = sphi 0, %s114
      %s115 = sphi 0, %s112
      %s116 = sphi 0, %s115
      %s132 = sphi 0, %s116
    $region4: #{tpu_custom_call.1} parent=1 // loop_header_branch
      %16 = sbr.rel (%p14) target = $region8
    $region5: #{tpu_custom_call.1} parent=1 // loop_body
      %s18 = ssub.s32 %s13, 1
      %s19 = ssub.s32 %s13, 2
      %s20 = sadd.s32 %s13, 1
      %s21 = ssub.s32 %s13, %s20
      %p22 = scmp.eq.s32.totalorder %s21, 0
      %s24 = sadd.s32 %s23, 1
      %s25 = scalar_select %p22, %s23, %s24
      %p28 = pneg %p22
      %p29 = scmp.eq.s32.totalorder %s13, 1
      %p30 = por %p28, %p29
      %p31 = scmp.ne.s32.totalorder %s23, %s26
      %p32 = scmp.eq.s32.totalorder %s13, 0
      %p33 = por %p31, %p32
      %p34 = scmp.ne.s32.totalorder %s23, %s26
      %p35 = scmp.eq.s32.totalorder %s18, 1
      %p36 = por %p34, %p35
      %p37 = scmp.ne.s32.totalorder %s26, %s27
      %p38 = scmp.eq.s32.totalorder %s18, 0
      %p39 = por %p37, %p38
      %p40 = scmp.ne.s32.totalorder %s26, %s27
      %p41 = scmp.eq.s32.totalorder %s19, 1
      %p42 = por %p40, %p41
      %p44 = scmp.ne.s32.totalorder %s27, %s43
      %p45 = scmp.eq.s32.totalorder %s19, 0
      %p46 = por %p44, %p45
      %s48 = sadd.s32 %s47, 1
      %p51 = scmp.eq.s32.totalorder %s13, 1
      %p52 = scmp.ne.s32.totalorder %s47, %s49
      %p53 = scmp.eq.s32.totalorder %s13, 0
      %p54 = por %p52, %p53
      %p55 = scmp.ne.s32.totalorder %s47, %s49
      %p56 = scmp.eq.s32.totalorder %s18, 1
      %p57 = por %p55, %p56
      %p58 = scmp.ne.s32.totalorder %s49, %s50
      %p59 = scmp.eq.s32.totalorder %s18, 0
      %p60 = por %p58, %p59
      %p61 = scmp.ne.s32.totalorder %s49, %s50
      %p62 = scmp.eq.s32.totalorder %s19, 1
      %p63 = por %p61, %p62
      %p65 = scmp.ne.s32.totalorder %s50, %s64
      %p66 = scmp.eq.s32.totalorder %s19, 0
      %p67 = por %p65, %p66
      %s69 = sadd.s32 %s68, 1
      %p72 = scmp.eq.s32.totalorder %s13, 1
      %p73 = scmp.ne.s32.totalorder %s68, %s70
      %p74 = scmp.eq.s32.totalorder %s13, 0
      %p75 = por %p73, %p74
      %p76 = scmp.ne.s32.totalorder %s68, %s70
      %p77 = scmp.eq.s32.totalorder %s18, 1
      %p78 = por %p76, %p77
      %p79 = scmp.ne.s32.totalorder %s70, %s71
      %p80 = scmp.eq.s32.totalorder %s18, 0
      %p81 = por %p79, %p80
      %p82 = scmp.ne.s32.totalorder %s70, %s71
      %p83 = scmp.eq.s32.totalorder %s19, 1
      %p84 = por %p82, %p83
      %p86 = scmp.ne.s32.totalorder %s71, %s85
      %p87 = scmp.eq.s32.totalorder %s19, 0
      %p88 = por %p86, %p87
      %s90 = sadd.s32 %s89, 1
      %p93 = scmp.eq.s32.totalorder %s13, 1
      %p94 = scmp.ne.s32.totalorder %s89, %s91
      %p95 = scmp.eq.s32.totalorder %s13, 0
      %p96 = por %p94, %p95
      %p97 = scmp.ne.s32.totalorder %s89, %s91
      %p98 = scmp.eq.s32.totalorder %s18, 1
      %p99 = por %p97, %p98
      %p100 = scmp.ne.s32.totalorder %s91, %s92
      %p101 = scmp.eq.s32.totalorder %s18, 0
      %p102 = por %p100, %p101
      %p103 = scmp.ne.s32.totalorder %s91, %s92
      %p104 = scmp.eq.s32.totalorder %s19, 1
      %p105 = por %p103, %p104
      %p107 = scmp.ne.s32.totalorder %s92, %s106
      %p108 = scmp.eq.s32.totalorder %s19, 0
      %p109 = por %p107, %p108
      %s110 = ssub.s32 %s13, %s20
      %p111 = scmp.eq.s32.totalorder %s110, 0
      %s113 = sadd.s32 %s112, 1
      %s114 = scalar_select %p111, %s112, %s113
      %p117 = pneg %p111
      %p118 = scmp.eq.s32.totalorder %s13, 1
      %p119 = por %p117, %p118
      %p120 = scmp.ne.s32.totalorder %s112, %s115
      %p121 = scmp.eq.s32.totalorder %s13, 0
      %p122 = por %p120, %p121
      %p123 = scmp.ne.s32.totalorder %s112, %s115
      %p124 = scmp.eq.s32.totalorder %s18, 1
      %p125 = por %p123, %p124
      %p126 = scmp.ne.s32.totalorder %s115, %s116
      %p127 = scmp.eq.s32.totalorder %s18, 0
      %p128 = por %p126, %p127
      %p129 = scmp.ne.s32.totalorder %s115, %s116
      %p130 = scmp.eq.s32.totalorder %s19, 1
      %p131 = por %p129, %p130
      %p133 = scmp.ne.s32.totalorder %s116, %s132
      %p134 = scmp.eq.s32.totalorder %s19, 0
      %p135 = por %p133, %p134
      %p136 = scmp.le.s32.totalorder 1, %s13
      %p137 = scmp.lt.s32.totalorder %s13, 3
      %p138 = pnand %p136, %p137
      %p139 = pneg %p138
      // Predicated region
      $region9: #{tpu_custom_call.1} parent=5 // pred_check
        _
      $region10: #{tpu_custom_call.1} parent=5 // pred_check_branch
        %141 = sbr.rel (%p138) target = $region12
      $region11: #{tpu_custom_call.1} parent=5 // pred_region
        %s142 = ssub.s32 %s13, 1
        // Predicated region
        $region13: #{tpu_custom_call.1} parent=11 // pred_check
          %p143 = pneg %p60
        $region14: #{tpu_custom_call.1} parent=11 // pred_check_branch
          %145 = sbr.rel (%p143) target = $region16
        $region15: #{tpu_custom_call.1} parent=11 // pred_region
          _
        $region16: #{tpu_custom_call.1} parent=11 // pred_fallthru
          _
        // Predicated region
        $region17: #{tpu_custom_call.1} parent=11 // pred_check
          %p146 = pneg %p81
        $region18: #{tpu_custom_call.1} parent=11 // pred_check_branch
          %148 = sbr.rel (%p146) target = $region20
        $region19: #{tpu_custom_call.1} parent=11 // pred_region
          _
        $region20: #{tpu_custom_call.1} parent=11 // pred_fallthru
          _
        // Predicated region
        $region21: #{tpu_custom_call.1} parent=11 // pred_check
          %p149 = pneg %p102
        $region22: #{tpu_custom_call.1} parent=11 // pred_check_branch
          %151 = sbr.rel (%p149) target = $region24
        $region23: #{tpu_custom_call.1} parent=11 // pred_region
          _
        $region24: #{tpu_custom_call.1} parent=11 // pred_fallthru
          _
      $region12: #{tpu_custom_call.1} parent=5 // pred_fallthru
        _
      %p152 = scmp.lt.s32.totalorder %s13, 2
      // Predicated region
      $region25: #{tpu_custom_call.1} parent=5 // pred_check
        %p153 = pneg %p152
      $region26: #{tpu_custom_call.1} parent=5 // pred_check_branch
        %155 = sbr.rel (%p153) target = $region28
      $region27: #{tpu_custom_call.1} parent=5 // pred_region
        // Predicated region
        $region29: #{tpu_custom_call.1} parent=27 // pred_check
          %p156 = pneg %p33
        $region30: #{tpu_custom_call.1} parent=27 // pred_check_branch
          %158 = sbr.rel (%p156) target = $region32
        $region31: #{tpu_custom_call.1} parent=27 // pred_region
          %s159 = smul.u32 128, %s13
          %p160 = scmp.lt.s32.totalorder %s159, 255
          %s161 = scalar_select %p160, %s159, 255
          %s162 = smul.addr %s161, 4
          %s163 = scalar_lea.vmem %s0, %s162
          %s164 = smul.u32 128, %s13
        $region32: #{tpu_custom_call.1} parent=27 // pred_fallthru
          _
      $region28: #{tpu_custom_call.1} parent=5 // pred_fallthru
        _
      %p165 = scmp.le.s32.totalorder 1, %s13
      %p166 = scmp.lt.s32.totalorder %s13, 3
      %p167 = pnand %p165, %p166
      %p168 = pneg %p167
      // Predicated region
      $region33: #{tpu_custom_call.1} parent=5 // pred_check
        _
      $region34: #{tpu_custom_call.1} parent=5 // pred_check_branch
        %170 = sbr.rel (%p167) target = $region36
      $region35: #{tpu_custom_call.1} parent=5 // pred_region
        %s171 = ssub.s32 %s13, 1
        %s172 = smul.u32 128, %s18
        %p173 = scmp.lt.s32.totalorder %s172, 255
        %s174 = scalar_select %p173, %s172, 255
        %s175 = smul.addr %s174, 4
        %s176 = scalar_lea.vmem %s0, %s175
        %p177 = pneg %p39
        %p178 = pneg %p36
        %p179 = pneg %p60
        %p180 = pneg %p57
        %p181 = pneg %p81
        %p182 = pneg %p78
        %p183 = pneg %p102
        %p184 = pneg %p99
        %p185 = pneg %p128
        %p186 = pneg %p125
        %s187 = sand.u32 %s115, 1
        %s188 = scalar_lea.sflag [#allocation3], %s187
        %s189 = sand.u32 %s115, 1
        %s190 = smul.addr %s189, 512
        %s191 = scalar_lea.vmem [#allocation2], %s190
        %s192 = smul.u32 128, %s18
        %p193 = scmp.lt.s32.totalorder %s192, 255
        %s194 = scalar_select %p193, %s192, 255
        %s195 = smul.addr %s194, 4
        %s196 = scalar_lea.vmem %s0, %s195
        %s197 = smul.u32 128, %s18
        %s198 = smul.u32 128, %s18
        %v200 = vld [vmem:[%s196] sm:$0xf]
        %v201 = vld [vmem:[%s196 + $0x4] sm:$0xf]
        %v202 = vld [vmem:[%s196 + $0x8] sm:$0xf]
        %v203 = vld [vmem:[%s196 + $0xc] sm:$0xf]
        %v204 = vld [vmem:[%s196 + $0x10] sm:$0xf]
        %v205 = vld [vmem:[%s196 + $0x14] sm:$0xf]
        %v206 = vld [vmem:[%s196 + $0x18] sm:$0xf]
        %v207 = vld [vmem:[%s196 + $0x1c] sm:$0xf]
        %v208 = vld [vmem:[%s196 + $0x20] sm:$0xf]
        %v209 = vld [vmem:[%s196 + $0x24] sm:$0xf]
        %v210 = vld [vmem:[%s196 + $0x28] sm:$0xf]
        %v211 = vld [vmem:[%s196 + $0x2c] sm:$0xf]
        %v212 = vld [vmem:[%s196 + $0x30] sm:$0xf]
        %v213 = vld [vmem:[%s196 + $0x34] sm:$0xf]
        %v214 = vld [vmem:[%s196 + $0x38] sm:$0xf]
        %v215 = vld [vmem:[%s196 + $0x3c] sm:$0xf]
        %v216 = vld [vmem:[%s196 + $0x40] sm:$0xf]
        %v217 = vld [vmem:[%s196 + $0x44] sm:$0xf]
        %v218 = vld [vmem:[%s196 + $0x48] sm:$0xf]
        %v219 = vld [vmem:[%s196 + $0x4c] sm:$0xf]
        %v220 = vld [vmem:[%s196 + $0x50] sm:$0xf]
        %v221 = vld [vmem:[%s196 + $0x54] sm:$0xf]
        %v222 = vld [vmem:[%s196 + $0x58] sm:$0xf]
        %v223 = vld [vmem:[%s196 + $0x5c] sm:$0xf]
        %v224 = vld [vmem:[%s196 + $0x60] sm:$0xf]
        %v225 = vld [vmem:[%s196 + $0x64] sm:$0xf]
        %v226 = vld [vmem:[%s196 + $0x68] sm:$0xf]
        %v227 = vld [vmem:[%s196 + $0x6c] sm:$0xf]
        %v228 = vld [vmem:[%s196 + $0x70] sm:$0xf]
        %v229 = vld [vmem:[%s196 + $0x74] sm:$0xf]
        %v230 = vld [vmem:[%s196 + $0x78] sm:$0xf]
        %v231 = vld [vmem:[%s196 + $0x7c] sm:$0xf]
        %v232 = vld [vmem:[%s196 + $0x80] sm:$0xf]
        %v233 = vld [vmem:[%s196 + $0x84] sm:$0xf]
        %v234 = vld [vmem:[%s196 + $0x88] sm:$0xf]
        %v235 = vld [vmem:[%s196 + $0x8c] sm:$0xf]
        %v236 = vld [vmem:[%s196 + $0x90] sm:$0xf]
        %v237 = vld [vmem:[%s196 + $0x94] sm:$0xf]
        %v238 = vld [vmem:[%s196 + $0x98] sm:$0xf]
        %v239 = vld [vmem:[%s196 + $0x9c] sm:$0xf]
        %v240 = vld [vmem:[%s196 + $0xa0] sm:$0xf]
        %v241 = vld [vmem:[%s196 + $0xa4] sm:$0xf]
        %v242 = vld [vmem:[%s196 + $0xa8] sm:$0xf]
        %v243 = vld [vmem:[%s196 + $0xac] sm:$0xf]
        %v244 = vld [vmem:[%s196 + $0xb0] sm:$0xf]
        %v245 = vld [vmem:[%s196 + $0xb4] sm:$0xf]
        %v246 = vld [vmem:[%s196 + $0xb8] sm:$0xf]
        %v247 = vld [vmem:[%s196 + $0xbc] sm:$0xf]
        %v248 = vld [vmem:[%s196 + $0xc0] sm:$0xf]
        %v249 = vld [vmem:[%s196 + $0xc4] sm:$0xf]
        %v250 = vld [vmem:[%s196 + $0xc8] sm:$0xf]
        %v251 = vld [vmem:[%s196 + $0xcc] sm:$0xf]
        %v252 = vld [vmem:[%s196 + $0xd0] sm:$0xf]
        %v253 = vld [vmem:[%s196 + $0xd4] sm:$0xf]
        %v254 = vld [vmem:[%s196 + $0xd8] sm:$0xf]
        %v255 = vld [vmem:[%s196 + $0xdc] sm:$0xf]
        %v256 = vld [vmem:[%s196 + $0xe0] sm:$0xf]
        %v257 = vld [vmem:[%s196 + $0xe4] sm:$0xf]
        %v258 = vld [vmem:[%s196 + $0xe8] sm:$0xf]
        %v259 = vld [vmem:[%s196 + $0xec] sm:$0xf]
        %v260 = vld [vmem:[%s196 + $0xf0] sm:$0xf]
        %v261 = vld [vmem:[%s196 + $0xf4] sm:$0xf]
        %v262 = vld [vmem:[%s196 + $0xf8] sm:$0xf]
        %v263 = vld [vmem:[%s196 + $0xfc] sm:$0xf]
        %v264 = vld [vmem:[%s196 + $0x100] sm:$0xf]
        %v265 = vld [vmem:[%s196 + $0x104] sm:$0xf]
        %v266 = vld [vmem:[%s196 + $0x108] sm:$0xf]
        %v267 = vld [vmem:[%s196 + $0x10c] sm:$0xf]
        %v268 = vld [vmem:[%s196 + $0x110] sm:$0xf]
        %v269 = vld [vmem:[%s196 + $0x114] sm:$0xf]
        %v270 = vld [vmem:[%s196 + $0x118] sm:$0xf]
        %v271 = vld [vmem:[%s196 + $0x11c] sm:$0xf]
        %v272 = vld [vmem:[%s196 + $0x120] sm:$0xf]
        %v273 = vld [vmem:[%s196 + $0x124] sm:$0xf]
        %v274 = vld [vmem:[%s196 + $0x128] sm:$0xf]
        %v275 = vld [vmem:[%s196 + $0x12c] sm:$0xf]
        %v276 = vld [vmem:[%s196 + $0x130] sm:$0xf]
        %v277 = vld [vmem:[%s196 + $0x134] sm:$0xf]
        %v278 = vld [vmem:[%s196 + $0x138] sm:$0xf]
        %v279 = vld [vmem:[%s196 + $0x13c] sm:$0xf]
        %v280 = vld [vmem:[%s196 + $0x140] sm:$0xf]
        %v281 = vld [vmem:[%s196 + $0x144] sm:$0xf]
        %v282 = vld [vmem:[%s196 + $0x148] sm:$0xf]
        %v283 = vld [vmem:[%s196 + $0x14c] sm:$0xf]
        %v284 = vld [vmem:[%s196 + $0x150] sm:$0xf]
        %v285 = vld [vmem:[%s196 + $0x154] sm:$0xf]
        %v286 = vld [vmem:[%s196 + $0x158] sm:$0xf]
        %v287 = vld [vmem:[%s196 + $0x15c] sm:$0xf]
        %v288 = vld [vmem:[%s196 + $0x160] sm:$0xf]
        %v289 = vld [vmem:[%s196 + $0x164] sm:$0xf]
        %v290 = vld [vmem:[%s196 + $0x168] sm:$0xf]
        %v291 = vld [vmem:[%s196 + $0x16c] sm:$0xf]
        %v292 = vld [vmem:[%s196 + $0x170] sm:$0xf]
        %v293 = vld [vmem:[%s196 + $0x174] sm:$0xf]
        %v294 = vld [vmem:[%s196 + $0x178] sm:$0xf]
        %v295 = vld [vmem:[%s196 + $0x17c] sm:$0xf]
        %v296 = vld [vmem:[%s196 + $0x180] sm:$0xf]
        %v297 = vld [vmem:[%s196 + $0x184] sm:$0xf]
        %v298 = vld [vmem:[%s196 + $0x188] sm:$0xf]
        %v299 = vld [vmem:[%s196 + $0x18c] sm:$0xf]
        %v300 = vld [vmem:[%s196 + $0x190] sm:$0xf]
        %v301 = vld [vmem:[%s196 + $0x194] sm:$0xf]
        %v302 = vld [vmem:[%s196 + $0x198] sm:$0xf]
        %v303 = vld [vmem:[%s196 + $0x19c] sm:$0xf]
        %v304 = vld [vmem:[%s196 + $0x1a0] sm:$0xf]
        %v305 = vld [vmem:[%s196 + $0x1a4] sm:$0xf]
        %v306 = vld [vmem:[%s196 + $0x1a8] sm:$0xf]
        %v307 = vld [vmem:[%s196 + $0x1ac] sm:$0xf]
        %v308 = vld [vmem:[%s196 + $0x1b0] sm:$0xf]
        %v309 = vld [vmem:[%s196 + $0x1b4] sm:$0xf]
        %v310 = vld [vmem:[%s196 + $0x1b8] sm:$0xf]
        %v311 = vld [vmem:[%s196 + $0x1bc] sm:$0xf]
        %v312 = vld [vmem:[%s196 + $0x1c0] sm:$0xf]
        %v313 = vld [vmem:[%s196 + $0x1c4] sm:$0xf]
        %v314 = vld [vmem:[%s196 + $0x1c8] sm:$0xf]
        %v315 = vld [vmem:[%s196 + $0x1cc] sm:$0xf]
        %v316 = vld [vmem:[%s196 + $0x1d0] sm:$0xf]
        %v317 = vld [vmem:[%s196 + $0x1d4] sm:$0xf]
        %v318 = vld [vmem:[%s196 + $0x1d8] sm:$0xf]
        %v319 = vld [vmem:[%s196 + $0x1dc] sm:$0xf]
        %v320 = vld [vmem:[%s196 + $0x1e0] sm:$0xf]
        %v321 = vld [vmem:[%s196 + $0x1e4] sm:$0xf]
        %v322 = vld [vmem:[%s196 + $0x1e8] sm:$0xf]
        %v323 = vld [vmem:[%s196 + $0x1ec] sm:$0xf]
        %v324 = vld [vmem:[%s196 + $0x1f0] sm:$0xf]
        %v325 = vld [vmem:[%s196 + $0x1f4] sm:$0xf]
        %v326 = vld [vmem:[%s196 + $0x1f8] sm:$0xf]
        %v327 = vld [vmem:[%s196 + $0x1fc] sm:$0xf]
        %v328 = vld [vmem:[%s1] sm:$0xf]
        %v329 = vld [vmem:[%s1 + $0x4] sm:$0xf]
        %v330 = vld [vmem:[%s1 + $0x8] sm:$0xf]
        %v331 = vld [vmem:[%s1 + $0xc] sm:$0xf]
        %v460 = vunpack.c.l.b16 %v200
        %v461 = vunpack.c.l.b16 %v201
        %v462 = vunpack.c.l.b16 %v202
        %v463 = vunpack.c.l.b16 %v203
        %v464 = vunpack.c.l.b16 %v204
        %v465 = vunpack.c.l.b16 %v205
        %v466 = vunpack.c.l.b16 %v206
        %v467 = vunpack.c.l.b16 %v207
        %v468 = vunpack.c.l.b16 %v208
        %v469 = vunpack.c.l.b16 %v209
        %v470 = vunpack.c.l.b16 %v210
        %v471 = vunpack.c.l.b16 %v211
        %v472 = vunpack.c.l.b16 %v212
        %v473 = vunpack.c.l.b16 %v213
        %v474 = vunpack.c.l.b16 %v214
        %v475 = vunpack.c.l.b16 %v215
        %v476 = vunpack.c.l.b16 %v216
        %v477 = vunpack.c.l.b16 %v217
        %v478 = vunpack.c.l.b16 %v218
        %v479 = vunpack.c.l.b16 %v219
        %v480 = vunpack.c.l.b16 %v220
        %v481 = vunpack.c.l.b16 %v221
        %v482 = vunpack.c.l.b16 %v222
        %v483 = vunpack.c.l.b16 %v223
        %v484 = vunpack.c.l.b16 %v224
        %v485 = vunpack.c.l.b16 %v225
        %v486 = vunpack.c.l.b16 %v226
        %v487 = vunpack.c.l.b16 %v227
        %v488 = vunpack.c.l.b16 %v228
        %v489 = vunpack.c.l.b16 %v229
        %v490 = vunpack.c.l.b16 %v230
        %v491 = vunpack.c.l.b16 %v231
        %v492 = vunpack.c.l.b16 %v232
        %v493 = vunpack.c.l.b16 %v233
        %v494 = vunpack.c.l.b16 %v234
        %v495 = vunpack.c.l.b16 %v235
        %v496 = vunpack.c.l.b16 %v236
        %v497 = vunpack.c.l.b16 %v237
        %v498 = vunpack.c.l.b16 %v238
        %v499 = vunpack.c.l.b16 %v239
        %v500 = vunpack.c.l.b16 %v240
        %v501 = vunpack.c.l.b16 %v241
        %v502 = vunpack.c.l.b16 %v242
        %v503 = vunpack.c.l.b16 %v243
        %v504 = vunpack.c.l.b16 %v244
        %v505 = vunpack.c.l.b16 %v245
        %v506 = vunpack.c.l.b16 %v246
        %v507 = vunpack.c.l.b16 %v247
        %v508 = vunpack.c.l.b16 %v248
        %v509 = vunpack.c.l.b16 %v249
        %v510 = vunpack.c.l.b16 %v250
        %v511 = vunpack.c.l.b16 %v251
        %v512 = vunpack.c.l.b16 %v252
        %v513 = vunpack.c.l.b16 %v253
        %v514 = vunpack.c.l.b16 %v254
        %v515 = vunpack.c.l.b16 %v255
        %v516 = vunpack.c.l.b16 %v256
        %v517 = vunpack.c.l.b16 %v257
        %v518 = vunpack.c.l.b16 %v258
        %v519 = vunpack.c.l.b16 %v259
        %v520 = vunpack.c.l.b16 %v260
        %v521 = vunpack.c.l.b16 %v261
        %v522 = vunpack.c.l.b16 %v262
        %v523 = vunpack.c.l.b16 %v263
        %v524 = vunpack.c.l.b16 %v264
        %v525 = vunpack.c.l.b16 %v265
        %v526 = vunpack.c.l.b16 %v266
        %v527 = vunpack.c.l.b16 %v267
        %v528 = vunpack.c.l.b16 %v268
        %v529 = vunpack.c.l.b16 %v269
        %v530 = vunpack.c.l.b16 %v270
        %v531 = vunpack.c.l.b16 %v271
        %v532 = vunpack.c.l.b16 %v272
        %v533 = vunpack.c.l.b16 %v273
        %v534 = vunpack.c.l.b16 %v274
        %v535 = vunpack.c.l.b16 %v275
        %v536 = vunpack.c.l.b16 %v276
        %v537 = vunpack.c.l.b16 %v277
        %v538 = vunpack.c.l.b16 %v278
        %v539 = vunpack.c.l.b16 %v279
        %v540 = vunpack.c.l.b16 %v280
        %v541 = vunpack.c.l.b16 %v281
        %v542 = vunpack.c.l.b16 %v282
        %v543 = vunpack.c.l.b16 %v283
        %v544 = vunpack.c.l.b16 %v284
        %v545 = vunpack.c.l.b16 %v285
        %v546 = vunpack.c.l.b16 %v286
        %v547 = vunpack.c.l.b16 %v287
        %v548 = vunpack.c.l.b16 %v288
        %v549 = vunpack.c.l.b16 %v289
        %v550 = vunpack.c.l.b16 %v290
        %v551 = vunpack.c.l.b16 %v291
        %v552 = vunpack.c.l.b16 %v292
        %v553 = vunpack.c.l.b16 %v293
        %v554 = vunpack.c.l.b16 %v294
        %v555 = vunpack.c.l.b16 %v295
        %v556 = vunpack.c.l.b16 %v296
        %v557 = vunpack.c.l.b16 %v297
        %v558 = vunpack.c.l.b16 %v298
        %v559 = vunpack.c.l.b16 %v299
        %v560 = vunpack.c.l.b16 %v300
        %v561 = vunpack.c.l.b16 %v301
        %v562 = vunpack.c.l.b16 %v302
        %v563 = vunpack.c.l.b16 %v303
        %v564 = vunpack.c.l.b16 %v304
        %v565 = vunpack.c.l.b16 %v305
        %v566 = vunpack.c.l.b16 %v306
        %v567 = vunpack.c.l.b16 %v307
        %v568 = vunpack.c.l.b16 %v308
        %v569 = vunpack.c.l.b16 %v309
        %v570 = vunpack.c.l.b16 %v310
        %v571 = vunpack.c.l.b16 %v311
        %v572 = vunpack.c.l.b16 %v312
        %v573 = vunpack.c.l.b16 %v313
        %v574 = vunpack.c.l.b16 %v314
        %v575 = vunpack.c.l.b16 %v315
        %v576 = vunpack.c.l.b16 %v316
        %v577 = vunpack.c.l.b16 %v317
        %v578 = vunpack.c.l.b16 %v318
        %v579 = vunpack.c.l.b16 %v319
        %v580 = vunpack.c.l.b16 %v320
        %v581 = vunpack.c.l.b16 %v321
        %v582 = vunpack.c.l.b16 %v322
        %v583 = vunpack.c.l.b16 %v323
        %v584 = vunpack.c.l.b16 %v324
        %v585 = vunpack.c.l.b16 %v325
        %v586 = vunpack.c.l.b16 %v326
        %v587 = vunpack.c.l.b16 %v327
        %v588 = vpack.c.b16 %v461, %v460
        %v589 = vpack.c.b16 %v463, %v462
        %v590 = vpack.c.b16 %v465, %v464
        %v591 = vpack.c.b16 %v467, %v466
        %v592 = vpack.c.b16 %v469, %v468
        %v593 = vpack.c.b16 %v471, %v470
        %v594 = vpack.c.b16 %v473, %v472
        %v595 = vpack.c.b16 %v475, %v474
        %v596 = vpack.c.b16 %v477, %v476
        %v597 = vpack.c.b16 %v479, %v478
        %v598 = vpack.c.b16 %v481, %v480
        %v599 = vpack.c.b16 %v483, %v482
        %v600 = vpack.c.b16 %v485, %v484
        %v601 = vpack.c.b16 %v487, %v486
        %v602 = vpack.c.b16 %v489, %v488
        %v603 = vpack.c.b16 %v491, %v490
        %v604 = vpack.c.b16 %v493, %v492
        %v605 = vpack.c.b16 %v495, %v494
        %v606 = vpack.c.b16 %v497, %v496
        %v607 = vpack.c.b16 %v499, %v498
        %v608 = vpack.c.b16 %v501, %v500
        %v609 = vpack.c.b16 %v503, %v502
        %v610 = vpack.c.b16 %v505, %v504
        %v611 = vpack.c.b16 %v507, %v506
        %v612 = vpack.c.b16 %v509, %v508
        %v613 = vpack.c.b16 %v511, %v510
        %v614 = vpack.c.b16 %v513, %v512
        %v615 = vpack.c.b16 %v515, %v514
        %v616 = vpack.c.b16 %v517, %v516
        %v617 = vpack.c.b16 %v519, %v518
        %v618 = vpack.c.b16 %v521, %v520
        %v619 = vpack.c.b16 %v523, %v522
        %v620 = vpack.c.b16 %v525, %v524
        %v621 = vpack.c.b16 %v527, %v526
        %v622 = vpack.c.b16 %v529, %v528
        %v623 = vpack.c.b16 %v531, %v530
        %v624 = vpack.c.b16 %v533, %v532
        %v625 = vpack.c.b16 %v535, %v534
        %v626 = vpack.c.b16 %v537, %v536
        %v627 = vpack.c.b16 %v539, %v538
        %v628 = vpack.c.b16 %v541, %v540
        %v629 = vpack.c.b16 %v543, %v542
        %v630 = vpack.c.b16 %v545, %v544
        %v631 = vpack.c.b16 %v547, %v546
        %v632 = vpack.c.b16 %v549, %v548
        %v633 = vpack.c.b16 %v551, %v550
        %v634 = vpack.c.b16 %v553, %v552
        %v635 = vpack.c.b16 %v555, %v554
        %v636 = vpack.c.b16 %v557, %v556
        %v637 = vpack.c.b16 %v559, %v558
        %v638 = vpack.c.b16 %v561, %v560
        %v639 = vpack.c.b16 %v563, %v562
        %v640 = vpack.c.b16 %v565, %v564
        %v641 = vpack.c.b16 %v567, %v566
        %v642 = vpack.c.b16 %v569, %v568
        %v643 = vpack.c.b16 %v571, %v570
        %v644 = vpack.c.b16 %v573, %v572
        %v645 = vpack.c.b16 %v575, %v574
        %v646 = vpack.c.b16 %v577, %v576
        %v647 = vpack.c.b16 %v579, %v578
        %v648 = vpack.c.b16 %v581, %v580
        %v649 = vpack.c.b16 %v583, %v582
        %v650 = vpack.c.b16 %v585, %v584
        %v651 = vpack.c.b16 %v587, %v586
        %v656 = vunpack.c.l.b16 %v328
        %v657 = vunpack.c.l.b16 %v329
        %v658 = vunpack.c.l.b16 %v330
        %v659 = vunpack.c.l.b16 %v331
        %v660 = vpack.c.b16 %v657, %v656
        %v661 = vpack.c.b16 %v659, %v658
        %vm664 = vcmask 261120
        %v666 = vsel %vm664, %v588, 0
        %v669 = vsel %vm664, %v589, 0
        %v672 = vsel %vm664, %v590, 0
        %v675 = vsel %vm664, %v591, 0
        %v678 = vsel %vm664, %v592, 0
        %v681 = vsel %vm664, %v593, 0
        %v684 = vsel %vm664, %v594, 0
        %v687 = vsel %vm664, %v595, 0
        %v690 = vsel %vm664, %v596, 0
        %v693 = vsel %vm664, %v597, 0
        %v696 = vsel %vm664, %v598, 0
        %v699 = vsel %vm664, %v599, 0
        %v702 = vsel %vm664, %v600, 0
        %v705 = vsel %vm664, %v601, 0
        %v708 = vsel %vm664, %v602, 0
        %v711 = vsel %vm664, %v603, 0
        %v714 = vsel %vm664, %v604, 0
        %v717 = vsel %vm664, %v605, 0
        %v720 = vsel %vm664, %v606, 0
        %v723 = vsel %vm664, %v607, 0
        %v726 = vsel %vm664, %v608, 0
        %v729 = vsel %vm664, %v609, 0
        %v732 = vsel %vm664, %v610, 0
        %v735 = vsel %vm664, %v611, 0
        %v738 = vsel %vm664, %v612, 0
        %v741 = vsel %vm664, %v613, 0
        %v744 = vsel %vm664, %v614, 0
        %v747 = vsel %vm664, %v615, 0
        %v750 = vsel %vm664, %v616, 0
        %v753 = vsel %vm664, %v617, 0
        %v756 = vsel %vm664, %v618, 0
        %v759 = vsel %vm664, %v619, 0
        %v762 = vsel %vm664, %v620, 0
        %v765 = vsel %vm664, %v621, 0
        %v768 = vsel %vm664, %v622, 0
        %v771 = vsel %vm664, %v623, 0
        %v774 = vsel %vm664, %v624, 0
        %v777 = vsel %vm664, %v625, 0
        %v780 = vsel %vm664, %v626, 0
        %v783 = vsel %vm664, %v627, 0
        %v786 = vsel %vm664, %v628, 0
        %v789 = vsel %vm664, %v629, 0
        %v792 = vsel %vm664, %v630, 0
        %v795 = vsel %vm664, %v631, 0
        %v798 = vsel %vm664, %v632, 0
        %v801 = vsel %vm664, %v633, 0
        %v804 = vsel %vm664, %v634, 0
        %v807 = vsel %vm664, %v635, 0
        %v810 = vsel %vm664, %v636, 0
        %v813 = vsel %vm664, %v637, 0
        %v816 = vsel %vm664, %v638, 0
        %v819 = vsel %vm664, %v639, 0
        %v822 = vsel %vm664, %v640, 0
        %v825 = vsel %vm664, %v641, 0
        %v828 = vsel %vm664, %v642, 0
        %v831 = vsel %vm664, %v643, 0
        %v834 = vsel %vm664, %v644, 0
        %v837 = vsel %vm664, %v645, 0
        %v840 = vsel %vm664, %v646, 0
        %v843 = vsel %vm664, %v647, 0
        %v846 = vsel %vm664, %v648, 0
        %v849 = vsel %vm664, %v649, 0
        %v852 = vsel %vm664, %v650, 0
        %v855 = vsel %vm664, %v651, 0
        %857 = vmatpush.bf16.msra.mxu0 0
        %858 = vmatpush.bf16.msra.mxu0 0
        %859 = vmatpush.bf16.msra.mxu0 0
        %860 = vmatpush.bf16.msra.mxu0 0
        %861 = vmatpush.bf16.msra.mxu0 0
        %862 = vmatpush.bf16.msra.mxu0 0
        %863 = vmatpush.bf16.msra.mxu0 %v661
        %864 = vmatpush.bf16.msra.mxu0 %v660
        %865 = vmatmul.bf16.gmra.mxu0 %v666
        %v866 = vpop.f32.mrf.mxu0
        %v867 = vadd.f32 0.0, %v866
        %v868 = vpop.f32.mrf.mxu0
        %v869 = vadd.f32 0.0, %v868
        %870 = vmatmul.bf16.gmra.mxu0 %v669
        %v871 = vpop.f32.mrf.mxu0
        %v872 = vadd.f32 0.0, %v871
        %v873 = vpop.f32.mrf.mxu0
        %v874 = vadd.f32 0.0, %v873
        %875 = vmatmul.bf16.gmra.mxu0 %v672
        %v876 = vpop.f32.mrf.mxu0
        %v877 = vadd.f32 0.0, %v876
        %v878 = vpop.f32.mrf.mxu0
        %v879 = vadd.f32 0.0, %v878
        %880 = vmatmul.bf16.gmra.mxu0 %v675
        %v881 = vpop.f32.mrf.mxu0
        %v882 = vadd.f32 0.0, %v881
        %v883 = vpop.f32.mrf.mxu0
        %v884 = vadd.f32 0.0, %v883
        %885 = vmatmul.bf16.gmra.mxu0 %v678
        %v886 = vpop.f32.mrf.mxu0
        %v887 = vadd.f32 0.0, %v886
        %v888 = vpop.f32.mrf.mxu0
        %v889 = vadd.f32 0.0, %v888
        %890 = vmatmul.bf16.gmra.mxu0 %v681
        %v891 = vpop.f32.mrf.mxu0
        %v892 = vadd.f32 0.0, %v891
        %v893 = vpop.f32.mrf.mxu0
        %v894 = vadd.f32 0.0, %v893
        %895 = vmatmul.bf16.gmra.mxu0 %v684
        %v896 = vpop.f32.mrf.mxu0
        %v897 = vadd.f32 0.0, %v896
        %v898 = vpop.f32.mrf.mxu0
        %v899 = vadd.f32 0.0, %v898
        %900 = vmatmul.bf16.gmra.mxu0 %v687
        %v901 = vpop.f32.mrf.mxu0
        %v902 = vadd.f32 0.0, %v901
        %v903 = vpop.f32.mrf.mxu0
        %v904 = vadd.f32 0.0, %v903
        %905 = vmatmul.bf16.gmra.mxu0 %v690
        %v906 = vpop.f32.mrf.mxu0
        %v907 = vadd.f32 0.0, %v906
        %v908 = vpop.f32.mrf.mxu0
        %v909 = vadd.f32 0.0, %v908
        %910 = vmatmul.bf16.gmra.mxu0 %v693
        %v911 = vpop.f32.mrf.mxu0
        %v912 = vadd.f32 0.0, %v911
        %v913 = vpop.f32.mrf.mxu0
        %v914 = vadd.f32 0.0, %v913
        %915 = vmatmul.bf16.gmra.mxu0 %v696
        %v916 = vpop.f32.mrf.mxu0
        %v917 = vadd.f32 0.0, %v916
        %v918 = vpop.f32.mrf.mxu0
        %v919 = vadd.f32 0.0, %v918
        %920 = vmatmul.bf16.gmra.mxu0 %v699
        %v921 = vpop.f32.mrf.mxu0
        %v922 = vadd.f32 0.0, %v921
        %v923 = vpop.f32.mrf.mxu0
        %v924 = vadd.f32 0.0, %v923
        %925 = vmatmul.bf16.gmra.mxu0 %v702
        %v926 = vpop.f32.mrf.mxu0
        %v927 = vadd.f32 0.0, %v926
        %v928 = vpop.f32.mrf.mxu0
        %v929 = vadd.f32 0.0, %v928
        %930 = vmatmul.bf16.gmra.mxu0 %v705
        %v931 = vpop.f32.mrf.mxu0
        %v932 = vadd.f32 0.0, %v931
        %v933 = vpop.f32.mrf.mxu0
        %v934 = vadd.f32 0.0, %v933
        %935 = vmatmul.bf16.gmra.mxu0 %v708
        %v936 = vpop.f32.mrf.mxu0
        %v937 = vadd.f32 0.0, %v936
        %v938 = vpop.f32.mrf.mxu0
        %v939 = vadd.f32 0.0, %v938
        %940 = vmatmul.bf16.gmra.mxu0 %v711
        %v941 = vpop.f32.mrf.mxu0
        %v942 = vadd.f32 0.0, %v941
        %v943 = vpop.f32.mrf.mxu0
        %v944 = vadd.f32 0.0, %v943
        %945 = vmatmul.bf16.gmra.mxu0 %v714
        %v946 = vpop.f32.mrf.mxu0
        %v947 = vadd.f32 0.0, %v946
        %v948 = vpop.f32.mrf.mxu0
        %v949 = vadd.f32 0.0, %v948
        %950 = vmatmul.bf16.gmra.mxu0 %v717
        %v951 = vpop.f32.mrf.mxu0
        %v952 = vadd.f32 0.0, %v951
        %v953 = vpop.f32.mrf.mxu0
        %v954 = vadd.f32 0.0, %v953
        %955 = vmatmul.bf16.gmra.mxu0 %v720
        %v956 = vpop.f32.mrf.mxu0
        %v957 = vadd.f32 0.0, %v956
        %v958 = vpop.f32.mrf.mxu0
        %v959 = vadd.f32 0.0, %v958
        %960 = vmatmul.bf16.gmra.mxu0 %v723
        %v961 = vpop.f32.mrf.mxu0
        %v962 = vadd.f32 0.0, %v961
        %v963 = vpop.f32.mrf.mxu0
        %v964 = vadd.f32 0.0, %v963
        %965 = vmatmul.bf16.gmra.mxu0 %v726
        %v966 = vpop.f32.mrf.mxu0
        %v967 = vadd.f32 0.0, %v966
        %v968 = vpop.f32.mrf.mxu0
        %v969 = vadd.f32 0.0, %v968
        %970 = vmatmul.bf16.gmra.mxu0 %v729
        %v971 = vpop.f32.mrf.mxu0
        %v972 = vadd.f32 0.0, %v971
        %v973 = vpop.f32.mrf.mxu0
        %v974 = vadd.f32 0.0, %v973
        %975 = vmatmul.bf16.gmra.mxu0 %v732
        %v976 = vpop.f32.mrf.mxu0
        %v977 = vadd.f32 0.0, %v976
        %v978 = vpop.f32.mrf.mxu0
        %v979 = vadd.f32 0.0, %v978
        %980 = vmatmul.bf16.gmra.mxu0 %v735
        %v981 = vpop.f32.mrf.mxu0
        %v982 = vadd.f32 0.0, %v981
        %v983 = vpop.f32.mrf.mxu0
        %v984 = vadd.f32 0.0, %v983
        %985 = vmatmul.bf16.gmra.mxu0 %v738
        %v986 = vpop.f32.mrf.mxu0
        %v987 = vadd.f32 0.0, %v986
        %v988 = vpop.f32.mrf.mxu0
        %v989 = vadd.f32 0.0, %v988
        %990 = vmatmul.bf16.gmra.mxu0 %v741
        %v991 = vpop.f32.mrf.mxu0
        %v992 = vadd.f32 0.0, %v991
        %v993 = vpop.f32.mrf.mxu0
        %v994 = vadd.f32 0.0, %v993
        %995 = vmatmul.bf16.gmra.mxu0 %v744
        %v996 = vpop.f32.mrf.mxu0
        %v997 = vadd.f32 0.0, %v996
        %v998 = vpop.f32.mrf.mxu0
        %v999 = vadd.f32 0.0, %v998
        %1000 = vmatmul.bf16.gmra.mxu0 %v747
        %v1001 = vpop.f32.mrf.mxu0
        %v1002 = vadd.f32 0.0, %v1001
        %v1003 = vpop.f32.mrf.mxu0
        %v1004 = vadd.f32 0.0, %v1003
        %1005 = vmatmul.bf16.gmra.mxu0 %v750
        %v1006 = vpop.f32.mrf.mxu0
        %v1007 = vadd.f32 0.0, %v1006
        %v1008 = vpop.f32.mrf.mxu0
        %v1009 = vadd.f32 0.0, %v1008
        %1010 = vmatmul.bf16.gmra.mxu0 %v753
        %v1011 = vpop.f32.mrf.mxu0
        %v1012 = vadd.f32 0.0, %v1011
        %v1013 = vpop.f32.mrf.mxu0
        %v1014 = vadd.f32 0.0, %v1013
        %1015 = vmatmul.bf16.gmra.mxu0 %v756
        %v1016 = vpop.f32.mrf.mxu0
        %v1017 = vadd.f32 0.0, %v1016
        %v1018 = vpop.f32.mrf.mxu0
        %v1019 = vadd.f32 0.0, %v1018
        %1020 = vmatmul.bf16.gmra.mxu0 %v759
        %v1021 = vpop.f32.mrf.mxu0
        %v1022 = vadd.f32 0.0, %v1021
        %v1023 = vpop.f32.mrf.mxu0
        %v1024 = vadd.f32 0.0, %v1023
        %1025 = vmatmul.bf16.gmra.mxu0 %v762
        %v1026 = vpop.f32.mrf.mxu0
        %v1027 = vadd.f32 0.0, %v1026
        %v1028 = vpop.f32.mrf.mxu0
        %v1029 = vadd.f32 0.0, %v1028
        %1030 = vmatmul.bf16.gmra.mxu0 %v765
        %v1031 = vpop.f32.mrf.mxu0
        %v1032 = vadd.f32 0.0, %v1031
        %v1033 = vpop.f32.mrf.mxu0
        %v1034 = vadd.f32 0.0, %v1033
        %1035 = vmatmul.bf16.gmra.mxu0 %v768
        %v1036 = vpop.f32.mrf.mxu0
        %v1037 = vadd.f32 0.0, %v1036
        %v1038 = vpop.f32.mrf.mxu0
        %v1039 = vadd.f32 0.0, %v1038
        %1040 = vmatmul.bf16.gmra.mxu0 %v771
        %v1041 = vpop.f32.mrf.mxu0
        %v1042 = vadd.f32 0.0, %v1041
        %v1043 = vpop.f32.mrf.mxu0
        %v1044 = vadd.f32 0.0, %v1043
        %1045 = vmatmul.bf16.gmra.mxu0 %v774
        %v1046 = vpop.f32.mrf.mxu0
        %v1047 = vadd.f32 0.0, %v1046
        %v1048 = vpop.f32.mrf.mxu0
        %v1049 = vadd.f32 0.0, %v1048
        %1050 = vmatmul.bf16.gmra.mxu0 %v777
        %v1051 = vpop.f32.mrf.mxu0
        %v1052 = vadd.f32 0.0, %v1051
        %v1053 = vpop.f32.mrf.mxu0
        %v1054 = vadd.f32 0.0, %v1053
        %1055 = vmatmul.bf16.gmra.mxu0 %v780
        %v1056 = vpop.f32.mrf.mxu0
        %v1057 = vadd.f32 0.0, %v1056
        %v1058 = vpop.f32.mrf.mxu0
        %v1059 = vadd.f32 0.0, %v1058
        %1060 = vmatmul.bf16.gmra.mxu0 %v783
        %v1061 = vpop.f32.mrf.mxu0
        %v1062 = vadd.f32 0.0, %v1061
        %v1063 = vpop.f32.mrf.mxu0
        %v1064 = vadd.f32 0.0, %v1063
        %1065 = vmatmul.bf16.gmra.mxu0 %v786
        %v1066 = vpop.f32.mrf.mxu0
        %v1067 = vadd.f32 0.0, %v1066
        %v1068 = vpop.f32.mrf.mxu0
        %v1069 = vadd.f32 0.0, %v1068
        %1070 = vmatmul.bf16.gmra.mxu0 %v789
        %v1071 = vpop.f32.mrf.mxu0
        %v1072 = vadd.f32 0.0, %v1071
        %v1073 = vpop.f32.mrf.mxu0
        %v1074 = vadd.f32 0.0, %v1073
        %1075 = vmatmul.bf16.gmra.mxu0 %v792
        %v1076 = vpop.f32.mrf.mxu0
        %v1077 = vadd.f32 0.0, %v1076
        %v1078 = vpop.f32.mrf.mxu0
        %v1079 = vadd.f32 0.0, %v1078
        %1080 = vmatmul.bf16.gmra.mxu0 %v795
        %v1081 = vpop.f32.mrf.mxu0
        %v1082 = vadd.f32 0.0, %v1081
        %v1083 = vpop.f32.mrf.mxu0
        %v1084 = vadd.f32 0.0, %v1083
        %1085 = vmatmul.bf16.gmra.mxu0 %v798
        %v1086 = vpop.f32.mrf.mxu0
        %v1087 = vadd.f32 0.0, %v1086
        %v1088 = vpop.f32.mrf.mxu0
        %v1089 = vadd.f32 0.0, %v1088
        %1090 = vmatmul.bf16.gmra.mxu0 %v801
        %v1091 = vpop.f32.mrf.mxu0
        %v1092 = vadd.f32 0.0, %v1091
        %v1093 = vpop.f32.mrf.mxu0
        %v1094 = vadd.f32 0.0, %v1093
        %1095 = vmatmul.bf16.gmra.mxu0 %v804
        %v1096 = vpop.f32.mrf.mxu0
        %v1097 = vadd.f32 0.0, %v1096
        %v1098 = vpop.f32.mrf.mxu0
        %v1099 = vadd.f32 0.0, %v1098
        %1100 = vmatmul.bf16.gmra.mxu0 %v807
        %v1101 = vpop.f32.mrf.mxu0
        %v1102 = vadd.f32 0.0, %v1101
        %v1103 = vpop.f32.mrf.mxu0
        %v1104 = vadd.f32 0.0, %v1103
        %1105 = vmatmul.bf16.gmra.mxu0 %v810
        %v1106 = vpop.f32.mrf.mxu0
        %v1107 = vadd.f32 0.0, %v1106
        %v1108 = vpop.f32.mrf.mxu0
        %v1109 = vadd.f32 0.0, %v1108
        %1110 = vmatmul.bf16.gmra.mxu0 %v813
        %v1111 = vpop.f32.mrf.mxu0
        %v1112 = vadd.f32 0.0, %v1111
        %v1113 = vpop.f32.mrf.mxu0
        %v1114 = vadd.f32 0.0, %v1113
        %1115 = vmatmul.bf16.gmra.mxu0 %v816
        %v1116 = vpop.f32.mrf.mxu0
        %v1117 = vadd.f32 0.0, %v1116
        %v1118 = vpop.f32.mrf.mxu0
        %v1119 = vadd.f32 0.0, %v1118
        %1120 = vmatmul.bf16.gmra.mxu0 %v819
        %v1121 = vpop.f32.mrf.mxu0
        %v1122 = vadd.f32 0.0, %v1121
        %v1123 = vpop.f32.mrf.mxu0
        %v1124 = vadd.f32 0.0, %v1123
        %1125 = vmatmul.bf16.gmra.mxu0 %v822
        %v1126 = vpop.f32.mrf.mxu0
        %v1127 = vadd.f32 0.0, %v1126
        %v1128 = vpop.f32.mrf.mxu0
        %v1129 = vadd.f32 0.0, %v1128
        %1130 = vmatmul.bf16.gmra.mxu0 %v825
        %v1131 = vpop.f32.mrf.mxu0
        %v1132 = vadd.f32 0.0, %v1131
        %v1133 = vpop.f32.mrf.mxu0
        %v1134 = vadd.f32 0.0, %v1133
        %1135 = vmatmul.bf16.gmra.mxu0 %v828
        %v1136 = vpop.f32.mrf.mxu0
        %v1137 = vadd.f32 0.0, %v1136
        %v1138 = vpop.f32.mrf.mxu0
        %v1139 = vadd.f32 0.0, %v1138
        %1140 = vmatmul.bf16.gmra.mxu0 %v831
        %v1141 = vpop.f32.mrf.mxu0
        %v1142 = vadd.f32 0.0, %v1141
        %v1143 = vpop.f32.mrf.mxu0
        %v1144 = vadd.f32 0.0, %v1143
        %1145 = vmatmul.bf16.gmra.mxu0 %v834
        %v1146 = vpop.f32.mrf.mxu0
        %v1147 = vadd.f32 0.0, %v1146
        %v1148 = vpop.f32.mrf.mxu0
        %v1149 = vadd.f32 0.0, %v1148
        %1150 = vmatmul.bf16.gmra.mxu0 %v837
        %v1151 = vpop.f32.mrf.mxu0
        %v1152 = vadd.f32 0.0, %v1151
        %v1153 = vpop.f32.mrf.mxu0
        %v1154 = vadd.f32 0.0, %v1153
        %1155 = vmatmul.bf16.gmra.mxu0 %v840
        %v1156 = vpop.f32.mrf.mxu0
        %v1157 = vadd.f32 0.0, %v1156
        %v1158 = vpop.f32.mrf.mxu0
        %v1159 = vadd.f32 0.0, %v1158
        %1160 = vmatmul.bf16.gmra.mxu0 %v843
        %v1161 = vpop.f32.mrf.mxu0
        %v1162 = vadd.f32 0.0, %v1161
        %v1163 = vpop.f32.mrf.mxu0
        %v1164 = vadd.f32 0.0, %v1163
        %1165 = vmatmul.bf16.gmra.mxu0 %v846
        %v1166 = vpop.f32.mrf.mxu0
        %v1167 = vadd.f32 0.0, %v1166
        %v1168 = vpop.f32.mrf.mxu0
        %v1169 = vadd.f32 0.0, %v1168
        %1170 = vmatmul.bf16.gmra.mxu0 %v849
        %v1171 = vpop.f32.mrf.mxu0
        %v1172 = vadd.f32 0.0, %v1171
        %v1173 = vpop.f32.mrf.mxu0
        %v1174 = vadd.f32 0.0, %v1173
        %1175 = vmatmul.bf16.gmra.mxu0 %v852
        %v1176 = vpop.f32.mrf.mxu0
        %v1177 = vadd.f32 0.0, %v1176
        %v1178 = vpop.f32.mrf.mxu0
        %v1179 = vadd.f32 0.0, %v1178
        %1180 = vmatmul.bf16.gmra.mxu0 %v855
        %v1181 = vpop.f32.mrf.mxu0
        %v1182 = vadd.f32 0.0, %v1181
        %v1183 = vpop.f32.mrf.mxu0
        %v1184 = vadd.f32 0.0, %v1183
        %1185 = vdwg.mxu0
        %v1186 = vld [vmem:[%s2] sm:$0x1]
        %v1188 = vperm.slane %v1186, 0
        %v1190 = vmul.f32 %v867, %v1188
        %v1191 = vmul.f32 %v869, %v1188
        %v1192 = vmul.f32 %v872, %v1188
        %v1193 = vmul.f32 %v874, %v1188
        %v1194 = vmul.f32 %v877, %v1188
        %v1195 = vmul.f32 %v879, %v1188
        %v1196 = vmul.f32 %v882, %v1188
        %v1197 = vmul.f32 %v884, %v1188
        %v1198 = vmul.f32 %v887, %v1188
        %v1199 = vmul.f32 %v889, %v1188
        %v1200 = vmul.f32 %v892, %v1188
        %v1201 = vmul.f32 %v894, %v1188
        %v1202 = vmul.f32 %v897, %v1188
        %v1203 = vmul.f32 %v899, %v1188
        %v1204 = vmul.f32 %v902, %v1188
        %v1205 = vmul.f32 %v904, %v1188
        %v1206 = vmul.f32 %v907, %v1188
        %v1207 = vmul.f32 %v909, %v1188
        %v1208 = vmul.f32 %v912, %v1188
        %v1209 = vmul.f32 %v914, %v1188
        %v1210 = vmul.f32 %v917, %v1188
        %v1211 = vmul.f32 %v919, %v1188
        %v1212 = vmul.f32 %v922, %v1188
        %v1213 = vmul.f32 %v924, %v1188
        %v1214 = vmul.f32 %v927, %v1188
        %v1215 = vmul.f32 %v929, %v1188
        %v1216 = vmul.f32 %v932, %v1188
        %v1217 = vmul.f32 %v934, %v1188
        %v1218 = vmul.f32 %v937, %v1188
        %v1219 = vmul.f32 %v939, %v1188
        %v1220 = vmul.f32 %v942, %v1188
        %v1221 = vmul.f32 %v944, %v1188
        %v1222 = vmul.f32 %v947, %v1188
        %v1223 = vmul.f32 %v949, %v1188
        %v1224 = vmul.f32 %v952, %v1188
        %v1225 = vmul.f32 %v954, %v1188
        %v1226 = vmul.f32 %v957, %v1188
        %v1227 = vmul.f32 %v959, %v1188
        %v1228 = vmul.f32 %v962, %v1188
        %v1229 = vmul.f32 %v964, %v1188
        %v1230 = vmul.f32 %v967, %v1188
        %v1231 = vmul.f32 %v969, %v1188
        %v1232 = vmul.f32 %v972, %v1188
        %v1233 = vmul.f32 %v974, %v1188
        %v1234 = vmul.f32 %v977, %v1188
        %v1235 = vmul.f32 %v979, %v1188
        %v1236 = vmul.f32 %v982, %v1188
        %v1237 = vmul.f32 %v984, %v1188
        %v1238 = vmul.f32 %v987, %v1188
        %v1239 = vmul.f32 %v989, %v1188
        %v1240 = vmul.f32 %v992, %v1188
        %v1241 = vmul.f32 %v994, %v1188
        %v1242 = vmul.f32 %v997, %v1188
        %v1243 = vmul.f32 %v999, %v1188
        %v1244 = vmul.f32 %v1002, %v1188
        %v1245 = vmul.f32 %v1004, %v1188
        %v1246 = vmul.f32 %v1007, %v1188
        %v1247 = vmul.f32 %v1009, %v1188
        %v1248 = vmul.f32 %v1012, %v1188
        %v1249 = vmul.f32 %v1014, %v1188
        %v1250 = vmul.f32 %v1017, %v1188
        %v1251 = vmul.f32 %v1019, %v1188
        %v1252 = vmul.f32 %v1022, %v1188
        %v1253 = vmul.f32 %v1024, %v1188
        %v1254 = vmul.f32 %v1027, %v1188
        %v1255 = vmul.f32 %v1029, %v1188
        %v1256 = vmul.f32 %v1032, %v1188
        %v1257 = vmul.f32 %v1034, %v1188
        %v1258 = vmul.f32 %v1037, %v1188
        %v1259 = vmul.f32 %v1039, %v1188
        %v1260 = vmul.f32 %v1042, %v1188
        %v1261 = vmul.f32 %v1044, %v1188
        %v1262 = vmul.f32 %v1047, %v1188
        %v1263 = vmul.f32 %v1049, %v1188
        %v1264 = vmul.f32 %v1052, %v1188
        %v1265 = vmul.f32 %v1054, %v1188
        %v1266 = vmul.f32 %v1057, %v1188
        %v1267 = vmul.f32 %v1059, %v1188
        %v1268 = vmul.f32 %v1062, %v1188
        %v1269 = vmul.f32 %v1064, %v1188
        %v1270 = vmul.f32 %v1067, %v1188
        %v1271 = vmul.f32 %v1069, %v1188
        %v1272 = vmul.f32 %v1072, %v1188
        %v1273 = vmul.f32 %v1074, %v1188
        %v1274 = vmul.f32 %v1077, %v1188
        %v1275 = vmul.f32 %v1079, %v1188
        %v1276 = vmul.f32 %v1082, %v1188
        %v1277 = vmul.f32 %v1084, %v1188
        %v1278 = vmul.f32 %v1087, %v1188
        %v1279 = vmul.f32 %v1089, %v1188
        %v1280 = vmul.f32 %v1092, %v1188
        %v1281 = vmul.f32 %v1094, %v1188
        %v1282 = vmul.f32 %v1097, %v1188
        %v1283 = vmul.f32 %v1099, %v1188
        %v1284 = vmul.f32 %v1102, %v1188
        %v1285 = vmul.f32 %v1104, %v1188
        %v1286 = vmul.f32 %v1107, %v1188
        %v1287 = vmul.f32 %v1109, %v1188
        %v1288 = vmul.f32 %v1112, %v1188
        %v1289 = vmul.f32 %v1114, %v1188
        %v1290 = vmul.f32 %v1117, %v1188
        %v1291 = vmul.f32 %v1119, %v1188
        %v1292 = vmul.f32 %v1122, %v1188
        %v1293 = vmul.f32 %v1124, %v1188
        %v1294 = vmul.f32 %v1127, %v1188
        %v1295 = vmul.f32 %v1129, %v1188
        %v1296 = vmul.f32 %v1132, %v1188
        %v1297 = vmul.f32 %v1134, %v1188
        %v1298 = vmul.f32 %v1137, %v1188
        %v1299 = vmul.f32 %v1139, %v1188
        %v1300 = vmul.f32 %v1142, %v1188
        %v1301 = vmul.f32 %v1144, %v1188
        %v1302 = vmul.f32 %v1147, %v1188
        %v1303 = vmul.f32 %v1149, %v1188
        %v1304 = vmul.f32 %v1152, %v1188
        %v1305 = vmul.f32 %v1154, %v1188
        %v1306 = vmul.f32 %v1157, %v1188
        %v1307 = vmul.f32 %v1159, %v1188
        %v1308 = vmul.f32 %v1162, %v1188
        %v1309 = vmul.f32 %v1164, %v1188
        %v1310 = vmul.f32 %v1167, %v1188
        %v1311 = vmul.f32 %v1169, %v1188
        %v1312 = vmul.f32 %v1172, %v1188
        %v1313 = vmul.f32 %v1174, %v1188
        %v1314 = vmul.f32 %v1177, %v1188
        %v1315 = vmul.f32 %v1179, %v1188
        %v1316 = vmul.f32 %v1182, %v1188
        %v1317 = vmul.f32 %v1184, %v1188
        %v1318 = vld [vmem:[%s3] sm:$0x1]
        %v1320 = vperm.slane %v1318, 0
        %v1322 = vadd.f32 %v1190, %v1320
        %v1323 = vadd.f32 %v1191, %v1320
        %v1324 = vadd.f32 %v1192, %v1320
        %v1325 = vadd.f32 %v1193, %v1320
        %v1326 = vadd.f32 %v1194, %v1320
        %v1327 = vadd.f32 %v1195, %v1320
        %v1328 = vadd.f32 %v1196, %v1320
        %v1329 = vadd.f32 %v1197, %v1320
        %v1330 = vadd.f32 %v1198, %v1320
        %v1331 = vadd.f32 %v1199, %v1320
        %v1332 = vadd.f32 %v1200, %v1320
        %v1333 = vadd.f32 %v1201, %v1320
        %v1334 = vadd.f32 %v1202, %v1320
        %v1335 = vadd.f32 %v1203, %v1320
        %v1336 = vadd.f32 %v1204, %v1320
        %v1337 = vadd.f32 %v1205, %v1320
        %v1338 = vadd.f32 %v1206, %v1320
        %v1339 = vadd.f32 %v1207, %v1320
        %v1340 = vadd.f32 %v1208, %v1320
        %v1341 = vadd.f32 %v1209, %v1320
        %v1342 = vadd.f32 %v1210, %v1320
        %v1343 = vadd.f32 %v1211, %v1320
        %v1344 = vadd.f32 %v1212, %v1320
        %v1345 = vadd.f32 %v1213, %v1320
        %v1346 = vadd.f32 %v1214, %v1320
        %v1347 = vadd.f32 %v1215, %v1320
        %v1348 = vadd.f32 %v1216, %v1320
        %v1349 = vadd.f32 %v1217, %v1320
        %v1350 = vadd.f32 %v1218, %v1320
        %v1351 = vadd.f32 %v1219, %v1320
        %v1352 = vadd.f32 %v1220, %v1320
        %v1353 = vadd.f32 %v1221, %v1320
        %v1354 = vadd.f32 %v1222, %v1320
        %v1355 = vadd.f32 %v1223, %v1320
        %v1356 = vadd.f32 %v1224, %v1320
        %v1357 = vadd.f32 %v1225, %v1320
        %v1358 = vadd.f32 %v1226, %v1320
        %v1359 = vadd.f32 %v1227, %v1320
        %v1360 = vadd.f32 %v1228, %v1320
        %v1361 = vadd.f32 %v1229, %v1320
        %v1362 = vadd.f32 %v1230, %v1320
        %v1363 = vadd.f32 %v1231, %v1320
        %v1364 = vadd.f32 %v1232, %v1320
        %v1365 = vadd.f32 %v1233, %v1320
        %v1366 = vadd.f32 %v1234, %v1320
        %v1367 = vadd.f32 %v1235, %v1320
        %v1368 = vadd.f32 %v1236, %v1320
        %v1369 = vadd.f32 %v1237, %v1320
        %v1370 = vadd.f32 %v1238, %v1320
        %v1371 = vadd.f32 %v1239, %v1320
        %v1372 = vadd.f32 %v1240, %v1320
        %v1373 = vadd.f32 %v1241, %v1320
        %v1374 = vadd.f32 %v1242, %v1320
        %v1375 = vadd.f32 %v1243, %v1320
        %v1376 = vadd.f32 %v1244, %v1320
        %v1377 = vadd.f32 %v1245, %v1320
        %v1378 = vadd.f32 %v1246, %v1320
        %v1379 = vadd.f32 %v1247, %v1320
        %v1380 = vadd.f32 %v1248, %v1320
        %v1381 = vadd.f32 %v1249, %v1320
        %v1382 = vadd.f32 %v1250, %v1320
        %v1383 = vadd.f32 %v1251, %v1320
        %v1384 = vadd.f32 %v1252, %v1320
        %v1385 = vadd.f32 %v1253, %v1320
        %v1386 = vadd.f32 %v1254, %v1320
        %v1387 = vadd.f32 %v1255, %v1320
        %v1388 = vadd.f32 %v1256, %v1320
        %v1389 = vadd.f32 %v1257, %v1320
        %v1390 = vadd.f32 %v1258, %v1320
        %v1391 = vadd.f32 %v1259, %v1320
        %v1392 = vadd.f32 %v1260, %v1320
        %v1393 = vadd.f32 %v1261, %v1320
        %v1394 = vadd.f32 %v1262, %v1320
        %v1395 = vadd.f32 %v1263, %v1320
        %v1396 = vadd.f32 %v1264, %v1320
        %v1397 = vadd.f32 %v1265, %v1320
        %v1398 = vadd.f32 %v1266, %v1320
        %v1399 = vadd.f32 %v1267, %v1320
        %v1400 = vadd.f32 %v1268, %v1320
        %v1401 = vadd.f32 %v1269, %v1320
        %v1402 = vadd.f32 %v1270, %v1320
        %v1403 = vadd.f32 %v1271, %v1320
        %v1404 = vadd.f32 %v1272, %v1320
        %v1405 = vadd.f32 %v1273, %v1320
        %v1406 = vadd.f32 %v1274, %v1320
        %v1407 = vadd.f32 %v1275, %v1320
        %v1408 = vadd.f32 %v1276, %v1320
        %v1409 = vadd.f32 %v1277, %v1320
        %v1410 = vadd.f32 %v1278, %v1320
        %v1411 = vadd.f32 %v1279, %v1320
        %v1412 = vadd.f32 %v1280, %v1320
        %v1413 = vadd.f32 %v1281, %v1320
        %v1414 = vadd.f32 %v1282, %v1320
        %v1415 = vadd.f32 %v1283, %v1320
        %v1416 = vadd.f32 %v1284, %v1320
        %v1417 = vadd.f32 %v1285, %v1320
        %v1418 = vadd.f32 %v1286, %v1320
        %v1419 = vadd.f32 %v1287, %v1320
        %v1420 = vadd.f32 %v1288, %v1320
        %v1421 = vadd.f32 %v1289, %v1320
        %v1422 = vadd.f32 %v1290, %v1320
        %v1423 = vadd.f32 %v1291, %v1320
        %v1424 = vadd.f32 %v1292, %v1320
        %v1425 = vadd.f32 %v1293, %v1320
        %v1426 = vadd.f32 %v1294, %v1320
        %v1427 = vadd.f32 %v1295, %v1320
        %v1428 = vadd.f32 %v1296, %v1320
        %v1429 = vadd.f32 %v1297, %v1320
        %v1430 = vadd.f32 %v1298, %v1320
        %v1431 = vadd.f32 %v1299, %v1320
        %v1432 = vadd.f32 %v1300, %v1320
        %v1433 = vadd.f32 %v1301, %v1320
        %v1434 = vadd.f32 %v1302, %v1320
        %v1435 = vadd.f32 %v1303, %v1320
        %v1436 = vadd.f32 %v1304, %v1320
        %v1437 = vadd.f32 %v1305, %v1320
        %v1438 = vadd.f32 %v1306, %v1320
        %v1439 = vadd.f32 %v1307, %v1320
        %v1440 = vadd.f32 %v1308, %v1320
        %v1441 = vadd.f32 %v1309, %v1320
        %v1442 = vadd.f32 %v1310, %v1320
        %v1443 = vadd.f32 %v1311, %v1320
        %v1444 = vadd.f32 %v1312, %v1320
        %v1445 = vadd.f32 %v1313, %v1320
        %v1446 = vadd.f32 %v1314, %v1320
        %v1447 = vadd.f32 %v1315, %v1320
        %v1448 = vadd.f32 %v1316, %v1320
        %v1449 = vadd.f32 %v1317, %v1320
        %v1450 = vxor.u32 %v1322, 2147483648
        %v1451 = vxor.u32 %v1323, 2147483648
        %v1452 = vxor.u32 %v1324, 2147483648
        %v1453 = vxor.u32 %v1325, 2147483648
        %v1454 = vxor.u32 %v1326, 2147483648
        %v1455 = vxor.u32 %v1327, 2147483648
        %v1456 = vxor.u32 %v1328, 2147483648
        %v1457 = vxor.u32 %v1329, 2147483648
        %v1458 = vxor.u32 %v1330, 2147483648
        %v1459 = vxor.u32 %v1331, 2147483648
        %v1460 = vxor.u32 %v1332, 2147483648
        %v1461 = vxor.u32 %v1333, 2147483648
        %v1462 = vxor.u32 %v1334, 2147483648
        %v1463 = vxor.u32 %v1335, 2147483648
        %v1464 = vxor.u32 %v1336, 2147483648
        %v1465 = vxor.u32 %v1337, 2147483648
        %v1466 = vxor.u32 %v1338, 2147483648
        %v1467 = vxor.u32 %v1339, 2147483648
        %v1468 = vxor.u32 %v1340, 2147483648
        %v1469 = vxor.u32 %v1341, 2147483648
        %v1470 = vxor.u32 %v1342, 2147483648
        %v1471 = vxor.u32 %v1343, 2147483648
        %v1472 = vxor.u32 %v1344, 2147483648
        %v1473 = vxor.u32 %v1345, 2147483648
        %v1474 = vxor.u32 %v1346, 2147483648
        %v1475 = vxor.u32 %v1347, 2147483648
        %v1476 = vxor.u32 %v1348, 2147483648
        %v1477 = vxor.u32 %v1349, 2147483648
        %v1478 = vxor.u32 %v1350, 2147483648
        %v1479 = vxor.u32 %v1351, 2147483648
        %v1480 = vxor.u32 %v1352, 2147483648
        %v1481 = vxor.u32 %v1353, 2147483648
        %v1482 = vxor.u32 %v1354, 2147483648
        %v1483 = vxor.u32 %v1355, 2147483648
        %v1484 = vxor.u32 %v1356, 2147483648
        %v1485 = vxor.u32 %v1357, 2147483648
        %v1486 = vxor.u32 %v1358, 2147483648
        %v1487 = vxor.u32 %v1359, 2147483648
        %v1488 = vxor.u32 %v1360, 2147483648
        %v1489 = vxor.u32 %v1361, 2147483648
        %v1490 = vxor.u32 %v1362, 2147483648
        %v1491 = vxor.u32 %v1363, 2147483648
        %v1492 = vxor.u32 %v1364, 2147483648
        %v1493 = vxor.u32 %v1365, 2147483648
        %v1494 = vxor.u32 %v1366, 2147483648
        %v1495 = vxor.u32 %v1367, 2147483648
        %v1496 = vxor.u32 %v1368, 2147483648
        %v1497 = vxor.u32 %v1369, 2147483648
        %v1498 = vxor.u32 %v1370, 2147483648
        %v1499 = vxor.u32 %v1371, 2147483648
        %v1500 = vxor.u32 %v1372, 2147483648
        %v1501 = vxor.u32 %v1373, 2147483648
        %v1502 = vxor.u32 %v1374, 2147483648
        %v1503 = vxor.u32 %v1375, 2147483648
        %v1504 = vxor.u32 %v1376, 2147483648
        %v1505 = vxor.u32 %v1377, 2147483648
        %v1506 = vxor.u32 %v1378, 2147483648
        %v1507 = vxor.u32 %v1379, 2147483648
        %v1508 = vxor.u32 %v1380, 2147483648
        %v1509 = vxor.u32 %v1381, 2147483648
        %v1510 = vxor.u32 %v1382, 2147483648
        %v1511 = vxor.u32 %v1383, 2147483648
        %v1512 = vxor.u32 %v1384, 2147483648
        %v1513 = vxor.u32 %v1385, 2147483648
        %v1514 = vxor.u32 %v1386, 2147483648
        %v1515 = vxor.u32 %v1387, 2147483648
        %v1516 = vxor.u32 %v1388, 2147483648
        %v1517 = vxor.u32 %v1389, 2147483648
        %v1518 = vxor.u32 %v1390, 2147483648
        %v1519 = vxor.u32 %v1391, 2147483648
        %v1520 = vxor.u32 %v1392, 2147483648
        %v1521 = vxor.u32 %v1393, 2147483648
        %v1522 = vxor.u32 %v1394, 2147483648
        %v1523 = vxor.u32 %v1395, 2147483648
        %v1524 = vxor.u32 %v1396, 2147483648
        %v1525 = vxor.u32 %v1397, 2147483648
        %v1526 = vxor.u32 %v1398, 2147483648
        %v1527 = vxor.u32 %v1399, 2147483648
        %v1528 = vxor.u32 %v1400, 2147483648
        %v1529 = vxor.u32 %v1401, 2147483648
        %v1530 = vxor.u32 %v1402, 2147483648
        %v1531 = vxor.u32 %v1403, 2147483648
        %v1532 = vxor.u32 %v1404, 2147483648
        %v1533 = vxor.u32 %v1405, 2147483648
        %v1534 = vxor.u32 %v1406, 2147483648
        %v1535 = vxor.u32 %v1407, 2147483648
        %v1536 = vxor.u32 %v1408, 2147483648
        %v1537 = vxor.u32 %v1409, 2147483648
        %v1538 = vxor.u32 %v1410, 2147483648
        %v1539 = vxor.u32 %v1411, 2147483648
        %v1540 = vxor.u32 %v1412, 2147483648
        %v1541 = vxor.u32 %v1413, 2147483648
        %v1542 = vxor.u32 %v1414, 2147483648
        %v1543 = vxor.u32 %v1415, 2147483648
        %v1544 = vxor.u32 %v1416, 2147483648
        %v1545 = vxor.u32 %v1417, 2147483648
        %v1546 = vxor.u32 %v1418, 2147483648
        %v1547 = vxor.u32 %v1419, 2147483648
        %v1548 = vxor.u32 %v1420, 2147483648
        %v1549 = vxor.u32 %v1421, 2147483648
        %v1550 = vxor.u32 %v1422, 2147483648
        %v1551 = vxor.u32 %v1423, 2147483648
        %v1552 = vxor.u32 %v1424, 2147483648
        %v1553 = vxor.u32 %v1425, 2147483648
        %v1554 = vxor.u32 %v1426, 2147483648
        %v1555 = vxor.u32 %v1427, 2147483648
        %v1556 = vxor.u32 %v1428, 2147483648
        %v1557 = vxor.u32 %v1429, 2147483648
        %v1558 = vxor.u32 %v1430, 2147483648
        %v1559 = vxor.u32 %v1431, 2147483648
        %v1560 = vxor.u32 %v1432, 2147483648
        %v1561 = vxor.u32 %v1433, 2147483648
        %v1562 = vxor.u32 %v1434, 2147483648
        %v1563 = vxor.u32 %v1435, 2147483648
        %v1564 = vxor.u32 %v1436, 2147483648
        %v1565 = vxor.u32 %v1437, 2147483648
        %v1566 = vxor.u32 %v1438, 2147483648
        %v1567 = vxor.u32 %v1439, 2147483648
        %v1568 = vxor.u32 %v1440, 2147483648
        %v1569 = vxor.u32 %v1441, 2147483648
        %v1570 = vxor.u32 %v1442, 2147483648
        %v1571 = vxor.u32 %v1443, 2147483648
        %v1572 = vxor.u32 %v1444, 2147483648
        %v1573 = vxor.u32 %v1445, 2147483648
        %v1574 = vxor.u32 %v1446, 2147483648
        %v1575 = vxor.u32 %v1447, 2147483648
        %v1576 = vxor.u32 %v1448, 2147483648
        %v1577 = vxor.u32 %v1449, 2147483648
        %v1578 = vmul.f32 %v1450, 1.442695
        %v1579 = vpow.pop %v1578
        %v1580 = vmul.f32 %v1451, 1.442695
        %v1581 = vpow.pop %v1580
        %v1582 = vmul.f32 %v1452, 1.442695
        %v1583 = vpow.pop %v1582
        %v1584 = vmul.f32 %v1453, 1.442695
        %v1585 = vpow.pop %v1584
        %v1586 = vmul.f32 %v1454, 1.442695
        %v1587 = vpow.pop %v1586
        %v1588 = vmul.f32 %v1455, 1.442695
        %v1589 = vpow.pop %v1588
        %v1590 = vmul.f32 %v1456, 1.442695
        %v1591 = vpow.pop %v1590
        %v1592 = vmul.f32 %v1457, 1.442695
        %v1593 = vpow.pop %v1592
        %v1594 = vmul.f32 %v1458, 1.442695
        %v1595 = vpow.pop %v1594
        %v1596 = vmul.f32 %v1459, 1.442695
        %v1597 = vpow.pop %v1596
        %v1598 = vmul.f32 %v1460, 1.442695
        %v1599 = vpow.pop %v1598
        %v1600 = vmul.f32 %v1461, 1.442695
        %v1601 = vpow.pop %v1600
        %v1602 = vmul.f32 %v1462, 1.442695
        %v1603 = vpow.pop %v1602
        %v1604 = vmul.f32 %v1463, 1.442695
        %v1605 = vpow.pop %v1604
        %v1606 = vmul.f32 %v1464, 1.442695
        %v1607 = vpow.pop %v1606
        %v1608 = vmul.f32 %v1465, 1.442695
        %v1609 = vpow.pop %v1608
        %v1610 = vmul.f32 %v1466, 1.442695
        %v1611 = vpow.pop %v1610
        %v1612 = vmul.f32 %v1467, 1.442695
        %v1613 = vpow.pop %v1612
        %v1614 = vmul.f32 %v1468, 1.442695
        %v1615 = vpow.pop %v1614
        %v1616 = vmul.f32 %v1469, 1.442695
        %v1617 = vpow.pop %v1616
        %v1618 = vmul.f32 %v1470, 1.442695
        %v1619 = vpow.pop %v1618
        %v1620 = vmul.f32 %v1471, 1.442695
        %v1621 = vpow.pop %v1620
        %v1622 = vmul.f32 %v1472, 1.442695
        %v1623 = vpow.pop %v1622
        %v1624 = vmul.f32 %v1473, 1.442695
        %v1625 = vpow.pop %v1624
        %v1626 = vmul.f32 %v1474, 1.442695
        %v1627 = vpow.pop %v1626
        %v1628 = vmul.f32 %v1475, 1.442695
        %v1629 = vpow.pop %v1628
        %v1630 = vmul.f32 %v1476, 1.442695
        %v1631 = vpow.pop %v1630
        %v1632 = vmul.f32 %v1477, 1.442695
        %v1633 = vpow.pop %v1632
        %v1634 = vmul.f32 %v1478, 1.442695
        %v1635 = vpow.pop %v1634
        %v1636 = vmul.f32 %v1479, 1.442695
        %v1637 = vpow.pop %v1636
        %v1638 = vmul.f32 %v1480, 1.442695
        %v1639 = vpow.pop %v1638
        %v1640 = vmul.f32 %v1481, 1.442695
        %v1641 = vpow.pop %v1640
        %v1642 = vmul.f32 %v1482, 1.442695
        %v1643 = vpow.pop %v1642
        %v1644 = vmul.f32 %v1483, 1.442695
        %v1645 = vpow.pop %v1644
        %v1646 = vmul.f32 %v1484, 1.442695
        %v1647 = vpow.pop %v1646
        %v1648 = vmul.f32 %v1485, 1.442695
        %v1649 = vpow.pop %v1648
        %v1650 = vmul.f32 %v1486, 1.442695
        %v1651 = vpow.pop %v1650
        %v1652 = vmul.f32 %v1487, 1.442695
        %v1653 = vpow.pop %v1652
        %v1654 = vmul.f32 %v1488, 1.442695
        %v1655 = vpow.pop %v1654
        %v1656 = vmul.f32 %v1489, 1.442695
        %v1657 = vpow.pop %v1656
        %v1658 = vmul.f32 %v1490, 1.442695
        %v1659 = vpow.pop %v1658
        %v1660 = vmul.f32 %v1491, 1.442695
        %v1661 = vpow.pop %v1660
        %v1662 = vmul.f32 %v1492, 1.442695
        %v1663 = vpow.pop %v1662
        %v1664 = vmul.f32 %v1493, 1.442695
        %v1665 = vpow.pop %v1664
        %v1666 = vmul.f32 %v1494, 1.442695
        %v1667 = vpow.pop %v1666
        %v1668 = vmul.f32 %v1495, 1.442695
        %v1669 = vpow.pop %v1668
        %v1670 = vmul.f32 %v1496, 1.442695
        %v1671 = vpow.pop %v1670
        %v1672 = vmul.f32 %v1497, 1.442695
        %v1673 = vpow.pop %v1672
        %v1674 = vmul.f32 %v1498, 1.442695
        %v1675 = vpow.pop %v1674
        %v1676 = vmul.f32 %v1499, 1.442695
        %v1677 = vpow.pop %v1676
        %v1678 = vmul.f32 %v1500, 1.442695
        %v1679 = vpow.pop %v1678
        %v1680 = vmul.f32 %v1501, 1.442695
        %v1681 = vpow.pop %v1680
        %v1682 = vmul.f32 %v1502, 1.442695
        %v1683 = vpow.pop %v1682
        %v1684 = vmul.f32 %v1503, 1.442695
        %v1685 = vpow.pop %v1684
        %v1686 = vmul.f32 %v1504, 1.442695
        %v1687 = vpow.pop %v1686
        %v1688 = vmul.f32 %v1505, 1.442695
        %v1689 = vpow.pop %v1688
        %v1690 = vmul.f32 %v1506, 1.442695
        %v1691 = vpow.pop %v1690
        %v1692 = vmul.f32 %v1507, 1.442695
        %v1693 = vpow.pop %v1692
        %v1694 = vmul.f32 %v1508, 1.442695
        %v1695 = vpow.pop %v1694
        %v1696 = vmul.f32 %v1509, 1.442695
        %v1697 = vpow.pop %v1696
        %v1698 = vmul.f32 %v1510, 1.442695
        %v1699 = vpow.pop %v1698
        %v1700 = vmul.f32 %v1511, 1.442695
        %v1701 = vpow.pop %v1700
        %v1702 = vmul.f32 %v1512, 1.442695
        %v1703 = vpow.pop %v1702
        %v1704 = vmul.f32 %v1513, 1.442695
        %v1705 = vpow.pop %v1704
        %v1706 = vmul.f32 %v1514, 1.442695
        %v1707 = vpow.pop %v1706
        %v1708 = vmul.f32 %v1515, 1.442695
        %v1709 = vpow.pop %v1708
        %v1710 = vmul.f32 %v1516, 1.442695
        %v1711 = vpow.pop %v1710
        %v1712 = vmul.f32 %v1517, 1.442695
        %v1713 = vpow.pop %v1712
        %v1714 = vmul.f32 %v1518, 1.442695
        %v1715 = vpow.pop %v1714
        %v1716 = vmul.f32 %v1519, 1.442695
        %v1717 = vpow.pop %v1716
        %v1718 = vmul.f32 %v1520, 1.442695
        %v1719 = vpow.pop %v1718
        %v1720 = vmul.f32 %v1521, 1.442695
        %v1721 = vpow.pop %v1720
        %v1722 = vmul.f32 %v1522, 1.442695
        %v1723 = vpow.pop %v1722
        %v1724 = vmul.f32 %v1523, 1.442695
        %v1725 = vpow.pop %v1724
        %v1726 = vmul.f32 %v1524, 1.442695
        %v1727 = vpow.pop %v1726
        %v1728 = vmul.f32 %v1525, 1.442695
        %v1729 = vpow.pop %v1728
        %v1730 = vmul.f32 %v1526, 1.442695
        %v1731 = vpow.pop %v1730
        %v1732 = vmul.f32 %v1527, 1.442695
        %v1733 = vpow.pop %v1732
        %v1734 = vmul.f32 %v1528, 1.442695
        %v1735 = vpow.pop %v1734
        %v1736 = vmul.f32 %v1529, 1.442695
        %v1737 = vpow.pop %v1736
        %v1738 = vmul.f32 %v1530, 1.442695
        %v1739 = vpow.pop %v1738
        %v1740 = vmul.f32 %v1531, 1.442695
        %v1741 = vpow.pop %v1740
        %v1742 = vmul.f32 %v1532, 1.442695
        %v1743 = vpow.pop %v1742
        %v1744 = vmul.f32 %v1533, 1.442695
        %v1745 = vpow.pop %v1744
        %v1746 = vmul.f32 %v1534, 1.442695
        %v1747 = vpow.pop %v1746
        %v1748 = vmul.f32 %v1535, 1.442695
        %v1749 = vpow.pop %v1748
        %v1750 = vmul.f32 %v1536, 1.442695
        %v1751 = vpow.pop %v1750
        %v1752 = vmul.f32 %v1537, 1.442695
        %v1753 = vpow.pop %v1752
        %v1754 = vmul.f32 %v1538, 1.442695
        %v1755 = vpow.pop %v1754
        %v1756 = vmul.f32 %v1539, 1.442695
        %v1757 = vpow.pop %v1756
        %v1758 = vmul.f32 %v1540, 1.442695
        %v1759 = vpow.pop %v1758
        %v1760 = vmul.f32 %v1541, 1.442695
        %v1761 = vpow.pop %v1760
        %v1762 = vmul.f32 %v1542, 1.442695
        %v1763 = vpow.pop %v1762
        %v1764 = vmul.f32 %v1543, 1.442695
        %v1765 = vpow.pop %v1764
        %v1766 = vmul.f32 %v1544, 1.442695
        %v1767 = vpow.pop %v1766
        %v1768 = vmul.f32 %v1545, 1.442695
        %v1769 = vpow.pop %v1768
        %v1770 = vmul.f32 %v1546, 1.442695
        %v1771 = vpow.pop %v1770
        %v1772 = vmul.f32 %v1547, 1.442695
        %v1773 = vpow.pop %v1772
        %v1774 = vmul.f32 %v1548, 1.442695
        %v1775 = vpow.pop %v1774
        %v1776 = vmul.f32 %v1549, 1.442695
        %v1777 = vpow.pop %v1776
        %v1778 = vmul.f32 %v1550, 1.442695
        %v1779 = vpow.pop %v1778
        %v1780 = vmul.f32 %v1551, 1.442695
        %v1781 = vpow.pop %v1780
        %v1782 = vmul.f32 %v1552, 1.442695
        %v1783 = vpow.pop %v1782
        %v1784 = vmul.f32 %v1553, 1.442695
        %v1785 = vpow.pop %v1784
        %v1786 = vmul.f32 %v1554, 1.442695
        %v1787 = vpow.pop %v1786
        %v1788 = vmul.f32 %v1555, 1.442695
        %v1789 = vpow.pop %v1788
        %v1790 = vmul.f32 %v1556, 1.442695
        %v1791 = vpow.pop %v1790
        %v1792 = vmul.f32 %v1557, 1.442695
        %v1793 = vpow.pop %v1792
        %v1794 = vmul.f32 %v1558, 1.442695
        %v1795 = vpow.pop %v1794
        %v1796 = vmul.f32 %v1559, 1.442695
        %v1797 = vpow.pop %v1796
        %v1798 = vmul.f32 %v1560, 1.442695
        %v1799 = vpow.pop %v1798
        %v1800 = vmul.f32 %v1561, 1.442695
        %v1801 = vpow.pop %v1800
        %v1802 = vmul.f32 %v1562, 1.442695
        %v1803 = vpow.pop %v1802
        %v1804 = vmul.f32 %v1563, 1.442695
        %v1805 = vpow.pop %v1804
        %v1806 = vmul.f32 %v1564, 1.442695
        %v1807 = vpow.pop %v1806
        %v1808 = vmul.f32 %v1565, 1.442695
        %v1809 = vpow.pop %v1808
        %v1810 = vmul.f32 %v1566, 1.442695
        %v1811 = vpow.pop %v1810
        %v1812 = vmul.f32 %v1567, 1.442695
        %v1813 = vpow.pop %v1812
        %v1814 = vmul.f32 %v1568, 1.442695
        %v1815 = vpow.pop %v1814
        %v1816 = vmul.f32 %v1569, 1.442695
        %v1817 = vpow.pop %v1816
        %v1818 = vmul.f32 %v1570, 1.442695
        %v1819 = vpow.pop %v1818
        %v1820 = vmul.f32 %v1571, 1.442695
        %v1821 = vpow.pop %v1820
        %v1822 = vmul.f32 %v1572, 1.442695
        %v1823 = vpow.pop %v1822
        %v1824 = vmul.f32 %v1573, 1.442695
        %v1825 = vpow.pop %v1824
        %v1826 = vmul.f32 %v1574, 1.442695
        %v1827 = vpow.pop %v1826
        %v1828 = vmul.f32 %v1575, 1.442695
        %v1829 = vpow.pop %v1828
        %v1830 = vmul.f32 %v1576, 1.442695
        %v1831 = vpow.pop %v1830
        %v1832 = vmul.f32 %v1577, 1.442695
        %v1833 = vpow.pop %v1832
        %v1834 = vadd.f32 %v1579, 1.0
        %v1835 = vadd.f32 %v1581, 1.0
        %v1836 = vadd.f32 %v1583, 1.0
        %v1837 = vadd.f32 %v1585, 1.0
        %v1838 = vadd.f32 %v1587, 1.0
        %v1839 = vadd.f32 %v1589, 1.0
        %v1840 = vadd.f32 %v1591, 1.0
        %v1841 = vadd.f32 %v1593, 1.0
        %v1842 = vadd.f32 %v1595, 1.0
        %v1843 = vadd.f32 %v1597, 1.0
        %v1844 = vadd.f32 %v1599, 1.0
        %v1845 = vadd.f32 %v1601, 1.0
        %v1846 = vadd.f32 %v1603, 1.0
        %v1847 = vadd.f32 %v1605, 1.0
        %v1848 = vadd.f32 %v1607, 1.0
        %v1849 = vadd.f32 %v1609, 1.0
        %v1850 = vadd.f32 %v1611, 1.0
        %v1851 = vadd.f32 %v1613, 1.0
        %v1852 = vadd.f32 %v1615, 1.0
        %v1853 = vadd.f32 %v1617, 1.0
        %v1854 = vadd.f32 %v1619, 1.0
        %v1855 = vadd.f32 %v1621, 1.0
        %v1856 = vadd.f32 %v1623, 1.0
        %v1857 = vadd.f32 %v1625, 1.0
        %v1858 = vadd.f32 %v1627, 1.0
        %v1859 = vadd.f32 %v1629, 1.0
        %v1860 = vadd.f32 %v1631, 1.0
        %v1861 = vadd.f32 %v1633, 1.0
        %v1862 = vadd.f32 %v1635, 1.0
        %v1863 = vadd.f32 %v1637, 1.0
        %v1864 = vadd.f32 %v1639, 1.0
        %v1865 = vadd.f32 %v1641, 1.0
        %v1866 = vadd.f32 %v1643, 1.0
        %v1867 = vadd.f32 %v1645, 1.0
        %v1868 = vadd.f32 %v1647, 1.0
        %v1869 = vadd.f32 %v1649, 1.0
        %v1870 = vadd.f32 %v1651, 1.0
        %v1871 = vadd.f32 %v1653, 1.0
        %v1872 = vadd.f32 %v1655, 1.0
        %v1873 = vadd.f32 %v1657, 1.0
        %v1874 = vadd.f32 %v1659, 1.0
        %v1875 = vadd.f32 %v1661, 1.0
        %v1876 = vadd.f32 %v1663, 1.0
        %v1877 = vadd.f32 %v1665, 1.0
        %v1878 = vadd.f32 %v1667, 1.0
        %v1879 = vadd.f32 %v1669, 1.0
        %v1880 = vadd.f32 %v1671, 1.0
        %v1881 = vadd.f32 %v1673, 1.0
        %v1882 = vadd.f32 %v1675, 1.0
        %v1883 = vadd.f32 %v1677, 1.0
        %v1884 = vadd.f32 %v1679, 1.0
        %v1885 = vadd.f32 %v1681, 1.0
        %v1886 = vadd.f32 %v1683, 1.0
        %v1887 = vadd.f32 %v1685, 1.0
        %v1888 = vadd.f32 %v1687, 1.0
        %v1889 = vadd.f32 %v1689, 1.0
        %v1890 = vadd.f32 %v1691, 1.0
        %v1891 = vadd.f32 %v1693, 1.0
        %v1892 = vadd.f32 %v1695, 1.0
        %v1893 = vadd.f32 %v1697, 1.0
        %v1894 = vadd.f32 %v1699, 1.0
        %v1895 = vadd.f32 %v1701, 1.0
        %v1896 = vadd.f32 %v1703, 1.0
        %v1897 = vadd.f32 %v1705, 1.0
        %v1898 = vadd.f32 %v1707, 1.0
        %v1899 = vadd.f32 %v1709, 1.0
        %v1900 = vadd.f32 %v1711, 1.0
        %v1901 = vadd.f32 %v1713, 1.0
        %v1902 = vadd.f32 %v1715, 1.0
        %v1903 = vadd.f32 %v1717, 1.0
        %v1904 = vadd.f32 %v1719, 1.0
        %v1905 = vadd.f32 %v1721, 1.0
        %v1906 = vadd.f32 %v1723, 1.0
        %v1907 = vadd.f32 %v1725, 1.0
        %v1908 = vadd.f32 %v1727, 1.0
        %v1909 = vadd.f32 %v1729, 1.0
        %v1910 = vadd.f32 %v1731, 1.0
        %v1911 = vadd.f32 %v1733, 1.0
        %v1912 = vadd.f32 %v1735, 1.0
        %v1913 = vadd.f32 %v1737, 1.0
        %v1914 = vadd.f32 %v1739, 1.0
        %v1915 = vadd.f32 %v1741, 1.0
        %v1916 = vadd.f32 %v1743, 1.0
        %v1917 = vadd.f32 %v1745, 1.0
        %v1918 = vadd.f32 %v1747, 1.0
        %v1919 = vadd.f32 %v1749, 1.0
        %v1920 = vadd.f32 %v1751, 1.0
        %v1921 = vadd.f32 %v1753, 1.0
        %v1922 = vadd.f32 %v1755, 1.0
        %v1923 = vadd.f32 %v1757, 1.0
        %v1924 = vadd.f32 %v1759, 1.0
        %v1925 = vadd.f32 %v1761, 1.0
        %v1926 = vadd.f32 %v1763, 1.0
        %v1927 = vadd.f32 %v1765, 1.0
        %v1928 = vadd.f32 %v1767, 1.0
        %v1929 = vadd.f32 %v1769, 1.0
        %v1930 = vadd.f32 %v1771, 1.0
        %v1931 = vadd.f32 %v1773, 1.0
        %v1932 = vadd.f32 %v1775, 1.0
        %v1933 = vadd.f32 %v1777, 1.0
        %v1934 = vadd.f32 %v1779, 1.0
        %v1935 = vadd.f32 %v1781, 1.0
        %v1936 = vadd.f32 %v1783, 1.0
        %v1937 = vadd.f32 %v1785, 1.0
        %v1938 = vadd.f32 %v1787, 1.0
        %v1939 = vadd.f32 %v1789, 1.0
        %v1940 = vadd.f32 %v1791, 1.0
        %v1941 = vadd.f32 %v1793, 1.0
        %v1942 = vadd.f32 %v1795, 1.0
        %v1943 = vadd.f32 %v1797, 1.0
        %v1944 = vadd.f32 %v1799, 1.0
        %v1945 = vadd.f32 %v1801, 1.0
        %v1946 = vadd.f32 %v1803, 1.0
        %v1947 = vadd.f32 %v1805, 1.0
        %v1948 = vadd.f32 %v1807, 1.0
        %v1949 = vadd.f32 %v1809, 1.0
        %v1950 = vadd.f32 %v1811, 1.0
        %v1951 = vadd.f32 %v1813, 1.0
        %v1952 = vadd.f32 %v1815, 1.0
        %v1953 = vadd.f32 %v1817, 1.0
        %v1954 = vadd.f32 %v1819, 1.0
        %v1955 = vadd.f32 %v1821, 1.0
        %v1956 = vadd.f32 %v1823, 1.0
        %v1957 = vadd.f32 %v1825, 1.0
        %v1958 = vadd.f32 %v1827, 1.0
        %v1959 = vadd.f32 %v1829, 1.0
        %v1960 = vadd.f32 %v1831, 1.0
        %v1961 = vadd.f32 %v1833, 1.0
        %v1962 = vrcp.pop %v1834
        %v1963 = vmul.f32 %v1834, %v1962
        %v1964 = vsub.f32 1.0, %v1963
        %v1965 = vmul.f32 %v1962, %v1964
        %v1966 = vadd.f32 %v1962, %v1965
        %vm1967 = vweird.f32 %v1834
        %vm1968 = vweird.f32 %v1962
        %vm1969 = vmor %vm1967, %vm1968
        %v1970 = vsel %vm1969, %v1962, %v1966
        %v1971 = vand.u32 2147483647, %v1834
        %vm1972 = vcmp.eq.f32.partialorder %v1971, 8.507059e+37
        %v1973 = vand.u32 %v1834, 2147483648
        %v1974 = vor.u32 1.1754944e-38, %v1973
        %v1975 = vsel %vm1972, %v1974, %v1970
        %v1976 = vmul.f32 1.0, %v1975
        %v1977 = vrcp.pop %v1835
        %v1978 = vmul.f32 %v1835, %v1977
        %v1979 = vsub.f32 1.0, %v1978
        %v1980 = vmul.f32 %v1977, %v1979
        %v1981 = vadd.f32 %v1977, %v1980
        %vm1982 = vweird.f32 %v1835
        %vm1983 = vweird.f32 %v1977
        %vm1984 = vmor %vm1982, %vm1983
        %v1985 = vsel %vm1984, %v1977, %v1981
        %v1986 = vand.u32 2147483647, %v1835
        %vm1987 = vcmp.eq.f32.partialorder %v1986, 8.507059e+37
        %v1988 = vand.u32 %v1835, 2147483648
        %v1989 = vor.u32 1.1754944e-38, %v1988
        %v1990 = vsel %vm1987, %v1989, %v1985
        %v1991 = vmul.f32 1.0, %v1990
        %v1992 = vrcp.pop %v1836
        %v1993 = vmul.f32 %v1836, %v1992
        %v1994 = vsub.f32 1.0, %v1993
        %v1995 = vmul.f32 %v1992, %v1994
        %v1996 = vadd.f32 %v1992, %v1995
        %vm1997 = vweird.f32 %v1836
        %vm1998 = vweird.f32 %v1992
        %vm1999 = vmor %vm1997, %vm1998
        %v2000 = vsel %vm1999, %v1992, %v1996
        %v2001 = vand.u32 2147483647, %v1836
        %vm2002 = vcmp.eq.f32.partialorder %v2001, 8.507059e+37
        %v2003 = vand.u32 %v1836, 2147483648
        %v2004 = vor.u32 1.1754944e-38, %v2003
        %v2005 = vsel %vm2002, %v2004, %v2000
        %v2006 = vmul.f32 1.0, %v2005
        %v2007 = vrcp.pop %v1837
        %v2008 = vmul.f32 %v1837, %v2007
        %v2009 = vsub.f32 1.0, %v2008
        %v2010 = vmul.f32 %v2007, %v2009
        %v2011 = vadd.f32 %v2007, %v2010
        %vm2012 = vweird.f32 %v1837
        %vm2013 = vweird.f32 %v2007
        %vm2014 = vmor %vm2012, %vm2013
        %v2015 = vsel %vm2014, %v2007, %v2011
        %v2016 = vand.u32 2147483647, %v1837
        %vm2017 = vcmp.eq.f32.partialorder %v2016, 8.507059e+37
        %v2018 = vand.u32 %v1837, 2147483648
        %v2019 = vor.u32 1.1754944e-38, %v2018
        %v2020 = vsel %vm2017, %v2019, %v2015
        %v2021 = vmul.f32 1.0, %v2020
        %v2022 = vrcp.pop %v1838
        %v2023 = vmul.f32 %v1838, %v2022
        %v2024 = vsub.f32 1.0, %v2023
        %v2025 = vmul.f32 %v2022, %v2024
        %v2026 = vadd.f32 %v2022, %v2025
        %vm2027 = vweird.f32 %v1838
        %vm2028 = vweird.f32 %v2022
        %vm2029 = vmor %vm2027, %vm2028
        %v2030 = vsel %vm2029, %v2022, %v2026
        %v2031 = vand.u32 2147483647, %v1838
        %vm2032 = vcmp.eq.f32.partialorder %v2031, 8.507059e+37
        %v2033 = vand.u32 %v1838, 2147483648
        %v2034 = vor.u32 1.1754944e-38, %v2033
        %v2035 = vsel %vm2032, %v2034, %v2030
        %v2036 = vmul.f32 1.0, %v2035
        %v2037 = vrcp.pop %v1839
        %v2038 = vmul.f32 %v1839, %v2037
        %v2039 = vsub.f32 1.0, %v2038
        %v2040 = vmul.f32 %v2037, %v2039
        %v2041 = vadd.f32 %v2037, %v2040
        %vm2042 = vweird.f32 %v1839
        %vm2043 = vweird.f32 %v2037
        %vm2044 = vmor %vm2042, %vm2043
        %v2045 = vsel %vm2044, %v2037, %v2041
        %v2046 = vand.u32 2147483647, %v1839
        %vm2047 = vcmp.eq.f32.partialorder %v2046, 8.507059e+37
        %v2048 = vand.u32 %v1839, 2147483648
        %v2049 = vor.u32 1.1754944e-38, %v2048
        %v2050 = vsel %vm2047, %v2049, %v2045
        %v2051 = vmul.f32 1.0, %v2050
        %v2052 = vrcp.pop %v1840
        %v2053 = vmul.f32 %v1840, %v2052
        %v2054 = vsub.f32 1.0, %v2053
        %v2055 = vmul.f32 %v2052, %v2054
        %v2056 = vadd.f32 %v2052, %v2055
        %vm2057 = vweird.f32 %v1840
        %vm2058 = vweird.f32 %v2052
        %vm2059 = vmor %vm2057, %vm2058
        %v2060 = vsel %vm2059, %v2052, %v2056
        %v2061 = vand.u32 2147483647, %v1840
        %vm2062 = vcmp.eq.f32.partialorder %v2061, 8.507059e+37
        %v2063 = vand.u32 %v1840, 2147483648
        %v2064 = vor.u32 1.1754944e-38, %v2063
        %v2065 = vsel %vm2062, %v2064, %v2060
        %v2066 = vmul.f32 1.0, %v2065
        %v2067 = vrcp.pop %v1841
        %v2068 = vmul.f32 %v1841, %v2067
        %v2069 = vsub.f32 1.0, %v2068
        %v2070 = vmul.f32 %v2067, %v2069
        %v2071 = vadd.f32 %v2067, %v2070
        %vm2072 = vweird.f32 %v1841
        %vm2073 = vweird.f32 %v2067
        %vm2074 = vmor %vm2072, %vm2073
        %v2075 = vsel %vm2074, %v2067, %v2071
        %v2076 = vand.u32 2147483647, %v1841
        %vm2077 = vcmp.eq.f32.partialorder %v2076, 8.507059e+37
        %v2078 = vand.u32 %v1841, 2147483648
        %v2079 = vor.u32 1.1754944e-38, %v2078
        %v2080 = vsel %vm2077, %v2079, %v2075
        %v2081 = vmul.f32 1.0, %v2080
        %v2082 = vrcp.pop %v1842
        %v2083 = vmul.f32 %v1842, %v2082
        %v2084 = vsub.f32 1.0, %v2083
        %v2085 = vmul.f32 %v2082, %v2084
        %v2086 = vadd.f32 %v2082, %v2085
        %vm2087 = vweird.f32 %v1842
        %vm2088 = vweird.f32 %v2082
        %vm2089 = vmor %vm2087, %vm2088
        %v2090 = vsel %vm2089, %v2082, %v2086
        %v2091 = vand.u32 2147483647, %v1842
        %vm2092 = vcmp.eq.f32.partialorder %v2091, 8.507059e+37
        %v2093 = vand.u32 %v1842, 2147483648
        %v2094 = vor.u32 1.1754944e-38, %v2093
        %v2095 = vsel %vm2092, %v2094, %v2090
        %v2096 = vmul.f32 1.0, %v2095
        %v2097 = vrcp.pop %v1843
        %v2098 = vmul.f32 %v1843, %v2097
        %v2099 = vsub.f32 1.0, %v2098
        %v2100 = vmul.f32 %v2097, %v2099
        %v2101 = vadd.f32 %v2097, %v2100
        %vm2102 = vweird.f32 %v1843
        %vm2103 = vweird.f32 %v2097
        %vm2104 = vmor %vm2102, %vm2103
        %v2105 = vsel %vm2104, %v2097, %v2101
        %v2106 = vand.u32 2147483647, %v1843
        %vm2107 = vcmp.eq.f32.partialorder %v2106, 8.507059e+37
        %v2108 = vand.u32 %v1843, 2147483648
        %v2109 = vor.u32 1.1754944e-38, %v2108
        %v2110 = vsel %vm2107, %v2109, %v2105
        %v2111 = vmul.f32 1.0, %v2110
        %v2112 = vrcp.pop %v1844
        %v2113 = vmul.f32 %v1844, %v2112
        %v2114 = vsub.f32 1.0, %v2113
        %v2115 = vmul.f32 %v2112, %v2114
        %v2116 = vadd.f32 %v2112, %v2115
        %vm2117 = vweird.f32 %v1844
        %vm2118 = vweird.f32 %v2112
        %vm2119 = vmor %vm2117, %vm2118
        %v2120 = vsel %vm2119, %v2112, %v2116
        %v2121 = vand.u32 2147483647, %v1844
        %vm2122 = vcmp.eq.f32.partialorder %v2121, 8.507059e+37
        %v2123 = vand.u32 %v1844, 2147483648
        %v2124 = vor.u32 1.1754944e-38, %v2123
        %v2125 = vsel %vm2122, %v2124, %v2120
        %v2126 = vmul.f32 1.0, %v2125
        %v2127 = vrcp.pop %v1845
        %v2128 = vmul.f32 %v1845, %v2127
        %v2129 = vsub.f32 1.0, %v2128
        %v2130 = vmul.f32 %v2127, %v2129
        %v2131 = vadd.f32 %v2127, %v2130
        %vm2132 = vweird.f32 %v1845
        %vm2133 = vweird.f32 %v2127
        %vm2134 = vmor %vm2132, %vm2133
        %v2135 = vsel %vm2134, %v2127, %v2131
        %v2136 = vand.u32 2147483647, %v1845
        %vm2137 = vcmp.eq.f32.partialorder %v2136, 8.507059e+37
        %v2138 = vand.u32 %v1845, 2147483648
        %v2139 = vor.u32 1.1754944e-38, %v2138
        %v2140 = vsel %vm2137, %v2139, %v2135
        %v2141 = vmul.f32 1.0, %v2140
        %v2142 = vrcp.pop %v1846
        %v2143 = vmul.f32 %v1846, %v2142
        %v2144 = vsub.f32 1.0, %v2143
        %v2145 = vmul.f32 %v2142, %v2144
        %v2146 = vadd.f32 %v2142, %v2145
        %vm2147 = vweird.f32 %v1846
        %vm2148 = vweird.f32 %v2142
        %vm2149 = vmor %vm2147, %vm2148
        %v2150 = vsel %vm2149, %v2142, %v2146
        %v2151 = vand.u32 2147483647, %v1846
        %vm2152 = vcmp.eq.f32.partialorder %v2151, 8.507059e+37
        %v2153 = vand.u32 %v1846, 2147483648
        %v2154 = vor.u32 1.1754944e-38, %v2153
        %v2155 = vsel %vm2152, %v2154, %v2150
        %v2156 = vmul.f32 1.0, %v2155
        %v2157 = vrcp.pop %v1847
        %v2158 = vmul.f32 %v1847, %v2157
        %v2159 = vsub.f32 1.0, %v2158
        %v2160 = vmul.f32 %v2157, %v2159
        %v2161 = vadd.f32 %v2157, %v2160
        %vm2162 = vweird.f32 %v1847
        %vm2163 = vweird.f32 %v2157
        %vm2164 = vmor %vm2162, %vm2163
        %v2165 = vsel %vm2164, %v2157, %v2161
        %v2166 = vand.u32 2147483647, %v1847
        %vm2167 = vcmp.eq.f32.partialorder %v2166, 8.507059e+37
        %v2168 = vand.u32 %v1847, 2147483648
        %v2169 = vor.u32 1.1754944e-38, %v2168
        %v2170 = vsel %vm2167, %v2169, %v2165
        %v2171 = vmul.f32 1.0, %v2170
        %v2172 = vrcp.pop %v1848
        %v2173 = vmul.f32 %v1848, %v2172
        %v2174 = vsub.f32 1.0, %v2173
        %v2175 = vmul.f32 %v2172, %v2174
        %v2176 = vadd.f32 %v2172, %v2175
        %vm2177 = vweird.f32 %v1848
        %vm2178 = vweird.f32 %v2172
        %vm2179 = vmor %vm2177, %vm2178
        %v2180 = vsel %vm2179, %v2172, %v2176
        %v2181 = vand.u32 2147483647, %v1848
        %vm2182 = vcmp.eq.f32.partialorder %v2181, 8.507059e+37
        %v2183 = vand.u32 %v1848, 2147483648
        %v2184 = vor.u32 1.1754944e-38, %v2183
        %v2185 = vsel %vm2182, %v2184, %v2180
        %v2186 = vmul.f32 1.0, %v2185
        %v2187 = vrcp.pop %v1849
        %v2188 = vmul.f32 %v1849, %v2187
        %v2189 = vsub.f32 1.0, %v2188
        %v2190 = vmul.f32 %v2187, %v2189
        %v2191 = vadd.f32 %v2187, %v2190
        %vm2192 = vweird.f32 %v1849
        %vm2193 = vweird.f32 %v2187
        %vm2194 = vmor %vm2192, %vm2193
        %v2195 = vsel %vm2194, %v2187, %v2191
        %v2196 = vand.u32 2147483647, %v1849
        %vm2197 = vcmp.eq.f32.partialorder %v2196, 8.507059e+37
        %v2198 = vand.u32 %v1849, 2147483648
        %v2199 = vor.u32 1.1754944e-38, %v2198
        %v2200 = vsel %vm2197, %v2199, %v2195
        %v2201 = vmul.f32 1.0, %v2200
        %v2202 = vrcp.pop %v1850
        %v2203 = vmul.f32 %v1850, %v2202
        %v2204 = vsub.f32 1.0, %v2203
        %v2205 = vmul.f32 %v2202, %v2204
        %v2206 = vadd.f32 %v2202, %v2205
        %vm2207 = vweird.f32 %v1850
        %vm2208 = vweird.f32 %v2202
        %vm2209 = vmor %vm2207, %vm2208
        %v2210 = vsel %vm2209, %v2202, %v2206
        %v2211 = vand.u32 2147483647, %v1850
        %vm2212 = vcmp.eq.f32.partialorder %v2211, 8.507059e+37
        %v2213 = vand.u32 %v1850, 2147483648
        %v2214 = vor.u32 1.1754944e-38, %v2213
        %v2215 = vsel %vm2212, %v2214, %v2210
        %v2216 = vmul.f32 1.0, %v2215
        %v2217 = vrcp.pop %v1851
        %v2218 = vmul.f32 %v1851, %v2217
        %v2219 = vsub.f32 1.0, %v2218
        %v2220 = vmul.f32 %v2217, %v2219
        %v2221 = vadd.f32 %v2217, %v2220
        %vm2222 = vweird.f32 %v1851
        %vm2223 = vweird.f32 %v2217
        %vm2224 = vmor %vm2222, %vm2223
        %v2225 = vsel %vm2224, %v2217, %v2221
        %v2226 = vand.u32 2147483647, %v1851
        %vm2227 = vcmp.eq.f32.partialorder %v2226, 8.507059e+37
        %v2228 = vand.u32 %v1851, 2147483648
        %v2229 = vor.u32 1.1754944e-38, %v2228
        %v2230 = vsel %vm2227, %v2229, %v2225
        %v2231 = vmul.f32 1.0, %v2230
        %v2232 = vrcp.pop %v1852
        %v2233 = vmul.f32 %v1852, %v2232
        %v2234 = vsub.f32 1.0, %v2233
        %v2235 = vmul.f32 %v2232, %v2234
        %v2236 = vadd.f32 %v2232, %v2235
        %vm2237 = vweird.f32 %v1852
        %vm2238 = vweird.f32 %v2232
        %vm2239 = vmor %vm2237, %vm2238
        %v2240 = vsel %vm2239, %v2232, %v2236
        %v2241 = vand.u32 2147483647, %v1852
        %vm2242 = vcmp.eq.f32.partialorder %v2241, 8.507059e+37
        %v2243 = vand.u32 %v1852, 2147483648
        %v2244 = vor.u32 1.1754944e-38, %v2243
        %v2245 = vsel %vm2242, %v2244, %v2240
        %v2246 = vmul.f32 1.0, %v2245
        %v2247 = vrcp.pop %v1853
        %v2248 = vmul.f32 %v1853, %v2247
        %v2249 = vsub.f32 1.0, %v2248
        %v2250 = vmul.f32 %v2247, %v2249
        %v2251 = vadd.f32 %v2247, %v2250
        %vm2252 = vweird.f32 %v1853
        %vm2253 = vweird.f32 %v2247
        %vm2254 = vmor %vm2252, %vm2253
        %v2255 = vsel %vm2254, %v2247, %v2251
        %v2256 = vand.u32 2147483647, %v1853
        %vm2257 = vcmp.eq.f32.partialorder %v2256, 8.507059e+37
        %v2258 = vand.u32 %v1853, 2147483648
        %v2259 = vor.u32 1.1754944e-38, %v2258
        %v2260 = vsel %vm2257, %v2259, %v2255
        %v2261 = vmul.f32 1.0, %v2260
        %v2262 = vrcp.pop %v1854
        %v2263 = vmul.f32 %v1854, %v2262
        %v2264 = vsub.f32 1.0, %v2263
        %v2265 = vmul.f32 %v2262, %v2264
        %v2266 = vadd.f32 %v2262, %v2265
        %vm2267 = vweird.f32 %v1854
        %vm2268 = vweird.f32 %v2262
        %vm2269 = vmor %vm2267, %vm2268
        %v2270 = vsel %vm2269, %v2262, %v2266
        %v2271 = vand.u32 2147483647, %v1854
        %vm2272 = vcmp.eq.f32.partialorder %v2271, 8.507059e+37
        %v2273 = vand.u32 %v1854, 2147483648
        %v2274 = vor.u32 1.1754944e-38, %v2273
        %v2275 = vsel %vm2272, %v2274, %v2270
        %v2276 = vmul.f32 1.0, %v2275
        %v2277 = vrcp.pop %v1855
        %v2278 = vmul.f32 %v1855, %v2277
        %v2279 = vsub.f32 1.0, %v2278
        %v2280 = vmul.f32 %v2277, %v2279
        %v2281 = vadd.f32 %v2277, %v2280
        %vm2282 = vweird.f32 %v1855
        %vm2283 = vweird.f32 %v2277
        %vm2284 = vmor %vm2282, %vm2283
        %v2285 = vsel %vm2284, %v2277, %v2281
        %v2286 = vand.u32 2147483647, %v1855
        %vm2287 = vcmp.eq.f32.partialorder %v2286, 8.507059e+37
        %v2288 = vand.u32 %v1855, 2147483648
        %v2289 = vor.u32 1.1754944e-38, %v2288
        %v2290 = vsel %vm2287, %v2289, %v2285
        %v2291 = vmul.f32 1.0, %v2290
        %v2292 = vrcp.pop %v1856
        %v2293 = vmul.f32 %v1856, %v2292
        %v2294 = vsub.f32 1.0, %v2293
        %v2295 = vmul.f32 %v2292, %v2294
        %v2296 = vadd.f32 %v2292, %v2295
        %vm2297 = vweird.f32 %v1856
        %vm2298 = vweird.f32 %v2292
        %vm2299 = vmor %vm2297, %vm2298
        %v2300 = vsel %vm2299, %v2292, %v2296
        %v2301 = vand.u32 2147483647, %v1856
        %vm2302 = vcmp.eq.f32.partialorder %v2301, 8.507059e+37
        %v2303 = vand.u32 %v1856, 2147483648
        %v2304 = vor.u32 1.1754944e-38, %v2303
        %v2305 = vsel %vm2302, %v2304, %v2300
        %v2306 = vmul.f32 1.0, %v2305
        %v2307 = vrcp.pop %v1857
        %v2308 = vmul.f32 %v1857, %v2307
        %v2309 = vsub.f32 1.0, %v2308
        %v2310 = vmul.f32 %v2307, %v2309
        %v2311 = vadd.f32 %v2307, %v2310
        %vm2312 = vweird.f32 %v1857
        %vm2313 = vweird.f32 %v2307
        %vm2314 = vmor %vm2312, %vm2313
        %v2315 = vsel %vm2314, %v2307, %v2311
        %v2316 = vand.u32 2147483647, %v1857
        %vm2317 = vcmp.eq.f32.partialorder %v2316, 8.507059e+37
        %v2318 = vand.u32 %v1857, 2147483648
        %v2319 = vor.u32 1.1754944e-38, %v2318
        %v2320 = vsel %vm2317, %v2319, %v2315
        %v2321 = vmul.f32 1.0, %v2320
        %v2322 = vrcp.pop %v1858
        %v2323 = vmul.f32 %v1858, %v2322
        %v2324 = vsub.f32 1.0, %v2323
        %v2325 = vmul.f32 %v2322, %v2324
        %v2326 = vadd.f32 %v2322, %v2325
        %vm2327 = vweird.f32 %v1858
        %vm2328 = vweird.f32 %v2322
        %vm2329 = vmor %vm2327, %vm2328
        %v2330 = vsel %vm2329, %v2322, %v2326
        %v2331 = vand.u32 2147483647, %v1858
        %vm2332 = vcmp.eq.f32.partialorder %v2331, 8.507059e+37
        %v2333 = vand.u32 %v1858, 2147483648
        %v2334 = vor.u32 1.1754944e-38, %v2333
        %v2335 = vsel %vm2332, %v2334, %v2330
        %v2336 = vmul.f32 1.0, %v2335
        %v2337 = vrcp.pop %v1859
        %v2338 = vmul.f32 %v1859, %v2337
        %v2339 = vsub.f32 1.0, %v2338
        %v2340 = vmul.f32 %v2337, %v2339
        %v2341 = vadd.f32 %v2337, %v2340
        %vm2342 = vweird.f32 %v1859
        %vm2343 = vweird.f32 %v2337
        %vm2344 = vmor %vm2342, %vm2343
        %v2345 = vsel %vm2344, %v2337, %v2341
        %v2346 = vand.u32 2147483647, %v1859
        %vm2347 = vcmp.eq.f32.partialorder %v2346, 8.507059e+37
        %v2348 = vand.u32 %v1859, 2147483648
        %v2349 = vor.u32 1.1754944e-38, %v2348
        %v2350 = vsel %vm2347, %v2349, %v2345
        %v2351 = vmul.f32 1.0, %v2350
        %v2352 = vrcp.pop %v1860
        %v2353 = vmul.f32 %v1860, %v2352
        %v2354 = vsub.f32 1.0, %v2353
        %v2355 = vmul.f32 %v2352, %v2354
        %v2356 = vadd.f32 %v2352, %v2355
        %vm2357 = vweird.f32 %v1860
        %vm2358 = vweird.f32 %v2352
        %vm2359 = vmor %vm2357, %vm2358
        %v2360 = vsel %vm2359, %v2352, %v2356
        %v2361 = vand.u32 2147483647, %v1860
        %vm2362 = vcmp.eq.f32.partialorder %v2361, 8.507059e+37
        %v2363 = vand.u32 %v1860, 2147483648
        %v2364 = vor.u32 1.1754944e-38, %v2363
        %v2365 = vsel %vm2362, %v2364, %v2360
        %v2366 = vmul.f32 1.0, %v2365
        %v2367 = vrcp.pop %v1861
        %v2368 = vmul.f32 %v1861, %v2367
        %v2369 = vsub.f32 1.0, %v2368
        %v2370 = vmul.f32 %v2367, %v2369
        %v2371 = vadd.f32 %v2367, %v2370
        %vm2372 = vweird.f32 %v1861
        %vm2373 = vweird.f32 %v2367
        %vm2374 = vmor %vm2372, %vm2373
        %v2375 = vsel %vm2374, %v2367, %v2371
        %v2376 = vand.u32 2147483647, %v1861
        %vm2377 = vcmp.eq.f32.partialorder %v2376, 8.507059e+37
        %v2378 = vand.u32 %v1861, 2147483648
        %v2379 = vor.u32 1.1754944e-38, %v2378
        %v2380 = vsel %vm2377, %v2379, %v2375
        %v2381 = vmul.f32 1.0, %v2380
        %v2382 = vrcp.pop %v1862
        %v2383 = vmul.f32 %v1862, %v2382
        %v2384 = vsub.f32 1.0, %v2383
        %v2385 = vmul.f32 %v2382, %v2384
        %v2386 = vadd.f32 %v2382, %v2385
        %vm2387 = vweird.f32 %v1862
        %vm2388 = vweird.f32 %v2382
        %vm2389 = vmor %vm2387, %vm2388
        %v2390 = vsel %vm2389, %v2382, %v2386
        %v2391 = vand.u32 2147483647, %v1862
        %vm2392 = vcmp.eq.f32.partialorder %v2391, 8.507059e+37
        %v2393 = vand.u32 %v1862, 2147483648
        %v2394 = vor.u32 1.1754944e-38, %v2393
        %v2395 = vsel %vm2392, %v2394, %v2390
        %v2396 = vmul.f32 1.0, %v2395
        %v2397 = vrcp.pop %v1863
        %v2398 = vmul.f32 %v1863, %v2397
        %v2399 = vsub.f32 1.0, %v2398
        %v2400 = vmul.f32 %v2397, %v2399
        %v2401 = vadd.f32 %v2397, %v2400
        %vm2402 = vweird.f32 %v1863
        %vm2403 = vweird.f32 %v2397
        %vm2404 = vmor %vm2402, %vm2403
        %v2405 = vsel %vm2404, %v2397, %v2401
        %v2406 = vand.u32 2147483647, %v1863
        %vm2407 = vcmp.eq.f32.partialorder %v2406, 8.507059e+37
        %v2408 = vand.u32 %v1863, 2147483648
        %v2409 = vor.u32 1.1754944e-38, %v2408
        %v2410 = vsel %vm2407, %v2409, %v2405
        %v2411 = vmul.f32 1.0, %v2410
        %v2412 = vrcp.pop %v1864
        %v2413 = vmul.f32 %v1864, %v2412
        %v2414 = vsub.f32 1.0, %v2413
        %v2415 = vmul.f32 %v2412, %v2414
        %v2416 = vadd.f32 %v2412, %v2415
        %vm2417 = vweird.f32 %v1864
        %vm2418 = vweird.f32 %v2412
        %vm2419 = vmor %vm2417, %vm2418
        %v2420 = vsel %vm2419, %v2412, %v2416
        %v2421 = vand.u32 2147483647, %v1864
        %vm2422 = vcmp.eq.f32.partialorder %v2421, 8.507059e+37
        %v2423 = vand.u32 %v1864, 2147483648
        %v2424 = vor.u32 1.1754944e-38, %v2423
        %v2425 = vsel %vm2422, %v2424, %v2420
        %v2426 = vmul.f32 1.0, %v2425
        %v2427 = vrcp.pop %v1865
        %v2428 = vmul.f32 %v1865, %v2427
        %v2429 = vsub.f32 1.0, %v2428
        %v2430 = vmul.f32 %v2427, %v2429
        %v2431 = vadd.f32 %v2427, %v2430
        %vm2432 = vweird.f32 %v1865
        %vm2433 = vweird.f32 %v2427
        %vm2434 = vmor %vm2432, %vm2433
        %v2435 = vsel %vm2434, %v2427, %v2431
        %v2436 = vand.u32 2147483647, %v1865
        %vm2437 = vcmp.eq.f32.partialorder %v2436, 8.507059e+37
        %v2438 = vand.u32 %v1865, 2147483648
        %v2439 = vor.u32 1.1754944e-38, %v2438
        %v2440 = vsel %vm2437, %v2439, %v2435
        %v2441 = vmul.f32 1.0, %v2440
        %v2442 = vrcp.pop %v1866
        %v2443 = vmul.f32 %v1866, %v2442
        %v2444 = vsub.f32 1.0, %v2443
        %v2445 = vmul.f32 %v2442, %v2444
        %v2446 = vadd.f32 %v2442, %v2445
        %vm2447 = vweird.f32 %v1866
        %vm2448 = vweird.f32 %v2442
        %vm2449 = vmor %vm2447, %vm2448
        %v2450 = vsel %vm2449, %v2442, %v2446
        %v2451 = vand.u32 2147483647, %v1866
        %vm2452 = vcmp.eq.f32.partialorder %v2451, 8.507059e+37
        %v2453 = vand.u32 %v1866, 2147483648
        %v2454 = vor.u32 1.1754944e-38, %v2453
        %v2455 = vsel %vm2452, %v2454, %v2450
        %v2456 = vmul.f32 1.0, %v2455
        %v2457 = vrcp.pop %v1867
        %v2458 = vmul.f32 %v1867, %v2457
        %v2459 = vsub.f32 1.0, %v2458
        %v2460 = vmul.f32 %v2457, %v2459
        %v2461 = vadd.f32 %v2457, %v2460
        %vm2462 = vweird.f32 %v1867
        %vm2463 = vweird.f32 %v2457
        %vm2464 = vmor %vm2462, %vm2463
        %v2465 = vsel %vm2464, %v2457, %v2461
        %v2466 = vand.u32 2147483647, %v1867
        %vm2467 = vcmp.eq.f32.partialorder %v2466, 8.507059e+37
        %v2468 = vand.u32 %v1867, 2147483648
        %v2469 = vor.u32 1.1754944e-38, %v2468
        %v2470 = vsel %vm2467, %v2469, %v2465
        %v2471 = vmul.f32 1.0, %v2470
        %v2472 = vrcp.pop %v1868
        %v2473 = vmul.f32 %v1868, %v2472
        %v2474 = vsub.f32 1.0, %v2473
        %v2475 = vmul.f32 %v2472, %v2474
        %v2476 = vadd.f32 %v2472, %v2475
        %vm2477 = vweird.f32 %v1868
        %vm2478 = vweird.f32 %v2472
        %vm2479 = vmor %vm2477, %vm2478
        %v2480 = vsel %vm2479, %v2472, %v2476
        %v2481 = vand.u32 2147483647, %v1868
        %vm2482 = vcmp.eq.f32.partialorder %v2481, 8.507059e+37
        %v2483 = vand.u32 %v1868, 2147483648
        %v2484 = vor.u32 1.1754944e-38, %v2483
        %v2485 = vsel %vm2482, %v2484, %v2480
        %v2486 = vmul.f32 1.0, %v2485
        %v2487 = vrcp.pop %v1869
        %v2488 = vmul.f32 %v1869, %v2487
        %v2489 = vsub.f32 1.0, %v2488
        %v2490 = vmul.f32 %v2487, %v2489
        %v2491 = vadd.f32 %v2487, %v2490
        %vm2492 = vweird.f32 %v1869
        %vm2493 = vweird.f32 %v2487
        %vm2494 = vmor %vm2492, %vm2493
        %v2495 = vsel %vm2494, %v2487, %v2491
        %v2496 = vand.u32 2147483647, %v1869
        %vm2497 = vcmp.eq.f32.partialorder %v2496, 8.507059e+37
        %v2498 = vand.u32 %v1869, 2147483648
        %v2499 = vor.u32 1.1754944e-38, %v2498
        %v2500 = vsel %vm2497, %v2499, %v2495
        %v2501 = vmul.f32 1.0, %v2500
        %v2502 = vrcp.pop %v1870
        %v2503 = vmul.f32 %v1870, %v2502
        %v2504 = vsub.f32 1.0, %v2503
        %v2505 = vmul.f32 %v2502, %v2504
        %v2506 = vadd.f32 %v2502, %v2505
        %vm2507 = vweird.f32 %v1870
        %vm2508 = vweird.f32 %v2502
        %vm2509 = vmor %vm2507, %vm2508
        %v2510 = vsel %vm2509, %v2502, %v2506
        %v2511 = vand.u32 2147483647, %v1870
        %vm2512 = vcmp.eq.f32.partialorder %v2511, 8.507059e+37
        %v2513 = vand.u32 %v1870, 2147483648
        %v2514 = vor.u32 1.1754944e-38, %v2513
        %v2515 = vsel %vm2512, %v2514, %v2510
        %v2516 = vmul.f32 1.0, %v2515
        %v2517 = vrcp.pop %v1871
        %v2518 = vmul.f32 %v1871, %v2517
        %v2519 = vsub.f32 1.0, %v2518
        %v2520 = vmul.f32 %v2517, %v2519
        %v2521 = vadd.f32 %v2517, %v2520
        %vm2522 = vweird.f32 %v1871
        %vm2523 = vweird.f32 %v2517
        %vm2524 = vmor %vm2522, %vm2523
        %v2525 = vsel %vm2524, %v2517, %v2521
        %v2526 = vand.u32 2147483647, %v1871
        %vm2527 = vcmp.eq.f32.partialorder %v2526, 8.507059e+37
        %v2528 = vand.u32 %v1871, 2147483648
        %v2529 = vor.u32 1.1754944e-38, %v2528
        %v2530 = vsel %vm2527, %v2529, %v2525
        %v2531 = vmul.f32 1.0, %v2530
        %v2532 = vrcp.pop %v1872
        %v2533 = vmul.f32 %v1872, %v2532
        %v2534 = vsub.f32 1.0, %v2533
        %v2535 = vmul.f32 %v2532, %v2534
        %v2536 = vadd.f32 %v2532, %v2535
        %vm2537 = vweird.f32 %v1872
        %vm2538 = vweird.f32 %v2532
        %vm2539 = vmor %vm2537, %vm2538
        %v2540 = vsel %vm2539, %v2532, %v2536
        %v2541 = vand.u32 2147483647, %v1872
        %vm2542 = vcmp.eq.f32.partialorder %v2541, 8.507059e+37
        %v2543 = vand.u32 %v1872, 2147483648
        %v2544 = vor.u32 1.1754944e-38, %v2543
        %v2545 = vsel %vm2542, %v2544, %v2540
        %v2546 = vmul.f32 1.0, %v2545
        %v2547 = vrcp.pop %v1873
        %v2548 = vmul.f32 %v1873, %v2547
        %v2549 = vsub.f32 1.0, %v2548
        %v2550 = vmul.f32 %v2547, %v2549
        %v2551 = vadd.f32 %v2547, %v2550
        %vm2552 = vweird.f32 %v1873
        %vm2553 = vweird.f32 %v2547
        %vm2554 = vmor %vm2552, %vm2553
        %v2555 = vsel %vm2554, %v2547, %v2551
        %v2556 = vand.u32 2147483647, %v1873
        %vm2557 = vcmp.eq.f32.partialorder %v2556, 8.507059e+37
        %v2558 = vand.u32 %v1873, 2147483648
        %v2559 = vor.u32 1.1754944e-38, %v2558
        %v2560 = vsel %vm2557, %v2559, %v2555
        %v2561 = vmul.f32 1.0, %v2560
        %v2562 = vrcp.pop %v1874
        %v2563 = vmul.f32 %v1874, %v2562
        %v2564 = vsub.f32 1.0, %v2563
        %v2565 = vmul.f32 %v2562, %v2564
        %v2566 = vadd.f32 %v2562, %v2565
        %vm2567 = vweird.f32 %v1874
        %vm2568 = vweird.f32 %v2562
        %vm2569 = vmor %vm2567, %vm2568
        %v2570 = vsel %vm2569, %v2562, %v2566
        %v2571 = vand.u32 2147483647, %v1874
        %vm2572 = vcmp.eq.f32.partialorder %v2571, 8.507059e+37
        %v2573 = vand.u32 %v1874, 2147483648
        %v2574 = vor.u32 1.1754944e-38, %v2573
        %v2575 = vsel %vm2572, %v2574, %v2570
        %v2576 = vmul.f32 1.0, %v2575
        %v2577 = vrcp.pop %v1875
        %v2578 = vmul.f32 %v1875, %v2577
        %v2579 = vsub.f32 1.0, %v2578
        %v2580 = vmul.f32 %v2577, %v2579
        %v2581 = vadd.f32 %v2577, %v2580
        %vm2582 = vweird.f32 %v1875
        %vm2583 = vweird.f32 %v2577
        %vm2584 = vmor %vm2582, %vm2583
        %v2585 = vsel %vm2584, %v2577, %v2581
        %v2586 = vand.u32 2147483647, %v1875
        %vm2587 = vcmp.eq.f32.partialorder %v2586, 8.507059e+37
        %v2588 = vand.u32 %v1875, 2147483648
        %v2589 = vor.u32 1.1754944e-38, %v2588
        %v2590 = vsel %vm2587, %v2589, %v2585
        %v2591 = vmul.f32 1.0, %v2590
        %v2592 = vrcp.pop %v1876
        %v2593 = vmul.f32 %v1876, %v2592
        %v2594 = vsub.f32 1.0, %v2593
        %v2595 = vmul.f32 %v2592, %v2594
        %v2596 = vadd.f32 %v2592, %v2595
        %vm2597 = vweird.f32 %v1876
        %vm2598 = vweird.f32 %v2592
        %vm2599 = vmor %vm2597, %vm2598
        %v2600 = vsel %vm2599, %v2592, %v2596
        %v2601 = vand.u32 2147483647, %v1876
        %vm2602 = vcmp.eq.f32.partialorder %v2601, 8.507059e+37
        %v2603 = vand.u32 %v1876, 2147483648
        %v2604 = vor.u32 1.1754944e-38, %v2603
        %v2605 = vsel %vm2602, %v2604, %v2600
        %v2606 = vmul.f32 1.0, %v2605
        %v2607 = vrcp.pop %v1877
        %v2608 = vmul.f32 %v1877, %v2607
        %v2609 = vsub.f32 1.0, %v2608
        %v2610 = vmul.f32 %v2607, %v2609
        %v2611 = vadd.f32 %v2607, %v2610
        %vm2612 = vweird.f32 %v1877
        %vm2613 = vweird.f32 %v2607
        %vm2614 = vmor %vm2612, %vm2613
        %v2615 = vsel %vm2614, %v2607, %v2611
        %v2616 = vand.u32 2147483647, %v1877
        %vm2617 = vcmp.eq.f32.partialorder %v2616, 8.507059e+37
        %v2618 = vand.u32 %v1877, 2147483648
        %v2619 = vor.u32 1.1754944e-38, %v2618
        %v2620 = vsel %vm2617, %v2619, %v2615
        %v2621 = vmul.f32 1.0, %v2620
        %v2622 = vrcp.pop %v1878
        %v2623 = vmul.f32 %v1878, %v2622
        %v2624 = vsub.f32 1.0, %v2623
        %v2625 = vmul.f32 %v2622, %v2624
        %v2626 = vadd.f32 %v2622, %v2625
        %vm2627 = vweird.f32 %v1878
        %vm2628 = vweird.f32 %v2622
        %vm2629 = vmor %vm2627, %vm2628
        %v2630 = vsel %vm2629, %v2622, %v2626
        %v2631 = vand.u32 2147483647, %v1878
        %vm2632 = vcmp.eq.f32.partialorder %v2631, 8.507059e+37
        %v2633 = vand.u32 %v1878, 2147483648
        %v2634 = vor.u32 1.1754944e-38, %v2633
        %v2635 = vsel %vm2632, %v2634, %v2630
        %v2636 = vmul.f32 1.0, %v2635
        %v2637 = vrcp.pop %v1879
        %v2638 = vmul.f32 %v1879, %v2637
        %v2639 = vsub.f32 1.0, %v2638
        %v2640 = vmul.f32 %v2637, %v2639
        %v2641 = vadd.f32 %v2637, %v2640
        %vm2642 = vweird.f32 %v1879
        %vm2643 = vweird.f32 %v2637
        %vm2644 = vmor %vm2642, %vm2643
        %v2645 = vsel %vm2644, %v2637, %v2641
        %v2646 = vand.u32 2147483647, %v1879
        %vm2647 = vcmp.eq.f32.partialorder %v2646, 8.507059e+37
        %v2648 = vand.u32 %v1879, 2147483648
        %v2649 = vor.u32 1.1754944e-38, %v2648
        %v2650 = vsel %vm2647, %v2649, %v2645
        %v2651 = vmul.f32 1.0, %v2650
        %v2652 = vrcp.pop %v1880
        %v2653 = vmul.f32 %v1880, %v2652
        %v2654 = vsub.f32 1.0, %v2653
        %v2655 = vmul.f32 %v2652, %v2654
        %v2656 = vadd.f32 %v2652, %v2655
        %vm2657 = vweird.f32 %v1880
        %vm2658 = vweird.f32 %v2652
        %vm2659 = vmor %vm2657, %vm2658
        %v2660 = vsel %vm2659, %v2652, %v2656
        %v2661 = vand.u32 2147483647, %v1880
        %vm2662 = vcmp.eq.f32.partialorder %v2661, 8.507059e+37
        %v2663 = vand.u32 %v1880, 2147483648
        %v2664 = vor.u32 1.1754944e-38, %v2663
        %v2665 = vsel %vm2662, %v2664, %v2660
        %v2666 = vmul.f32 1.0, %v2665
        %v2667 = vrcp.pop %v1881
        %v2668 = vmul.f32 %v1881, %v2667
        %v2669 = vsub.f32 1.0, %v2668
        %v2670 = vmul.f32 %v2667, %v2669
        %v2671 = vadd.f32 %v2667, %v2670
        %vm2672 = vweird.f32 %v1881
        %vm2673 = vweird.f32 %v2667
        %vm2674 = vmor %vm2672, %vm2673
        %v2675 = vsel %vm2674, %v2667, %v2671
        %v2676 = vand.u32 2147483647, %v1881
        %vm2677 = vcmp.eq.f32.partialorder %v2676, 8.507059e+37
        %v2678 = vand.u32 %v1881, 2147483648
        %v2679 = vor.u32 1.1754944e-38, %v2678
        %v2680 = vsel %vm2677, %v2679, %v2675
        %v2681 = vmul.f32 1.0, %v2680
        %v2682 = vrcp.pop %v1882
        %v2683 = vmul.f32 %v1882, %v2682
        %v2684 = vsub.f32 1.0, %v2683
        %v2685 = vmul.f32 %v2682, %v2684
        %v2686 = vadd.f32 %v2682, %v2685
        %vm2687 = vweird.f32 %v1882
        %vm2688 = vweird.f32 %v2682
        %vm2689 = vmor %vm2687, %vm2688
        %v2690 = vsel %vm2689, %v2682, %v2686
        %v2691 = vand.u32 2147483647, %v1882
        %vm2692 = vcmp.eq.f32.partialorder %v2691, 8.507059e+37
        %v2693 = vand.u32 %v1882, 2147483648
        %v2694 = vor.u32 1.1754944e-38, %v2693
        %v2695 = vsel %vm2692, %v2694, %v2690
        %v2696 = vmul.f32 1.0, %v2695
        %v2697 = vrcp.pop %v1883
        %v2698 = vmul.f32 %v1883, %v2697
        %v2699 = vsub.f32 1.0, %v2698
        %v2700 = vmul.f32 %v2697, %v2699
        %v2701 = vadd.f32 %v2697, %v2700
        %vm2702 = vweird.f32 %v1883
        %vm2703 = vweird.f32 %v2697
        %vm2704 = vmor %vm2702, %vm2703
        %v2705 = vsel %vm2704, %v2697, %v2701
        %v2706 = vand.u32 2147483647, %v1883
        %vm2707 = vcmp.eq.f32.partialorder %v2706, 8.507059e+37
        %v2708 = vand.u32 %v1883, 2147483648
        %v2709 = vor.u32 1.1754944e-38, %v2708
        %v2710 = vsel %vm2707, %v2709, %v2705
        %v2711 = vmul.f32 1.0, %v2710
        %v2712 = vrcp.pop %v1884
        %v2713 = vmul.f32 %v1884, %v2712
        %v2714 = vsub.f32 1.0, %v2713
        %v2715 = vmul.f32 %v2712, %v2714
        %v2716 = vadd.f32 %v2712, %v2715
        %vm2717 = vweird.f32 %v1884
        %vm2718 = vweird.f32 %v2712
        %vm2719 = vmor %vm2717, %vm2718
        %v2720 = vsel %vm2719, %v2712, %v2716
        %v2721 = vand.u32 2147483647, %v1884
        %vm2722 = vcmp.eq.f32.partialorder %v2721, 8.507059e+37
        %v2723 = vand.u32 %v1884, 2147483648
        %v2724 = vor.u32 1.1754944e-38, %v2723
        %v2725 = vsel %vm2722, %v2724, %v2720
        %v2726 = vmul.f32 1.0, %v2725
        %v2727 = vrcp.pop %v1885
        %v2728 = vmul.f32 %v1885, %v2727
        %v2729 = vsub.f32 1.0, %v2728
        %v2730 = vmul.f32 %v2727, %v2729
        %v2731 = vadd.f32 %v2727, %v2730
        %vm2732 = vweird.f32 %v1885
        %vm2733 = vweird.f32 %v2727
        %vm2734 = vmor %vm2732, %vm2733
        %v2735 = vsel %vm2734, %v2727, %v2731
        %v2736 = vand.u32 2147483647, %v1885
        %vm2737 = vcmp.eq.f32.partialorder %v2736, 8.507059e+37
        %v2738 = vand.u32 %v1885, 2147483648
        %v2739 = vor.u32 1.1754944e-38, %v2738
        %v2740 = vsel %vm2737, %v2739, %v2735
        %v2741 = vmul.f32 1.0, %v2740
        %v2742 = vrcp.pop %v1886
        %v2743 = vmul.f32 %v1886, %v2742
        %v2744 = vsub.f32 1.0, %v2743
        %v2745 = vmul.f32 %v2742, %v2744
        %v2746 = vadd.f32 %v2742, %v2745
        %vm2747 = vweird.f32 %v1886
        %vm2748 = vweird.f32 %v2742
        %vm2749 = vmor %vm2747, %vm2748
        %v2750 = vsel %vm2749, %v2742, %v2746
        %v2751 = vand.u32 2147483647, %v1886
        %vm2752 = vcmp.eq.f32.partialorder %v2751, 8.507059e+37
        %v2753 = vand.u32 %v1886, 2147483648
        %v2754 = vor.u32 1.1754944e-38, %v2753
        %v2755 = vsel %vm2752, %v2754, %v2750
        %v2756 = vmul.f32 1.0, %v2755
        %v2757 = vrcp.pop %v1887
        %v2758 = vmul.f32 %v1887, %v2757
        %v2759 = vsub.f32 1.0, %v2758
        %v2760 = vmul.f32 %v2757, %v2759
        %v2761 = vadd.f32 %v2757, %v2760
        %vm2762 = vweird.f32 %v1887
        %vm2763 = vweird.f32 %v2757
        %vm2764 = vmor %vm2762, %vm2763
        %v2765 = vsel %vm2764, %v2757, %v2761
        %v2766 = vand.u32 2147483647, %v1887
        %vm2767 = vcmp.eq.f32.partialorder %v2766, 8.507059e+37
        %v2768 = vand.u32 %v1887, 2147483648
        %v2769 = vor.u32 1.1754944e-38, %v2768
        %v2770 = vsel %vm2767, %v2769, %v2765
        %v2771 = vmul.f32 1.0, %v2770
        %v2772 = vrcp.pop %v1888
        %v2773 = vmul.f32 %v1888, %v2772
        %v2774 = vsub.f32 1.0, %v2773
        %v2775 = vmul.f32 %v2772, %v2774
        %v2776 = vadd.f32 %v2772, %v2775
        %vm2777 = vweird.f32 %v1888
        %vm2778 = vweird.f32 %v2772
        %vm2779 = vmor %vm2777, %vm2778
        %v2780 = vsel %vm2779, %v2772, %v2776
        %v2781 = vand.u32 2147483647, %v1888
        %vm2782 = vcmp.eq.f32.partialorder %v2781, 8.507059e+37
        %v2783 = vand.u32 %v1888, 2147483648
        %v2784 = vor.u32 1.1754944e-38, %v2783
        %v2785 = vsel %vm2782, %v2784, %v2780
        %v2786 = vmul.f32 1.0, %v2785
        %v2787 = vrcp.pop %v1889
        %v2788 = vmul.f32 %v1889, %v2787
        %v2789 = vsub.f32 1.0, %v2788
        %v2790 = vmul.f32 %v2787, %v2789
        %v2791 = vadd.f32 %v2787, %v2790
        %vm2792 = vweird.f32 %v1889
        %vm2793 = vweird.f32 %v2787
        %vm2794 = vmor %vm2792, %vm2793
        %v2795 = vsel %vm2794, %v2787, %v2791
        %v2796 = vand.u32 2147483647, %v1889
        %vm2797 = vcmp.eq.f32.partialorder %v2796, 8.507059e+37
        %v2798 = vand.u32 %v1889, 2147483648
        %v2799 = vor.u32 1.1754944e-38, %v2798
        %v2800 = vsel %vm2797, %v2799, %v2795
        %v2801 = vmul.f32 1.0, %v2800
        %v2802 = vrcp.pop %v1890
        %v2803 = vmul.f32 %v1890, %v2802
        %v2804 = vsub.f32 1.0, %v2803
        %v2805 = vmul.f32 %v2802, %v2804
        %v2806 = vadd.f32 %v2802, %v2805
        %vm2807 = vweird.f32 %v1890
        %vm2808 = vweird.f32 %v2802
        %vm2809 = vmor %vm2807, %vm2808
        %v2810 = vsel %vm2809, %v2802, %v2806
        %v2811 = vand.u32 2147483647, %v1890
        %vm2812 = vcmp.eq.f32.partialorder %v2811, 8.507059e+37
        %v2813 = vand.u32 %v1890, 2147483648
        %v2814 = vor.u32 1.1754944e-38, %v2813
        %v2815 = vsel %vm2812, %v2814, %v2810
        %v2816 = vmul.f32 1.0, %v2815
        %v2817 = vrcp.pop %v1891
        %v2818 = vmul.f32 %v1891, %v2817
        %v2819 = vsub.f32 1.0, %v2818
        %v2820 = vmul.f32 %v2817, %v2819
        %v2821 = vadd.f32 %v2817, %v2820
        %vm2822 = vweird.f32 %v1891
        %vm2823 = vweird.f32 %v2817
        %vm2824 = vmor %vm2822, %vm2823
        %v2825 = vsel %vm2824, %v2817, %v2821
        %v2826 = vand.u32 2147483647, %v1891
        %vm2827 = vcmp.eq.f32.partialorder %v2826, 8.507059e+37
        %v2828 = vand.u32 %v1891, 2147483648
        %v2829 = vor.u32 1.1754944e-38, %v2828
        %v2830 = vsel %vm2827, %v2829, %v2825
        %v2831 = vmul.f32 1.0, %v2830
        %v2832 = vrcp.pop %v1892
        %v2833 = vmul.f32 %v1892, %v2832
        %v2834 = vsub.f32 1.0, %v2833
        %v2835 = vmul.f32 %v2832, %v2834
        %v2836 = vadd.f32 %v2832, %v2835
        %vm2837 = vweird.f32 %v1892
        %vm2838 = vweird.f32 %v2832
        %vm2839 = vmor %vm2837, %vm2838
        %v2840 = vsel %vm2839, %v2832, %v2836
        %v2841 = vand.u32 2147483647, %v1892
        %vm2842 = vcmp.eq.f32.partialorder %v2841, 8.507059e+37
        %v2843 = vand.u32 %v1892, 2147483648
        %v2844 = vor.u32 1.1754944e-38, %v2843
        %v2845 = vsel %vm2842, %v2844, %v2840
        %v2846 = vmul.f32 1.0, %v2845
        %v2847 = vrcp.pop %v1893
        %v2848 = vmul.f32 %v1893, %v2847
        %v2849 = vsub.f32 1.0, %v2848
        %v2850 = vmul.f32 %v2847, %v2849
        %v2851 = vadd.f32 %v2847, %v2850
        %vm2852 = vweird.f32 %v1893
        %vm2853 = vweird.f32 %v2847
        %vm2854 = vmor %vm2852, %vm2853
        %v2855 = vsel %vm2854, %v2847, %v2851
        %v2856 = vand.u32 2147483647, %v1893
        %vm2857 = vcmp.eq.f32.partialorder %v2856, 8.507059e+37
        %v2858 = vand.u32 %v1893, 2147483648
        %v2859 = vor.u32 1.1754944e-38, %v2858
        %v2860 = vsel %vm2857, %v2859, %v2855
        %v2861 = vmul.f32 1.0, %v2860
        %v2862 = vrcp.pop %v1894
        %v2863 = vmul.f32 %v1894, %v2862
        %v2864 = vsub.f32 1.0, %v2863
        %v2865 = vmul.f32 %v2862, %v2864
        %v2866 = vadd.f32 %v2862, %v2865
        %vm2867 = vweird.f32 %v1894
        %vm2868 = vweird.f32 %v2862
        %vm2869 = vmor %vm2867, %vm2868
        %v2870 = vsel %vm2869, %v2862, %v2866
        %v2871 = vand.u32 2147483647, %v1894
        %vm2872 = vcmp.eq.f32.partialorder %v2871, 8.507059e+37
        %v2873 = vand.u32 %v1894, 2147483648
        %v2874 = vor.u32 1.1754944e-38, %v2873
        %v2875 = vsel %vm2872, %v2874, %v2870
        %v2876 = vmul.f32 1.0, %v2875
        %v2877 = vrcp.pop %v1895
        %v2878 = vmul.f32 %v1895, %v2877
        %v2879 = vsub.f32 1.0, %v2878
        %v2880 = vmul.f32 %v2877, %v2879
        %v2881 = vadd.f32 %v2877, %v2880
        %vm2882 = vweird.f32 %v1895
        %vm2883 = vweird.f32 %v2877
        %vm2884 = vmor %vm2882, %vm2883
        %v2885 = vsel %vm2884, %v2877, %v2881
        %v2886 = vand.u32 2147483647, %v1895
        %vm2887 = vcmp.eq.f32.partialorder %v2886, 8.507059e+37
        %v2888 = vand.u32 %v1895, 2147483648
        %v2889 = vor.u32 1.1754944e-38, %v2888
        %v2890 = vsel %vm2887, %v2889, %v2885
        %v2891 = vmul.f32 1.0, %v2890
        %v2892 = vrcp.pop %v1896
        %v2893 = vmul.f32 %v1896, %v2892
        %v2894 = vsub.f32 1.0, %v2893
        %v2895 = vmul.f32 %v2892, %v2894
        %v2896 = vadd.f32 %v2892, %v2895
        %vm2897 = vweird.f32 %v1896
        %vm2898 = vweird.f32 %v2892
        %vm2899 = vmor %vm2897, %vm2898
        %v2900 = vsel %vm2899, %v2892, %v2896
        %v2901 = vand.u32 2147483647, %v1896
        %vm2902 = vcmp.eq.f32.partialorder %v2901, 8.507059e+37
        %v2903 = vand.u32 %v1896, 2147483648
        %v2904 = vor.u32 1.1754944e-38, %v2903
        %v2905 = vsel %vm2902, %v2904, %v2900
        %v2906 = vmul.f32 1.0, %v2905
        %v2907 = vrcp.pop %v1897
        %v2908 = vmul.f32 %v1897, %v2907
        %v2909 = vsub.f32 1.0, %v2908
        %v2910 = vmul.f32 %v2907, %v2909
        %v2911 = vadd.f32 %v2907, %v2910
        %vm2912 = vweird.f32 %v1897
        %vm2913 = vweird.f32 %v2907
        %vm2914 = vmor %vm2912, %vm2913
        %v2915 = vsel %vm2914, %v2907, %v2911
        %v2916 = vand.u32 2147483647, %v1897
        %vm2917 = vcmp.eq.f32.partialorder %v2916, 8.507059e+37
        %v2918 = vand.u32 %v1897, 2147483648
        %v2919 = vor.u32 1.1754944e-38, %v2918
        %v2920 = vsel %vm2917, %v2919, %v2915
        %v2921 = vmul.f32 1.0, %v2920
        %v2922 = vrcp.pop %v1898
        %v2923 = vmul.f32 %v1898, %v2922
        %v2924 = vsub.f32 1.0, %v2923
        %v2925 = vmul.f32 %v2922, %v2924
        %v2926 = vadd.f32 %v2922, %v2925
        %vm2927 = vweird.f32 %v1898
        %vm2928 = vweird.f32 %v2922
        %vm2929 = vmor %vm2927, %vm2928
        %v2930 = vsel %vm2929, %v2922, %v2926
        %v2931 = vand.u32 2147483647, %v1898
        %vm2932 = vcmp.eq.f32.partialorder %v2931, 8.507059e+37
        %v2933 = vand.u32 %v1898, 2147483648
        %v2934 = vor.u32 1.1754944e-38, %v2933
        %v2935 = vsel %vm2932, %v2934, %v2930
        %v2936 = vmul.f32 1.0, %v2935
        %v2937 = vrcp.pop %v1899
        %v2938 = vmul.f32 %v1899, %v2937
        %v2939 = vsub.f32 1.0, %v2938
        %v2940 = vmul.f32 %v2937, %v2939
        %v2941 = vadd.f32 %v2937, %v2940
        %vm2942 = vweird.f32 %v1899
        %vm2943 = vweird.f32 %v2937
        %vm2944 = vmor %vm2942, %vm2943
        %v2945 = vsel %vm2944, %v2937, %v2941
        %v2946 = vand.u32 2147483647, %v1899
        %vm2947 = vcmp.eq.f32.partialorder %v2946, 8.507059e+37
        %v2948 = vand.u32 %v1899, 2147483648
        %v2949 = vor.u32 1.1754944e-38, %v2948
        %v2950 = vsel %vm2947, %v2949, %v2945
        %v2951 = vmul.f32 1.0, %v2950
        %v2952 = vrcp.pop %v1900
        %v2953 = vmul.f32 %v1900, %v2952
        %v2954 = vsub.f32 1.0, %v2953
        %v2955 = vmul.f32 %v2952, %v2954
        %v2956 = vadd.f32 %v2952, %v2955
        %vm2957 = vweird.f32 %v1900
        %vm2958 = vweird.f32 %v2952
        %vm2959 = vmor %vm2957, %vm2958
        %v2960 = vsel %vm2959, %v2952, %v2956
        %v2961 = vand.u32 2147483647, %v1900
        %vm2962 = vcmp.eq.f32.partialorder %v2961, 8.507059e+37
        %v2963 = vand.u32 %v1900, 2147483648
        %v2964 = vor.u32 1.1754944e-38, %v2963
        %v2965 = vsel %vm2962, %v2964, %v2960
        %v2966 = vmul.f32 1.0, %v2965
        %v2967 = vrcp.pop %v1901
        %v2968 = vmul.f32 %v1901, %v2967
        %v2969 = vsub.f32 1.0, %v2968
        %v2970 = vmul.f32 %v2967, %v2969
        %v2971 = vadd.f32 %v2967, %v2970
        %vm2972 = vweird.f32 %v1901
        %vm2973 = vweird.f32 %v2967
        %vm2974 = vmor %vm2972, %vm2973
        %v2975 = vsel %vm2974, %v2967, %v2971
        %v2976 = vand.u32 2147483647, %v1901
        %vm2977 = vcmp.eq.f32.partialorder %v2976, 8.507059e+37
        %v2978 = vand.u32 %v1901, 2147483648
        %v2979 = vor.u32 1.1754944e-38, %v2978
        %v2980 = vsel %vm2977, %v2979, %v2975
        %v2981 = vmul.f32 1.0, %v2980
        %v2982 = vrcp.pop %v1902
        %v2983 = vmul.f32 %v1902, %v2982
        %v2984 = vsub.f32 1.0, %v2983
        %v2985 = vmul.f32 %v2982, %v2984
        %v2986 = vadd.f32 %v2982, %v2985
        %vm2987 = vweird.f32 %v1902
        %vm2988 = vweird.f32 %v2982
        %vm2989 = vmor %vm2987, %vm2988
        %v2990 = vsel %vm2989, %v2982, %v2986
        %v2991 = vand.u32 2147483647, %v1902
        %vm2992 = vcmp.eq.f32.partialorder %v2991, 8.507059e+37
        %v2993 = vand.u32 %v1902, 2147483648
        %v2994 = vor.u32 1.1754944e-38, %v2993
        %v2995 = vsel %vm2992, %v2994, %v2990
        %v2996 = vmul.f32 1.0, %v2995
        %v2997 = vrcp.pop %v1903
        %v2998 = vmul.f32 %v1903, %v2997
        %v2999 = vsub.f32 1.0, %v2998
        %v3000 = vmul.f32 %v2997, %v2999
        %v3001 = vadd.f32 %v2997, %v3000
        %vm3002 = vweird.f32 %v1903
        %vm3003 = vweird.f32 %v2997
        %vm3004 = vmor %vm3002, %vm3003
        %v3005 = vsel %vm3004, %v2997, %v3001
        %v3006 = vand.u32 2147483647, %v1903
        %vm3007 = vcmp.eq.f32.partialorder %v3006, 8.507059e+37
        %v3008 = vand.u32 %v1903, 2147483648
        %v3009 = vor.u32 1.1754944e-38, %v3008
        %v3010 = vsel %vm3007, %v3009, %v3005
        %v3011 = vmul.f32 1.0, %v3010
        %v3012 = vrcp.pop %v1904
        %v3013 = vmul.f32 %v1904, %v3012
        %v3014 = vsub.f32 1.0, %v3013
        %v3015 = vmul.f32 %v3012, %v3014
        %v3016 = vadd.f32 %v3012, %v3015
        %vm3017 = vweird.f32 %v1904
        %vm3018 = vweird.f32 %v3012
        %vm3019 = vmor %vm3017, %vm3018
        %v3020 = vsel %vm3019, %v3012, %v3016
        %v3021 = vand.u32 2147483647, %v1904
        %vm3022 = vcmp.eq.f32.partialorder %v3021, 8.507059e+37
        %v3023 = vand.u32 %v1904, 2147483648
        %v3024 = vor.u32 1.1754944e-38, %v3023
        %v3025 = vsel %vm3022, %v3024, %v3020
        %v3026 = vmul.f32 1.0, %v3025
        %v3027 = vrcp.pop %v1905
        %v3028 = vmul.f32 %v1905, %v3027
        %v3029 = vsub.f32 1.0, %v3028
        %v3030 = vmul.f32 %v3027, %v3029
        %v3031 = vadd.f32 %v3027, %v3030
        %vm3032 = vweird.f32 %v1905
        %vm3033 = vweird.f32 %v3027
        %vm3034 = vmor %vm3032, %vm3033
        %v3035 = vsel %vm3034, %v3027, %v3031
        %v3036 = vand.u32 2147483647, %v1905
        %vm3037 = vcmp.eq.f32.partialorder %v3036, 8.507059e+37
        %v3038 = vand.u32 %v1905, 2147483648
        %v3039 = vor.u32 1.1754944e-38, %v3038
        %v3040 = vsel %vm3037, %v3039, %v3035
        %v3041 = vmul.f32 1.0, %v3040
        %v3042 = vrcp.pop %v1906
        %v3043 = vmul.f32 %v1906, %v3042
        %v3044 = vsub.f32 1.0, %v3043
        %v3045 = vmul.f32 %v3042, %v3044
        %v3046 = vadd.f32 %v3042, %v3045
        %vm3047 = vweird.f32 %v1906
        %vm3048 = vweird.f32 %v3042
        %vm3049 = vmor %vm3047, %vm3048
        %v3050 = vsel %vm3049, %v3042, %v3046
        %v3051 = vand.u32 2147483647, %v1906
        %vm3052 = vcmp.eq.f32.partialorder %v3051, 8.507059e+37
        %v3053 = vand.u32 %v1906, 2147483648
        %v3054 = vor.u32 1.1754944e-38, %v3053
        %v3055 = vsel %vm3052, %v3054, %v3050
        %v3056 = vmul.f32 1.0, %v3055
        %v3057 = vrcp.pop %v1907
        %v3058 = vmul.f32 %v1907, %v3057
        %v3059 = vsub.f32 1.0, %v3058
        %v3060 = vmul.f32 %v3057, %v3059
        %v3061 = vadd.f32 %v3057, %v3060
        %vm3062 = vweird.f32 %v1907
        %vm3063 = vweird.f32 %v3057
        %vm3064 = vmor %vm3062, %vm3063
        %v3065 = vsel %vm3064, %v3057, %v3061
        %v3066 = vand.u32 2147483647, %v1907
        %vm3067 = vcmp.eq.f32.partialorder %v3066, 8.507059e+37
        %v3068 = vand.u32 %v1907, 2147483648
        %v3069 = vor.u32 1.1754944e-38, %v3068
        %v3070 = vsel %vm3067, %v3069, %v3065
        %v3071 = vmul.f32 1.0, %v3070
        %v3072 = vrcp.pop %v1908
        %v3073 = vmul.f32 %v1908, %v3072
        %v3074 = vsub.f32 1.0, %v3073
        %v3075 = vmul.f32 %v3072, %v3074
        %v3076 = vadd.f32 %v3072, %v3075
        %vm3077 = vweird.f32 %v1908
        %vm3078 = vweird.f32 %v3072
        %vm3079 = vmor %vm3077, %vm3078
        %v3080 = vsel %vm3079, %v3072, %v3076
        %v3081 = vand.u32 2147483647, %v1908
        %vm3082 = vcmp.eq.f32.partialorder %v3081, 8.507059e+37
        %v3083 = vand.u32 %v1908, 2147483648
        %v3084 = vor.u32 1.1754944e-38, %v3083
        %v3085 = vsel %vm3082, %v3084, %v3080
        %v3086 = vmul.f32 1.0, %v3085
        %v3087 = vrcp.pop %v1909
        %v3088 = vmul.f32 %v1909, %v3087
        %v3089 = vsub.f32 1.0, %v3088
        %v3090 = vmul.f32 %v3087, %v3089
        %v3091 = vadd.f32 %v3087, %v3090
        %vm3092 = vweird.f32 %v1909
        %vm3093 = vweird.f32 %v3087
        %vm3094 = vmor %vm3092, %vm3093
        %v3095 = vsel %vm3094, %v3087, %v3091
        %v3096 = vand.u32 2147483647, %v1909
        %vm3097 = vcmp.eq.f32.partialorder %v3096, 8.507059e+37
        %v3098 = vand.u32 %v1909, 2147483648
        %v3099 = vor.u32 1.1754944e-38, %v3098
        %v3100 = vsel %vm3097, %v3099, %v3095
        %v3101 = vmul.f32 1.0, %v3100
        %v3102 = vrcp.pop %v1910
        %v3103 = vmul.f32 %v1910, %v3102
        %v3104 = vsub.f32 1.0, %v3103
        %v3105 = vmul.f32 %v3102, %v3104
        %v3106 = vadd.f32 %v3102, %v3105
        %vm3107 = vweird.f32 %v1910
        %vm3108 = vweird.f32 %v3102
        %vm3109 = vmor %vm3107, %vm3108
        %v3110 = vsel %vm3109, %v3102, %v3106
        %v3111 = vand.u32 2147483647, %v1910
        %vm3112 = vcmp.eq.f32.partialorder %v3111, 8.507059e+37
        %v3113 = vand.u32 %v1910, 2147483648
        %v3114 = vor.u32 1.1754944e-38, %v3113
        %v3115 = vsel %vm3112, %v3114, %v3110
        %v3116 = vmul.f32 1.0, %v3115
        %v3117 = vrcp.pop %v1911
        %v3118 = vmul.f32 %v1911, %v3117
        %v3119 = vsub.f32 1.0, %v3118
        %v3120 = vmul.f32 %v3117, %v3119
        %v3121 = vadd.f32 %v3117, %v3120
        %vm3122 = vweird.f32 %v1911
        %vm3123 = vweird.f32 %v3117
        %vm3124 = vmor %vm3122, %vm3123
        %v3125 = vsel %vm3124, %v3117, %v3121
        %v3126 = vand.u32 2147483647, %v1911
        %vm3127 = vcmp.eq.f32.partialorder %v3126, 8.507059e+37
        %v3128 = vand.u32 %v1911, 2147483648
        %v3129 = vor.u32 1.1754944e-38, %v3128
        %v3130 = vsel %vm3127, %v3129, %v3125
        %v3131 = vmul.f32 1.0, %v3130
        %v3132 = vrcp.pop %v1912
        %v3133 = vmul.f32 %v1912, %v3132
        %v3134 = vsub.f32 1.0, %v3133
        %v3135 = vmul.f32 %v3132, %v3134
        %v3136 = vadd.f32 %v3132, %v3135
        %vm3137 = vweird.f32 %v1912
        %vm3138 = vweird.f32 %v3132
        %vm3139 = vmor %vm3137, %vm3138
        %v3140 = vsel %vm3139, %v3132, %v3136
        %v3141 = vand.u32 2147483647, %v1912
        %vm3142 = vcmp.eq.f32.partialorder %v3141, 8.507059e+37
        %v3143 = vand.u32 %v1912, 2147483648
        %v3144 = vor.u32 1.1754944e-38, %v3143
        %v3145 = vsel %vm3142, %v3144, %v3140
        %v3146 = vmul.f32 1.0, %v3145
        %v3147 = vrcp.pop %v1913
        %v3148 = vmul.f32 %v1913, %v3147
        %v3149 = vsub.f32 1.0, %v3148
        %v3150 = vmul.f32 %v3147, %v3149
        %v3151 = vadd.f32 %v3147, %v3150
        %vm3152 = vweird.f32 %v1913
        %vm3153 = vweird.f32 %v3147
        %vm3154 = vmor %vm3152, %vm3153
        %v3155 = vsel %vm3154, %v3147, %v3151
        %v3156 = vand.u32 2147483647, %v1913
        %vm3157 = vcmp.eq.f32.partialorder %v3156, 8.507059e+37
        %v3158 = vand.u32 %v1913, 2147483648
        %v3159 = vor.u32 1.1754944e-38, %v3158
        %v3160 = vsel %vm3157, %v3159, %v3155
        %v3161 = vmul.f32 1.0, %v3160
        %v3162 = vrcp.pop %v1914
        %v3163 = vmul.f32 %v1914, %v3162
        %v3164 = vsub.f32 1.0, %v3163
        %v3165 = vmul.f32 %v3162, %v3164
        %v3166 = vadd.f32 %v3162, %v3165
        %vm3167 = vweird.f32 %v1914
        %vm3168 = vweird.f32 %v3162
        %vm3169 = vmor %vm3167, %vm3168
        %v3170 = vsel %vm3169, %v3162, %v3166
        %v3171 = vand.u32 2147483647, %v1914
        %vm3172 = vcmp.eq.f32.partialorder %v3171, 8.507059e+37
        %v3173 = vand.u32 %v1914, 2147483648
        %v3174 = vor.u32 1.1754944e-38, %v3173
        %v3175 = vsel %vm3172, %v3174, %v3170
        %v3176 = vmul.f32 1.0, %v3175
        %v3177 = vrcp.pop %v1915
        %v3178 = vmul.f32 %v1915, %v3177
        %v3179 = vsub.f32 1.0, %v3178
        %v3180 = vmul.f32 %v3177, %v3179
        %v3181 = vadd.f32 %v3177, %v3180
        %vm3182 = vweird.f32 %v1915
        %vm3183 = vweird.f32 %v3177
        %vm3184 = vmor %vm3182, %vm3183
        %v3185 = vsel %vm3184, %v3177, %v3181
        %v3186 = vand.u32 2147483647, %v1915
        %vm3187 = vcmp.eq.f32.partialorder %v3186, 8.507059e+37
        %v3188 = vand.u32 %v1915, 2147483648
        %v3189 = vor.u32 1.1754944e-38, %v3188
        %v3190 = vsel %vm3187, %v3189, %v3185
        %v3191 = vmul.f32 1.0, %v3190
        %v3192 = vrcp.pop %v1916
        %v3193 = vmul.f32 %v1916, %v3192
        %v3194 = vsub.f32 1.0, %v3193
        %v3195 = vmul.f32 %v3192, %v3194
        %v3196 = vadd.f32 %v3192, %v3195
        %vm3197 = vweird.f32 %v1916
        %vm3198 = vweird.f32 %v3192
        %vm3199 = vmor %vm3197, %vm3198
        %v3200 = vsel %vm3199, %v3192, %v3196
        %v3201 = vand.u32 2147483647, %v1916
        %vm3202 = vcmp.eq.f32.partialorder %v3201, 8.507059e+37
        %v3203 = vand.u32 %v1916, 2147483648
        %v3204 = vor.u32 1.1754944e-38, %v3203
        %v3205 = vsel %vm3202, %v3204, %v3200
        %v3206 = vmul.f32 1.0, %v3205
        %v3207 = vrcp.pop %v1917
        %v3208 = vmul.f32 %v1917, %v3207
        %v3209 = vsub.f32 1.0, %v3208
        %v3210 = vmul.f32 %v3207, %v3209
        %v3211 = vadd.f32 %v3207, %v3210
        %vm3212 = vweird.f32 %v1917
        %vm3213 = vweird.f32 %v3207
        %vm3214 = vmor %vm3212, %vm3213
        %v3215 = vsel %vm3214, %v3207, %v3211
        %v3216 = vand.u32 2147483647, %v1917
        %vm3217 = vcmp.eq.f32.partialorder %v3216, 8.507059e+37
        %v3218 = vand.u32 %v1917, 2147483648
        %v3219 = vor.u32 1.1754944e-38, %v3218
        %v3220 = vsel %vm3217, %v3219, %v3215
        %v3221 = vmul.f32 1.0, %v3220
        %v3222 = vrcp.pop %v1918
        %v3223 = vmul.f32 %v1918, %v3222
        %v3224 = vsub.f32 1.0, %v3223
        %v3225 = vmul.f32 %v3222, %v3224
        %v3226 = vadd.f32 %v3222, %v3225
        %vm3227 = vweird.f32 %v1918
        %vm3228 = vweird.f32 %v3222
        %vm3229 = vmor %vm3227, %vm3228
        %v3230 = vsel %vm3229, %v3222, %v3226
        %v3231 = vand.u32 2147483647, %v1918
        %vm3232 = vcmp.eq.f32.partialorder %v3231, 8.507059e+37
        %v3233 = vand.u32 %v1918, 2147483648
        %v3234 = vor.u32 1.1754944e-38, %v3233
        %v3235 = vsel %vm3232, %v3234, %v3230
        %v3236 = vmul.f32 1.0, %v3235
        %v3237 = vrcp.pop %v1919
        %v3238 = vmul.f32 %v1919, %v3237
        %v3239 = vsub.f32 1.0, %v3238
        %v3240 = vmul.f32 %v3237, %v3239
        %v3241 = vadd.f32 %v3237, %v3240
        %vm3242 = vweird.f32 %v1919
        %vm3243 = vweird.f32 %v3237
        %vm3244 = vmor %vm3242, %vm3243
        %v3245 = vsel %vm3244, %v3237, %v3241
        %v3246 = vand.u32 2147483647, %v1919
        %vm3247 = vcmp.eq.f32.partialorder %v3246, 8.507059e+37
        %v3248 = vand.u32 %v1919, 2147483648
        %v3249 = vor.u32 1.1754944e-38, %v3248
        %v3250 = vsel %vm3247, %v3249, %v3245
        %v3251 = vmul.f32 1.0, %v3250
        %v3252 = vrcp.pop %v1920
        %v3253 = vmul.f32 %v1920, %v3252
        %v3254 = vsub.f32 1.0, %v3253
        %v3255 = vmul.f32 %v3252, %v3254
        %v3256 = vadd.f32 %v3252, %v3255
        %vm3257 = vweird.f32 %v1920
        %vm3258 = vweird.f32 %v3252
        %vm3259 = vmor %vm3257, %vm3258
        %v3260 = vsel %vm3259, %v3252, %v3256
        %v3261 = vand.u32 2147483647, %v1920
        %vm3262 = vcmp.eq.f32.partialorder %v3261, 8.507059e+37
        %v3263 = vand.u32 %v1920, 2147483648
        %v3264 = vor.u32 1.1754944e-38, %v3263
        %v3265 = vsel %vm3262, %v3264, %v3260
        %v3266 = vmul.f32 1.0, %v3265
        %v3267 = vrcp.pop %v1921
        %v3268 = vmul.f32 %v1921, %v3267
        %v3269 = vsub.f32 1.0, %v3268
        %v3270 = vmul.f32 %v3267, %v3269
        %v3271 = vadd.f32 %v3267, %v3270
        %vm3272 = vweird.f32 %v1921
        %vm3273 = vweird.f32 %v3267
        %vm3274 = vmor %vm3272, %vm3273
        %v3275 = vsel %vm3274, %v3267, %v3271
        %v3276 = vand.u32 2147483647, %v1921
        %vm3277 = vcmp.eq.f32.partialorder %v3276, 8.507059e+37
        %v3278 = vand.u32 %v1921, 2147483648
        %v3279 = vor.u32 1.1754944e-38, %v3278
        %v3280 = vsel %vm3277, %v3279, %v3275
        %v3281 = vmul.f32 1.0, %v3280
        %v3282 = vrcp.pop %v1922
        %v3283 = vmul.f32 %v1922, %v3282
        %v3284 = vsub.f32 1.0, %v3283
        %v3285 = vmul.f32 %v3282, %v3284
        %v3286 = vadd.f32 %v3282, %v3285
        %vm3287 = vweird.f32 %v1922
        %vm3288 = vweird.f32 %v3282
        %vm3289 = vmor %vm3287, %vm3288
        %v3290 = vsel %vm3289, %v3282, %v3286
        %v3291 = vand.u32 2147483647, %v1922
        %vm3292 = vcmp.eq.f32.partialorder %v3291, 8.507059e+37
        %v3293 = vand.u32 %v1922, 2147483648
        %v3294 = vor.u32 1.1754944e-38, %v3293
        %v3295 = vsel %vm3292, %v3294, %v3290
        %v3296 = vmul.f32 1.0, %v3295
        %v3297 = vrcp.pop %v1923
        %v3298 = vmul.f32 %v1923, %v3297
        %v3299 = vsub.f32 1.0, %v3298
        %v3300 = vmul.f32 %v3297, %v3299
        %v3301 = vadd.f32 %v3297, %v3300
        %vm3302 = vweird.f32 %v1923
        %vm3303 = vweird.f32 %v3297
        %vm3304 = vmor %vm3302, %vm3303
        %v3305 = vsel %vm3304, %v3297, %v3301
        %v3306 = vand.u32 2147483647, %v1923
        %vm3307 = vcmp.eq.f32.partialorder %v3306, 8.507059e+37
        %v3308 = vand.u32 %v1923, 2147483648
        %v3309 = vor.u32 1.1754944e-38, %v3308
        %v3310 = vsel %vm3307, %v3309, %v3305
        %v3311 = vmul.f32 1.0, %v3310
        %v3312 = vrcp.pop %v1924
        %v3313 = vmul.f32 %v1924, %v3312
        %v3314 = vsub.f32 1.0, %v3313
        %v3315 = vmul.f32 %v3312, %v3314
        %v3316 = vadd.f32 %v3312, %v3315
        %vm3317 = vweird.f32 %v1924
        %vm3318 = vweird.f32 %v3312
        %vm3319 = vmor %vm3317, %vm3318
        %v3320 = vsel %vm3319, %v3312, %v3316
        %v3321 = vand.u32 2147483647, %v1924
        %vm3322 = vcmp.eq.f32.partialorder %v3321, 8.507059e+37
        %v3323 = vand.u32 %v1924, 2147483648
        %v3324 = vor.u32 1.1754944e-38, %v3323
        %v3325 = vsel %vm3322, %v3324, %v3320
        %v3326 = vmul.f32 1.0, %v3325
        %v3327 = vrcp.pop %v1925
        %v3328 = vmul.f32 %v1925, %v3327
        %v3329 = vsub.f32 1.0, %v3328
        %v3330 = vmul.f32 %v3327, %v3329
        %v3331 = vadd.f32 %v3327, %v3330
        %vm3332 = vweird.f32 %v1925
        %vm3333 = vweird.f32 %v3327
        %vm3334 = vmor %vm3332, %vm3333
        %v3335 = vsel %vm3334, %v3327, %v3331
        %v3336 = vand.u32 2147483647, %v1925
        %vm3337 = vcmp.eq.f32.partialorder %v3336, 8.507059e+37
        %v3338 = vand.u32 %v1925, 2147483648
        %v3339 = vor.u32 1.1754944e-38, %v3338
        %v3340 = vsel %vm3337, %v3339, %v3335
        %v3341 = vmul.f32 1.0, %v3340
        %v3342 = vrcp.pop %v1926
        %v3343 = vmul.f32 %v1926, %v3342
        %v3344 = vsub.f32 1.0, %v3343
        %v3345 = vmul.f32 %v3342, %v3344
        %v3346 = vadd.f32 %v3342, %v3345
        %vm3347 = vweird.f32 %v1926
        %vm3348 = vweird.f32 %v3342
        %vm3349 = vmor %vm3347, %vm3348
        %v3350 = vsel %vm3349, %v3342, %v3346
        %v3351 = vand.u32 2147483647, %v1926
        %vm3352 = vcmp.eq.f32.partialorder %v3351, 8.507059e+37
        %v3353 = vand.u32 %v1926, 2147483648
        %v3354 = vor.u32 1.1754944e-38, %v3353
        %v3355 = vsel %vm3352, %v3354, %v3350
        %v3356 = vmul.f32 1.0, %v3355
        %v3357 = vrcp.pop %v1927
        %v3358 = vmul.f32 %v1927, %v3357
        %v3359 = vsub.f32 1.0, %v3358
        %v3360 = vmul.f32 %v3357, %v3359
        %v3361 = vadd.f32 %v3357, %v3360
        %vm3362 = vweird.f32 %v1927
        %vm3363 = vweird.f32 %v3357
        %vm3364 = vmor %vm3362, %vm3363
        %v3365 = vsel %vm3364, %v3357, %v3361
        %v3366 = vand.u32 2147483647, %v1927
        %vm3367 = vcmp.eq.f32.partialorder %v3366, 8.507059e+37
        %v3368 = vand.u32 %v1927, 2147483648
        %v3369 = vor.u32 1.1754944e-38, %v3368
        %v3370 = vsel %vm3367, %v3369, %v3365
        %v3371 = vmul.f32 1.0, %v3370
        %v3372 = vrcp.pop %v1928
        %v3373 = vmul.f32 %v1928, %v3372
        %v3374 = vsub.f32 1.0, %v3373
        %v3375 = vmul.f32 %v3372, %v3374
        %v3376 = vadd.f32 %v3372, %v3375
        %vm3377 = vweird.f32 %v1928
        %vm3378 = vweird.f32 %v3372
        %vm3379 = vmor %vm3377, %vm3378
        %v3380 = vsel %vm3379, %v3372, %v3376
        %v3381 = vand.u32 2147483647, %v1928
        %vm3382 = vcmp.eq.f32.partialorder %v3381, 8.507059e+37
        %v3383 = vand.u32 %v1928, 2147483648
        %v3384 = vor.u32 1.1754944e-38, %v3383
        %v3385 = vsel %vm3382, %v3384, %v3380
        %v3386 = vmul.f32 1.0, %v3385
        %v3387 = vrcp.pop %v1929
        %v3388 = vmul.f32 %v1929, %v3387
        %v3389 = vsub.f32 1.0, %v3388
        %v3390 = vmul.f32 %v3387, %v3389
        %v3391 = vadd.f32 %v3387, %v3390
        %vm3392 = vweird.f32 %v1929
        %vm3393 = vweird.f32 %v3387
        %vm3394 = vmor %vm3392, %vm3393
        %v3395 = vsel %vm3394, %v3387, %v3391
        %v3396 = vand.u32 2147483647, %v1929
        %vm3397 = vcmp.eq.f32.partialorder %v3396, 8.507059e+37
        %v3398 = vand.u32 %v1929, 2147483648
        %v3399 = vor.u32 1.1754944e-38, %v3398
        %v3400 = vsel %vm3397, %v3399, %v3395
        %v3401 = vmul.f32 1.0, %v3400
        %v3402 = vrcp.pop %v1930
        %v3403 = vmul.f32 %v1930, %v3402
        %v3404 = vsub.f32 1.0, %v3403
        %v3405 = vmul.f32 %v3402, %v3404
        %v3406 = vadd.f32 %v3402, %v3405
        %vm3407 = vweird.f32 %v1930
        %vm3408 = vweird.f32 %v3402
        %vm3409 = vmor %vm3407, %vm3408
        %v3410 = vsel %vm3409, %v3402, %v3406
        %v3411 = vand.u32 2147483647, %v1930
        %vm3412 = vcmp.eq.f32.partialorder %v3411, 8.507059e+37
        %v3413 = vand.u32 %v1930, 2147483648
        %v3414 = vor.u32 1.1754944e-38, %v3413
        %v3415 = vsel %vm3412, %v3414, %v3410
        %v3416 = vmul.f32 1.0, %v3415
        %v3417 = vrcp.pop %v1931
        %v3418 = vmul.f32 %v1931, %v3417
        %v3419 = vsub.f32 1.0, %v3418
        %v3420 = vmul.f32 %v3417, %v3419
        %v3421 = vadd.f32 %v3417, %v3420
        %vm3422 = vweird.f32 %v1931
        %vm3423 = vweird.f32 %v3417
        %vm3424 = vmor %vm3422, %vm3423
        %v3425 = vsel %vm3424, %v3417, %v3421
        %v3426 = vand.u32 2147483647, %v1931
        %vm3427 = vcmp.eq.f32.partialorder %v3426, 8.507059e+37
        %v3428 = vand.u32 %v1931, 2147483648
        %v3429 = vor.u32 1.1754944e-38, %v3428
        %v3430 = vsel %vm3427, %v3429, %v3425
        %v3431 = vmul.f32 1.0, %v3430
        %v3432 = vrcp.pop %v1932
        %v3433 = vmul.f32 %v1932, %v3432
        %v3434 = vsub.f32 1.0, %v3433
        %v3435 = vmul.f32 %v3432, %v3434
        %v3436 = vadd.f32 %v3432, %v3435
        %vm3437 = vweird.f32 %v1932
        %vm3438 = vweird.f32 %v3432
        %vm3439 = vmor %vm3437, %vm3438
        %v3440 = vsel %vm3439, %v3432, %v3436
        %v3441 = vand.u32 2147483647, %v1932
        %vm3442 = vcmp.eq.f32.partialorder %v3441, 8.507059e+37
        %v3443 = vand.u32 %v1932, 2147483648
        %v3444 = vor.u32 1.1754944e-38, %v3443
        %v3445 = vsel %vm3442, %v3444, %v3440
        %v3446 = vmul.f32 1.0, %v3445
        %v3447 = vrcp.pop %v1933
        %v3448 = vmul.f32 %v1933, %v3447
        %v3449 = vsub.f32 1.0, %v3448
        %v3450 = vmul.f32 %v3447, %v3449
        %v3451 = vadd.f32 %v3447, %v3450
        %vm3452 = vweird.f32 %v1933
        %vm3453 = vweird.f32 %v3447
        %vm3454 = vmor %vm3452, %vm3453
        %v3455 = vsel %vm3454, %v3447, %v3451
        %v3456 = vand.u32 2147483647, %v1933
        %vm3457 = vcmp.eq.f32.partialorder %v3456, 8.507059e+37
        %v3458 = vand.u32 %v1933, 2147483648
        %v3459 = vor.u32 1.1754944e-38, %v3458
        %v3460 = vsel %vm3457, %v3459, %v3455
        %v3461 = vmul.f32 1.0, %v3460
        %v3462 = vrcp.pop %v1934
        %v3463 = vmul.f32 %v1934, %v3462
        %v3464 = vsub.f32 1.0, %v3463
        %v3465 = vmul.f32 %v3462, %v3464
        %v3466 = vadd.f32 %v3462, %v3465
        %vm3467 = vweird.f32 %v1934
        %vm3468 = vweird.f32 %v3462
        %vm3469 = vmor %vm3467, %vm3468
        %v3470 = vsel %vm3469, %v3462, %v3466
        %v3471 = vand.u32 2147483647, %v1934
        %vm3472 = vcmp.eq.f32.partialorder %v3471, 8.507059e+37
        %v3473 = vand.u32 %v1934, 2147483648
        %v3474 = vor.u32 1.1754944e-38, %v3473
        %v3475 = vsel %vm3472, %v3474, %v3470
        %v3476 = vmul.f32 1.0, %v3475
        %v3477 = vrcp.pop %v1935
        %v3478 = vmul.f32 %v1935, %v3477
        %v3479 = vsub.f32 1.0, %v3478
        %v3480 = vmul.f32 %v3477, %v3479
        %v3481 = vadd.f32 %v3477, %v3480
        %vm3482 = vweird.f32 %v1935
        %vm3483 = vweird.f32 %v3477
        %vm3484 = vmor %vm3482, %vm3483
        %v3485 = vsel %vm3484, %v3477, %v3481
        %v3486 = vand.u32 2147483647, %v1935
        %vm3487 = vcmp.eq.f32.partialorder %v3486, 8.507059e+37
        %v3488 = vand.u32 %v1935, 2147483648
        %v3489 = vor.u32 1.1754944e-38, %v3488
        %v3490 = vsel %vm3487, %v3489, %v3485
        %v3491 = vmul.f32 1.0, %v3490
        %v3492 = vrcp.pop %v1936
        %v3493 = vmul.f32 %v1936, %v3492
        %v3494 = vsub.f32 1.0, %v3493
        %v3495 = vmul.f32 %v3492, %v3494
        %v3496 = vadd.f32 %v3492, %v3495
        %vm3497 = vweird.f32 %v1936
        %vm3498 = vweird.f32 %v3492
        %vm3499 = vmor %vm3497, %vm3498
        %v3500 = vsel %vm3499, %v3492, %v3496
        %v3501 = vand.u32 2147483647, %v1936
        %vm3502 = vcmp.eq.f32.partialorder %v3501, 8.507059e+37
        %v3503 = vand.u32 %v1936, 2147483648
        %v3504 = vor.u32 1.1754944e-38, %v3503
        %v3505 = vsel %vm3502, %v3504, %v3500
        %v3506 = vmul.f32 1.0, %v3505
        %v3507 = vrcp.pop %v1937
        %v3508 = vmul.f32 %v1937, %v3507
        %v3509 = vsub.f32 1.0, %v3508
        %v3510 = vmul.f32 %v3507, %v3509
        %v3511 = vadd.f32 %v3507, %v3510
        %vm3512 = vweird.f32 %v1937
        %vm3513 = vweird.f32 %v3507
        %vm3514 = vmor %vm3512, %vm3513
        %v3515 = vsel %vm3514, %v3507, %v3511
        %v3516 = vand.u32 2147483647, %v1937
        %vm3517 = vcmp.eq.f32.partialorder %v3516, 8.507059e+37
        %v3518 = vand.u32 %v1937, 2147483648
        %v3519 = vor.u32 1.1754944e-38, %v3518
        %v3520 = vsel %vm3517, %v3519, %v3515
        %v3521 = vmul.f32 1.0, %v3520
        %v3522 = vrcp.pop %v1938
        %v3523 = vmul.f32 %v1938, %v3522
        %v3524 = vsub.f32 1.0, %v3523
        %v3525 = vmul.f32 %v3522, %v3524
        %v3526 = vadd.f32 %v3522, %v3525
        %vm3527 = vweird.f32 %v1938
        %vm3528 = vweird.f32 %v3522
        %vm3529 = vmor %vm3527, %vm3528
        %v3530 = vsel %vm3529, %v3522, %v3526
        %v3531 = vand.u32 2147483647, %v1938
        %vm3532 = vcmp.eq.f32.partialorder %v3531, 8.507059e+37
        %v3533 = vand.u32 %v1938, 2147483648
        %v3534 = vor.u32 1.1754944e-38, %v3533
        %v3535 = vsel %vm3532, %v3534, %v3530
        %v3536 = vmul.f32 1.0, %v3535
        %v3537 = vrcp.pop %v1939
        %v3538 = vmul.f32 %v1939, %v3537
        %v3539 = vsub.f32 1.0, %v3538
        %v3540 = vmul.f32 %v3537, %v3539
        %v3541 = vadd.f32 %v3537, %v3540
        %vm3542 = vweird.f32 %v1939
        %vm3543 = vweird.f32 %v3537
        %vm3544 = vmor %vm3542, %vm3543
        %v3545 = vsel %vm3544, %v3537, %v3541
        %v3546 = vand.u32 2147483647, %v1939
        %vm3547 = vcmp.eq.f32.partialorder %v3546, 8.507059e+37
        %v3548 = vand.u32 %v1939, 2147483648
        %v3549 = vor.u32 1.1754944e-38, %v3548
        %v3550 = vsel %vm3547, %v3549, %v3545
        %v3551 = vmul.f32 1.0, %v3550
        %v3552 = vrcp.pop %v1940
        %v3553 = vmul.f32 %v1940, %v3552
        %v3554 = vsub.f32 1.0, %v3553
        %v3555 = vmul.f32 %v3552, %v3554
        %v3556 = vadd.f32 %v3552, %v3555
        %vm3557 = vweird.f32 %v1940
        %vm3558 = vweird.f32 %v3552
        %vm3559 = vmor %vm3557, %vm3558
        %v3560 = vsel %vm3559, %v3552, %v3556
        %v3561 = vand.u32 2147483647, %v1940
        %vm3562 = vcmp.eq.f32.partialorder %v3561, 8.507059e+37
        %v3563 = vand.u32 %v1940, 2147483648
        %v3564 = vor.u32 1.1754944e-38, %v3563
        %v3565 = vsel %vm3562, %v3564, %v3560
        %v3566 = vmul.f32 1.0, %v3565
        %v3567 = vrcp.pop %v1941
        %v3568 = vmul.f32 %v1941, %v3567
        %v3569 = vsub.f32 1.0, %v3568
        %v3570 = vmul.f32 %v3567, %v3569
        %v3571 = vadd.f32 %v3567, %v3570
        %vm3572 = vweird.f32 %v1941
        %vm3573 = vweird.f32 %v3567
        %vm3574 = vmor %vm3572, %vm3573
        %v3575 = vsel %vm3574, %v3567, %v3571
        %v3576 = vand.u32 2147483647, %v1941
        %vm3577 = vcmp.eq.f32.partialorder %v3576, 8.507059e+37
        %v3578 = vand.u32 %v1941, 2147483648
        %v3579 = vor.u32 1.1754944e-38, %v3578
        %v3580 = vsel %vm3577, %v3579, %v3575
        %v3581 = vmul.f32 1.0, %v3580
        %v3582 = vrcp.pop %v1942
        %v3583 = vmul.f32 %v1942, %v3582
        %v3584 = vsub.f32 1.0, %v3583
        %v3585 = vmul.f32 %v3582, %v3584
        %v3586 = vadd.f32 %v3582, %v3585
        %vm3587 = vweird.f32 %v1942
        %vm3588 = vweird.f32 %v3582
        %vm3589 = vmor %vm3587, %vm3588
        %v3590 = vsel %vm3589, %v3582, %v3586
        %v3591 = vand.u32 2147483647, %v1942
        %vm3592 = vcmp.eq.f32.partialorder %v3591, 8.507059e+37
        %v3593 = vand.u32 %v1942, 2147483648
        %v3594 = vor.u32 1.1754944e-38, %v3593
        %v3595 = vsel %vm3592, %v3594, %v3590
        %v3596 = vmul.f32 1.0, %v3595
        %v3597 = vrcp.pop %v1943
        %v3598 = vmul.f32 %v1943, %v3597
        %v3599 = vsub.f32 1.0, %v3598
        %v3600 = vmul.f32 %v3597, %v3599
        %v3601 = vadd.f32 %v3597, %v3600
        %vm3602 = vweird.f32 %v1943
        %vm3603 = vweird.f32 %v3597
        %vm3604 = vmor %vm3602, %vm3603
        %v3605 = vsel %vm3604, %v3597, %v3601
        %v3606 = vand.u32 2147483647, %v1943
        %vm3607 = vcmp.eq.f32.partialorder %v3606, 8.507059e+37
        %v3608 = vand.u32 %v1943, 2147483648
        %v3609 = vor.u32 1.1754944e-38, %v3608
        %v3610 = vsel %vm3607, %v3609, %v3605
        %v3611 = vmul.f32 1.0, %v3610
        %v3612 = vrcp.pop %v1944
        %v3613 = vmul.f32 %v1944, %v3612
        %v3614 = vsub.f32 1.0, %v3613
        %v3615 = vmul.f32 %v3612, %v3614
        %v3616 = vadd.f32 %v3612, %v3615
        %vm3617 = vweird.f32 %v1944
        %vm3618 = vweird.f32 %v3612
        %vm3619 = vmor %vm3617, %vm3618
        %v3620 = vsel %vm3619, %v3612, %v3616
        %v3621 = vand.u32 2147483647, %v1944
        %vm3622 = vcmp.eq.f32.partialorder %v3621, 8.507059e+37
        %v3623 = vand.u32 %v1944, 2147483648
        %v3624 = vor.u32 1.1754944e-38, %v3623
        %v3625 = vsel %vm3622, %v3624, %v3620
        %v3626 = vmul.f32 1.0, %v3625
        %v3627 = vrcp.pop %v1945
        %v3628 = vmul.f32 %v1945, %v3627
        %v3629 = vsub.f32 1.0, %v3628
        %v3630 = vmul.f32 %v3627, %v3629
        %v3631 = vadd.f32 %v3627, %v3630
        %vm3632 = vweird.f32 %v1945
        %vm3633 = vweird.f32 %v3627
        %vm3634 = vmor %vm3632, %vm3633
        %v3635 = vsel %vm3634, %v3627, %v3631
        %v3636 = vand.u32 2147483647, %v1945
        %vm3637 = vcmp.eq.f32.partialorder %v3636, 8.507059e+37
        %v3638 = vand.u32 %v1945, 2147483648
        %v3639 = vor.u32 1.1754944e-38, %v3638
        %v3640 = vsel %vm3637, %v3639, %v3635
        %v3641 = vmul.f32 1.0, %v3640
        %v3642 = vrcp.pop %v1946
        %v3643 = vmul.f32 %v1946, %v3642
        %v3644 = vsub.f32 1.0, %v3643
        %v3645 = vmul.f32 %v3642, %v3644
        %v3646 = vadd.f32 %v3642, %v3645
        %vm3647 = vweird.f32 %v1946
        %vm3648 = vweird.f32 %v3642
        %vm3649 = vmor %vm3647, %vm3648
        %v3650 = vsel %vm3649, %v3642, %v3646
        %v3651 = vand.u32 2147483647, %v1946
        %vm3652 = vcmp.eq.f32.partialorder %v3651, 8.507059e+37
        %v3653 = vand.u32 %v1946, 2147483648
        %v3654 = vor.u32 1.1754944e-38, %v3653
        %v3655 = vsel %vm3652, %v3654, %v3650
        %v3656 = vmul.f32 1.0, %v3655
        %v3657 = vrcp.pop %v1947
        %v3658 = vmul.f32 %v1947, %v3657
        %v3659 = vsub.f32 1.0, %v3658
        %v3660 = vmul.f32 %v3657, %v3659
        %v3661 = vadd.f32 %v3657, %v3660
        %vm3662 = vweird.f32 %v1947
        %vm3663 = vweird.f32 %v3657
        %vm3664 = vmor %vm3662, %vm3663
        %v3665 = vsel %vm3664, %v3657, %v3661
        %v3666 = vand.u32 2147483647, %v1947
        %vm3667 = vcmp.eq.f32.partialorder %v3666, 8.507059e+37
        %v3668 = vand.u32 %v1947, 2147483648
        %v3669 = vor.u32 1.1754944e-38, %v3668
        %v3670 = vsel %vm3667, %v3669, %v3665
        %v3671 = vmul.f32 1.0, %v3670
        %v3672 = vrcp.pop %v1948
        %v3673 = vmul.f32 %v1948, %v3672
        %v3674 = vsub.f32 1.0, %v3673
        %v3675 = vmul.f32 %v3672, %v3674
        %v3676 = vadd.f32 %v3672, %v3675
        %vm3677 = vweird.f32 %v1948
        %vm3678 = vweird.f32 %v3672
        %vm3679 = vmor %vm3677, %vm3678
        %v3680 = vsel %vm3679, %v3672, %v3676
        %v3681 = vand.u32 2147483647, %v1948
        %vm3682 = vcmp.eq.f32.partialorder %v3681, 8.507059e+37
        %v3683 = vand.u32 %v1948, 2147483648
        %v3684 = vor.u32 1.1754944e-38, %v3683
        %v3685 = vsel %vm3682, %v3684, %v3680
        %v3686 = vmul.f32 1.0, %v3685
        %v3687 = vrcp.pop %v1949
        %v3688 = vmul.f32 %v1949, %v3687
        %v3689 = vsub.f32 1.0, %v3688
        %v3690 = vmul.f32 %v3687, %v3689
        %v3691 = vadd.f32 %v3687, %v3690
        %vm3692 = vweird.f32 %v1949
        %vm3693 = vweird.f32 %v3687
        %vm3694 = vmor %vm3692, %vm3693
        %v3695 = vsel %vm3694, %v3687, %v3691
        %v3696 = vand.u32 2147483647, %v1949
        %vm3697 = vcmp.eq.f32.partialorder %v3696, 8.507059e+37
        %v3698 = vand.u32 %v1949, 2147483648
        %v3699 = vor.u32 1.1754944e-38, %v3698
        %v3700 = vsel %vm3697, %v3699, %v3695
        %v3701 = vmul.f32 1.0, %v3700
        %v3702 = vrcp.pop %v1950
        %v3703 = vmul.f32 %v1950, %v3702
        %v3704 = vsub.f32 1.0, %v3703
        %v3705 = vmul.f32 %v3702, %v3704
        %v3706 = vadd.f32 %v3702, %v3705
        %vm3707 = vweird.f32 %v1950
        %vm3708 = vweird.f32 %v3702
        %vm3709 = vmor %vm3707, %vm3708
        %v3710 = vsel %vm3709, %v3702, %v3706
        %v3711 = vand.u32 2147483647, %v1950
        %vm3712 = vcmp.eq.f32.partialorder %v3711, 8.507059e+37
        %v3713 = vand.u32 %v1950, 2147483648
        %v3714 = vor.u32 1.1754944e-38, %v3713
        %v3715 = vsel %vm3712, %v3714, %v3710
        %v3716 = vmul.f32 1.0, %v3715
        %v3717 = vrcp.pop %v1951
        %v3718 = vmul.f32 %v1951, %v3717
        %v3719 = vsub.f32 1.0, %v3718
        %v3720 = vmul.f32 %v3717, %v3719
        %v3721 = vadd.f32 %v3717, %v3720
        %vm3722 = vweird.f32 %v1951
        %vm3723 = vweird.f32 %v3717
        %vm3724 = vmor %vm3722, %vm3723
        %v3725 = vsel %vm3724, %v3717, %v3721
        %v3726 = vand.u32 2147483647, %v1951
        %vm3727 = vcmp.eq.f32.partialorder %v3726, 8.507059e+37
        %v3728 = vand.u32 %v1951, 2147483648
        %v3729 = vor.u32 1.1754944e-38, %v3728
        %v3730 = vsel %vm3727, %v3729, %v3725
        %v3731 = vmul.f32 1.0, %v3730
        %v3732 = vrcp.pop %v1952
        %v3733 = vmul.f32 %v1952, %v3732
        %v3734 = vsub.f32 1.0, %v3733
        %v3735 = vmul.f32 %v3732, %v3734
        %v3736 = vadd.f32 %v3732, %v3735
        %vm3737 = vweird.f32 %v1952
        %vm3738 = vweird.f32 %v3732
        %vm3739 = vmor %vm3737, %vm3738
        %v3740 = vsel %vm3739, %v3732, %v3736
        %v3741 = vand.u32 2147483647, %v1952
        %vm3742 = vcmp.eq.f32.partialorder %v3741, 8.507059e+37
        %v3743 = vand.u32 %v1952, 2147483648
        %v3744 = vor.u32 1.1754944e-38, %v3743
        %v3745 = vsel %vm3742, %v3744, %v3740
        %v3746 = vmul.f32 1.0, %v3745
        %v3747 = vrcp.pop %v1953
        %v3748 = vmul.f32 %v1953, %v3747
        %v3749 = vsub.f32 1.0, %v3748
        %v3750 = vmul.f32 %v3747, %v3749
        %v3751 = vadd.f32 %v3747, %v3750
        %vm3752 = vweird.f32 %v1953
        %vm3753 = vweird.f32 %v3747
        %vm3754 = vmor %vm3752, %vm3753
        %v3755 = vsel %vm3754, %v3747, %v3751
        %v3756 = vand.u32 2147483647, %v1953
        %vm3757 = vcmp.eq.f32.partialorder %v3756, 8.507059e+37
        %v3758 = vand.u32 %v1953, 2147483648
        %v3759 = vor.u32 1.1754944e-38, %v3758
        %v3760 = vsel %vm3757, %v3759, %v3755
        %v3761 = vmul.f32 1.0, %v3760
        %v3762 = vrcp.pop %v1954
        %v3763 = vmul.f32 %v1954, %v3762
        %v3764 = vsub.f32 1.0, %v3763
        %v3765 = vmul.f32 %v3762, %v3764
        %v3766 = vadd.f32 %v3762, %v3765
        %vm3767 = vweird.f32 %v1954
        %vm3768 = vweird.f32 %v3762
        %vm3769 = vmor %vm3767, %vm3768
        %v3770 = vsel %vm3769, %v3762, %v3766
        %v3771 = vand.u32 2147483647, %v1954
        %vm3772 = vcmp.eq.f32.partialorder %v3771, 8.507059e+37
        %v3773 = vand.u32 %v1954, 2147483648
        %v3774 = vor.u32 1.1754944e-38, %v3773
        %v3775 = vsel %vm3772, %v3774, %v3770
        %v3776 = vmul.f32 1.0, %v3775
        %v3777 = vrcp.pop %v1955
        %v3778 = vmul.f32 %v1955, %v3777
        %v3779 = vsub.f32 1.0, %v3778
        %v3780 = vmul.f32 %v3777, %v3779
        %v3781 = vadd.f32 %v3777, %v3780
        %vm3782 = vweird.f32 %v1955
        %vm3783 = vweird.f32 %v3777
        %vm3784 = vmor %vm3782, %vm3783
        %v3785 = vsel %vm3784, %v3777, %v3781
        %v3786 = vand.u32 2147483647, %v1955
        %vm3787 = vcmp.eq.f32.partialorder %v3786, 8.507059e+37
        %v3788 = vand.u32 %v1955, 2147483648
        %v3789 = vor.u32 1.1754944e-38, %v3788
        %v3790 = vsel %vm3787, %v3789, %v3785
        %v3791 = vmul.f32 1.0, %v3790
        %v3792 = vrcp.pop %v1956
        %v3793 = vmul.f32 %v1956, %v3792
        %v3794 = vsub.f32 1.0, %v3793
        %v3795 = vmul.f32 %v3792, %v3794
        %v3796 = vadd.f32 %v3792, %v3795
        %vm3797 = vweird.f32 %v1956
        %vm3798 = vweird.f32 %v3792
        %vm3799 = vmor %vm3797, %vm3798
        %v3800 = vsel %vm3799, %v3792, %v3796
        %v3801 = vand.u32 2147483647, %v1956
        %vm3802 = vcmp.eq.f32.partialorder %v3801, 8.507059e+37
        %v3803 = vand.u32 %v1956, 2147483648
        %v3804 = vor.u32 1.1754944e-38, %v3803
        %v3805 = vsel %vm3802, %v3804, %v3800
        %v3806 = vmul.f32 1.0, %v3805
        %v3807 = vrcp.pop %v1957
        %v3808 = vmul.f32 %v1957, %v3807
        %v3809 = vsub.f32 1.0, %v3808
        %v3810 = vmul.f32 %v3807, %v3809
        %v3811 = vadd.f32 %v3807, %v3810
        %vm3812 = vweird.f32 %v1957
        %vm3813 = vweird.f32 %v3807
        %vm3814 = vmor %vm3812, %vm3813
        %v3815 = vsel %vm3814, %v3807, %v3811
        %v3816 = vand.u32 2147483647, %v1957
        %vm3817 = vcmp.eq.f32.partialorder %v3816, 8.507059e+37
        %v3818 = vand.u32 %v1957, 2147483648
        %v3819 = vor.u32 1.1754944e-38, %v3818
        %v3820 = vsel %vm3817, %v3819, %v3815
        %v3821 = vmul.f32 1.0, %v3820
        %v3822 = vrcp.pop %v1958
        %v3823 = vmul.f32 %v1958, %v3822
        %v3824 = vsub.f32 1.0, %v3823
        %v3825 = vmul.f32 %v3822, %v3824
        %v3826 = vadd.f32 %v3822, %v3825
        %vm3827 = vweird.f32 %v1958
        %vm3828 = vweird.f32 %v3822
        %vm3829 = vmor %vm3827, %vm3828
        %v3830 = vsel %vm3829, %v3822, %v3826
        %v3831 = vand.u32 2147483647, %v1958
        %vm3832 = vcmp.eq.f32.partialorder %v3831, 8.507059e+37
        %v3833 = vand.u32 %v1958, 2147483648
        %v3834 = vor.u32 1.1754944e-38, %v3833
        %v3835 = vsel %vm3832, %v3834, %v3830
        %v3836 = vmul.f32 1.0, %v3835
        %v3837 = vrcp.pop %v1959
        %v3838 = vmul.f32 %v1959, %v3837
        %v3839 = vsub.f32 1.0, %v3838
        %v3840 = vmul.f32 %v3837, %v3839
        %v3841 = vadd.f32 %v3837, %v3840
        %vm3842 = vweird.f32 %v1959
        %vm3843 = vweird.f32 %v3837
        %vm3844 = vmor %vm3842, %vm3843
        %v3845 = vsel %vm3844, %v3837, %v3841
        %v3846 = vand.u32 2147483647, %v1959
        %vm3847 = vcmp.eq.f32.partialorder %v3846, 8.507059e+37
        %v3848 = vand.u32 %v1959, 2147483648
        %v3849 = vor.u32 1.1754944e-38, %v3848
        %v3850 = vsel %vm3847, %v3849, %v3845
        %v3851 = vmul.f32 1.0, %v3850
        %v3852 = vrcp.pop %v1960
        %v3853 = vmul.f32 %v1960, %v3852
        %v3854 = vsub.f32 1.0, %v3853
        %v3855 = vmul.f32 %v3852, %v3854
        %v3856 = vadd.f32 %v3852, %v3855
        %vm3857 = vweird.f32 %v1960
        %vm3858 = vweird.f32 %v3852
        %vm3859 = vmor %vm3857, %vm3858
        %v3860 = vsel %vm3859, %v3852, %v3856
        %v3861 = vand.u32 2147483647, %v1960
        %vm3862 = vcmp.eq.f32.partialorder %v3861, 8.507059e+37
        %v3863 = vand.u32 %v1960, 2147483648
        %v3864 = vor.u32 1.1754944e-38, %v3863
        %v3865 = vsel %vm3862, %v3864, %v3860
        %v3866 = vmul.f32 1.0, %v3865
        %v3867 = vrcp.pop %v1961
        %v3868 = vmul.f32 %v1961, %v3867
        %v3869 = vsub.f32 1.0, %v3868
        %v3870 = vmul.f32 %v3867, %v3869
        %v3871 = vadd.f32 %v3867, %v3870
        %vm3872 = vweird.f32 %v1961
        %vm3873 = vweird.f32 %v3867
        %vm3874 = vmor %vm3872, %vm3873
        %v3875 = vsel %vm3874, %v3867, %v3871
        %v3876 = vand.u32 2147483647, %v1961
        %vm3877 = vcmp.eq.f32.partialorder %v3876, 8.507059e+37
        %v3878 = vand.u32 %v1961, 2147483648
        %v3879 = vor.u32 1.1754944e-38, %v3878
        %v3880 = vsel %vm3877, %v3879, %v3875
        %v3881 = vmul.f32 1.0, %v3880
        %v3882 = vmul.f32 %v1322, %v1976
        %v3883 = vmul.f32 %v1323, %v1991
        %v3884 = vmul.f32 %v1324, %v2006
        %v3885 = vmul.f32 %v1325, %v2021
        %v3886 = vmul.f32 %v1326, %v2036
        %v3887 = vmul.f32 %v1327, %v2051
        %v3888 = vmul.f32 %v1328, %v2066
        %v3889 = vmul.f32 %v1329, %v2081
        %v3890 = vmul.f32 %v1330, %v2096
        %v3891 = vmul.f32 %v1331, %v2111
        %v3892 = vmul.f32 %v1332, %v2126
        %v3893 = vmul.f32 %v1333, %v2141
        %v3894 = vmul.f32 %v1334, %v2156
        %v3895 = vmul.f32 %v1335, %v2171
        %v3896 = vmul.f32 %v1336, %v2186
        %v3897 = vmul.f32 %v1337, %v2201
        %v3898 = vmul.f32 %v1338, %v2216
        %v3899 = vmul.f32 %v1339, %v2231
        %v3900 = vmul.f32 %v1340, %v2246
        %v3901 = vmul.f32 %v1341, %v2261
        %v3902 = vmul.f32 %v1342, %v2276
        %v3903 = vmul.f32 %v1343, %v2291
        %v3904 = vmul.f32 %v1344, %v2306
        %v3905 = vmul.f32 %v1345, %v2321
        %v3906 = vmul.f32 %v1346, %v2336
        %v3907 = vmul.f32 %v1347, %v2351
        %v3908 = vmul.f32 %v1348, %v2366
        %v3909 = vmul.f32 %v1349, %v2381
        %v3910 = vmul.f32 %v1350, %v2396
        %v3911 = vmul.f32 %v1351, %v2411
        %v3912 = vmul.f32 %v1352, %v2426
        %v3913 = vmul.f32 %v1353, %v2441
        %v3914 = vmul.f32 %v1354, %v2456
        %v3915 = vmul.f32 %v1355, %v2471
        %v3916 = vmul.f32 %v1356, %v2486
        %v3917 = vmul.f32 %v1357, %v2501
        %v3918 = vmul.f32 %v1358, %v2516
        %v3919 = vmul.f32 %v1359, %v2531
        %v3920 = vmul.f32 %v1360, %v2546
        %v3921 = vmul.f32 %v1361, %v2561
        %v3922 = vmul.f32 %v1362, %v2576
        %v3923 = vmul.f32 %v1363, %v2591
        %v3924 = vmul.f32 %v1364, %v2606
        %v3925 = vmul.f32 %v1365, %v2621
        %v3926 = vmul.f32 %v1366, %v2636
        %v3927 = vmul.f32 %v1367, %v2651
        %v3928 = vmul.f32 %v1368, %v2666
        %v3929 = vmul.f32 %v1369, %v2681
        %v3930 = vmul.f32 %v1370, %v2696
        %v3931 = vmul.f32 %v1371, %v2711
        %v3932 = vmul.f32 %v1372, %v2726
        %v3933 = vmul.f32 %v1373, %v2741
        %v3934 = vmul.f32 %v1374, %v2756
        %v3935 = vmul.f32 %v1375, %v2771
        %v3936 = vmul.f32 %v1376, %v2786
        %v3937 = vmul.f32 %v1377, %v2801
        %v3938 = vmul.f32 %v1378, %v2816
        %v3939 = vmul.f32 %v1379, %v2831
        %v3940 = vmul.f32 %v1380, %v2846
        %v3941 = vmul.f32 %v1381, %v2861
        %v3942 = vmul.f32 %v1382, %v2876
        %v3943 = vmul.f32 %v1383, %v2891
        %v3944 = vmul.f32 %v1384, %v2906
        %v3945 = vmul.f32 %v1385, %v2921
        %v3946 = vmul.f32 %v1386, %v2936
        %v3947 = vmul.f32 %v1387, %v2951
        %v3948 = vmul.f32 %v1388, %v2966
        %v3949 = vmul.f32 %v1389, %v2981
        %v3950 = vmul.f32 %v1390, %v2996
        %v3951 = vmul.f32 %v1391, %v3011
        %v3952 = vmul.f32 %v1392, %v3026
        %v3953 = vmul.f32 %v1393, %v3041
        %v3954 = vmul.f32 %v1394, %v3056
        %v3955 = vmul.f32 %v1395, %v3071
        %v3956 = vmul.f32 %v1396, %v3086
        %v3957 = vmul.f32 %v1397, %v3101
        %v3958 = vmul.f32 %v1398, %v3116
        %v3959 = vmul.f32 %v1399, %v3131
        %v3960 = vmul.f32 %v1400, %v3146
        %v3961 = vmul.f32 %v1401, %v3161
        %v3962 = vmul.f32 %v1402, %v3176
        %v3963 = vmul.f32 %v1403, %v3191
        %v3964 = vmul.f32 %v1404, %v3206
        %v3965 = vmul.f32 %v1405, %v3221
        %v3966 = vmul.f32 %v1406, %v3236
        %v3967 = vmul.f32 %v1407, %v3251
        %v3968 = vmul.f32 %v1408, %v3266
        %v3969 = vmul.f32 %v1409, %v3281
        %v3970 = vmul.f32 %v1410, %v3296
        %v3971 = vmul.f32 %v1411, %v3311
        %v3972 = vmul.f32 %v1412, %v3326
        %v3973 = vmul.f32 %v1413, %v3341
        %v3974 = vmul.f32 %v1414, %v3356
        %v3975 = vmul.f32 %v1415, %v3371
        %v3976 = vmul.f32 %v1416, %v3386
        %v3977 = vmul.f32 %v1417, %v3401
        %v3978 = vmul.f32 %v1418, %v3416
        %v3979 = vmul.f32 %v1419, %v3431
        %v3980 = vmul.f32 %v1420, %v3446
        %v3981 = vmul.f32 %v1421, %v3461
        %v3982 = vmul.f32 %v1422, %v3476
        %v3983 = vmul.f32 %v1423, %v3491
        %v3984 = vmul.f32 %v1424, %v3506
        %v3985 = vmul.f32 %v1425, %v3521
        %v3986 = vmul.f32 %v1426, %v3536
        %v3987 = vmul.f32 %v1427, %v3551
        %v3988 = vmul.f32 %v1428, %v3566
        %v3989 = vmul.f32 %v1429, %v3581
        %v3990 = vmul.f32 %v1430, %v3596
        %v3991 = vmul.f32 %v1431, %v3611
        %v3992 = vmul.f32 %v1432, %v3626
        %v3993 = vmul.f32 %v1433, %v3641
        %v3994 = vmul.f32 %v1434, %v3656
        %v3995 = vmul.f32 %v1435, %v3671
        %v3996 = vmul.f32 %v1436, %v3686
        %v3997 = vmul.f32 %v1437, %v3701
        %v3998 = vmul.f32 %v1438, %v3716
        %v3999 = vmul.f32 %v1439, %v3731
        %v4000 = vmul.f32 %v1440, %v3746
        %v4001 = vmul.f32 %v1441, %v3761
        %v4002 = vmul.f32 %v1442, %v3776
        %v4003 = vmul.f32 %v1443, %v3791
        %v4004 = vmul.f32 %v1444, %v3806
        %v4005 = vmul.f32 %v1445, %v3821
        %v4006 = vmul.f32 %v1446, %v3836
        %v4007 = vmul.f32 %v1447, %v3851
        %v4008 = vmul.f32 %v1448, %v3866
        %v4009 = vmul.f32 %v1449, %v3881
        %v4010 = vpack.c.bf16 %v3882, %v3882
        %v4011 = vpack.c.bf16 %v3883, %v3883
        %v4012 = vpack.c.bf16 %v3884, %v3884
        %v4013 = vpack.c.bf16 %v3885, %v3885
        %v4014 = vpack.c.bf16 %v3886, %v3886
        %v4015 = vpack.c.bf16 %v3887, %v3887
        %v4016 = vpack.c.bf16 %v3888, %v3888
        %v4017 = vpack.c.bf16 %v3889, %v3889
        %v4018 = vpack.c.bf16 %v3890, %v3890
        %v4019 = vpack.c.bf16 %v3891, %v3891
        %v4020 = vpack.c.bf16 %v3892, %v3892
        %v4021 = vpack.c.bf16 %v3893, %v3893
        %v4022 = vpack.c.bf16 %v3894, %v3894
        %v4023 = vpack.c.bf16 %v3895, %v3895
        %v4024 = vpack.c.bf16 %v3896, %v3896
        %v4025 = vpack.c.bf16 %v3897, %v3897
        %v4026 = vpack.c.bf16 %v3898, %v3898
        %v4027 = vpack.c.bf16 %v3899, %v3899
        %v4028 = vpack.c.bf16 %v3900, %v3900
        %v4029 = vpack.c.bf16 %v3901, %v3901
        %v4030 = vpack.c.bf16 %v3902, %v3902
        %v4031 = vpack.c.bf16 %v3903, %v3903
        %v4032 = vpack.c.bf16 %v3904, %v3904
        %v4033 = vpack.c.bf16 %v3905, %v3905
        %v4034 = vpack.c.bf16 %v3906, %v3906
        %v4035 = vpack.c.bf16 %v3907, %v3907
        %v4036 = vpack.c.bf16 %v3908, %v3908
        %v4037 = vpack.c.bf16 %v3909, %v3909
        %v4038 = vpack.c.bf16 %v3910, %v3910
        %v4039 = vpack.c.bf16 %v3911, %v3911
        %v4040 = vpack.c.bf16 %v3912, %v3912
        %v4041 = vpack.c.bf16 %v3913, %v3913
        %v4042 = vpack.c.bf16 %v3914, %v3914
        %v4043 = vpack.c.bf16 %v3915, %v3915
        %v4044 = vpack.c.bf16 %v3916, %v3916
        %v4045 = vpack.c.bf16 %v3917, %v3917
        %v4046 = vpack.c.bf16 %v3918, %v3918
        %v4047 = vpack.c.bf16 %v3919, %v3919
        %v4048 = vpack.c.bf16 %v3920, %v3920
        %v4049 = vpack.c.bf16 %v3921, %v3921
        %v4050 = vpack.c.bf16 %v3922, %v3922
        %v4051 = vpack.c.bf16 %v3923, %v3923
        %v4052 = vpack.c.bf16 %v3924, %v3924
        %v4053 = vpack.c.bf16 %v3925, %v3925
        %v4054 = vpack.c.bf16 %v3926, %v3926
        %v4055 = vpack.c.bf16 %v3927, %v3927
        %v4056 = vpack.c.bf16 %v3928, %v3928
        %v4057 = vpack.c.bf16 %v3929, %v3929
        %v4058 = vpack.c.bf16 %v3930, %v3930
        %v4059 = vpack.c.bf16 %v3931, %v3931
        %v4060 = vpack.c.bf16 %v3932, %v3932
        %v4061 = vpack.c.bf16 %v3933, %v3933
        %v4062 = vpack.c.bf16 %v3934, %v3934
        %v4063 = vpack.c.bf16 %v3935, %v3935
        %v4064 = vpack.c.bf16 %v3936, %v3936
        %v4065 = vpack.c.bf16 %v3937, %v3937
        %v4066 = vpack.c.bf16 %v3938, %v3938
        %v4067 = vpack.c.bf16 %v3939, %v3939
        %v4068 = vpack.c.bf16 %v3940, %v3940
        %v4069 = vpack.c.bf16 %v3941, %v3941
        %v4070 = vpack.c.bf16 %v3942, %v3942
        %v4071 = vpack.c.bf16 %v3943, %v3943
        %v4072 = vpack.c.bf16 %v3944, %v3944
        %v4073 = vpack.c.bf16 %v3945, %v3945
        %v4074 = vpack.c.bf16 %v3946, %v3946
        %v4075 = vpack.c.bf16 %v3947, %v3947
        %v4076 = vpack.c.bf16 %v3948, %v3948
        %v4077 = vpack.c.bf16 %v3949, %v3949
        %v4078 = vpack.c.bf16 %v3950, %v3950
        %v4079 = vpack.c.bf16 %v3951, %v3951
        %v4080 = vpack.c.bf16 %v3952, %v3952
        %v4081 = vpack.c.bf16 %v3953, %v3953
        %v4082 = vpack.c.bf16 %v3954, %v3954
        %v4083 = vpack.c.bf16 %v3955, %v3955
        %v4084 = vpack.c.bf16 %v3956, %v3956
        %v4085 = vpack.c.bf16 %v3957, %v3957
        %v4086 = vpack.c.bf16 %v3958, %v3958
        %v4087 = vpack.c.bf16 %v3959, %v3959
        %v4088 = vpack.c.bf16 %v3960, %v3960
        %v4089 = vpack.c.bf16 %v3961, %v3961
        %v4090 = vpack.c.bf16 %v3962, %v3962
        %v4091 = vpack.c.bf16 %v3963, %v3963
        %v4092 = vpack.c.bf16 %v3964, %v3964
        %v4093 = vpack.c.bf16 %v3965, %v3965
        %v4094 = vpack.c.bf16 %v3966, %v3966
        %v4095 = vpack.c.bf16 %v3967, %v3967
        %v4096 = vpack.c.bf16 %v3968, %v3968
        %v4097 = vpack.c.bf16 %v3969, %v3969
        %v4098 = vpack.c.bf16 %v3970, %v3970
        %v4099 = vpack.c.bf16 %v3971, %v3971
        %v4100 = vpack.c.bf16 %v3972, %v3972
        %v4101 = vpack.c.bf16 %v3973, %v3973
        %v4102 = vpack.c.bf16 %v3974, %v3974
        %v4103 = vpack.c.bf16 %v3975, %v3975
        %v4104 = vpack.c.bf16 %v3976, %v3976
        %v4105 = vpack.c.bf16 %v3977, %v3977
        %v4106 = vpack.c.bf16 %v3978, %v3978
        %v4107 = vpack.c.bf16 %v3979, %v3979
        %v4108 = vpack.c.bf16 %v3980, %v3980
        %v4109 = vpack.c.bf16 %v3981, %v3981
        %v4110 = vpack.c.bf16 %v3982, %v3982
        %v4111 = vpack.c.bf16 %v3983, %v3983
        %v4112 = vpack.c.bf16 %v3984, %v3984
        %v4113 = vpack.c.bf16 %v3985, %v3985
        %v4114 = vpack.c.bf16 %v3986, %v3986
        %v4115 = vpack.c.bf16 %v3987, %v3987
        %v4116 = vpack.c.bf16 %v3988, %v3988
        %v4117 = vpack.c.bf16 %v3989, %v3989
        %v4118 = vpack.c.bf16 %v3990, %v3990
        %v4119 = vpack.c.bf16 %v3991, %v3991
        %v4120 = vpack.c.bf16 %v3992, %v3992
        %v4121 = vpack.c.bf16 %v3993, %v3993
        %v4122 = vpack.c.bf16 %v3994, %v3994
        %v4123 = vpack.c.bf16 %v3995, %v3995
        %v4124 = vpack.c.bf16 %v3996, %v3996
        %v4125 = vpack.c.bf16 %v3997, %v3997
        %v4126 = vpack.c.bf16 %v3998, %v3998
        %v4127 = vpack.c.bf16 %v3999, %v3999
        %v4128 = vpack.c.bf16 %v4000, %v4000
        %v4129 = vpack.c.bf16 %v4001, %v4001
        %v4130 = vpack.c.bf16 %v4002, %v4002
        %v4131 = vpack.c.bf16 %v4003, %v4003
        %v4132 = vpack.c.bf16 %v4004, %v4004
        %v4133 = vpack.c.bf16 %v4005, %v4005
        %v4134 = vpack.c.bf16 %v4006, %v4006
        %v4135 = vpack.c.bf16 %v4007, %v4007
        %v4136 = vpack.c.bf16 %v4008, %v4008
        %v4137 = vpack.c.bf16 %v4009, %v4009
        %4138 = vst [vmem:[%s191] sm:$0xf] %v4010
        %4139 = vst [vmem:[%s191 + $0x4] sm:$0xf] %v4011
        %4140 = vst [vmem:[%s191 + $0x8] sm:$0xf] %v4012
        %4141 = vst [vmem:[%s191 + $0xc] sm:$0xf] %v4013
        %4142 = vst [vmem:[%s191 + $0x10] sm:$0xf] %v4014
        %4143 = vst [vmem:[%s191 + $0x14] sm:$0xf] %v4015
        %4144 = vst [vmem:[%s191 + $0x18] sm:$0xf] %v4016
        %4145 = vst [vmem:[%s191 + $0x1c] sm:$0xf] %v4017
        %4146 = vst [vmem:[%s191 + $0x20] sm:$0xf] %v4018
        %4147 = vst [vmem:[%s191 + $0x24] sm:$0xf] %v4019
        %4148 = vst [vmem:[%s191 + $0x28] sm:$0xf] %v4020
        %4149 = vst [vmem:[%s191 + $0x2c] sm:$0xf] %v4021
        %4150 = vst [vmem:[%s191 + $0x30] sm:$0xf] %v4022
        %4151 = vst [vmem:[%s191 + $0x34] sm:$0xf] %v4023
        %4152 = vst [vmem:[%s191 + $0x38] sm:$0xf] %v4024
        %4153 = vst [vmem:[%s191 + $0x3c] sm:$0xf] %v4025
        %4154 = vst [vmem:[%s191 + $0x40] sm:$0xf] %v4026
        %4155 = vst [vmem:[%s191 + $0x44] sm:$0xf] %v4027
        %4156 = vst [vmem:[%s191 + $0x48] sm:$0xf] %v4028
        %4157 = vst [vmem:[%s191 + $0x4c] sm:$0xf] %v4029
        %4158 = vst [vmem:[%s191 + $0x50] sm:$0xf] %v4030
        %4159 = vst [vmem:[%s191 + $0x54] sm:$0xf] %v4031
        %4160 = vst [vmem:[%s191 + $0x58] sm:$0xf] %v4032
        %4161 = vst [vmem:[%s191 + $0x5c] sm:$0xf] %v4033
        %4162 = vst [vmem:[%s191 + $0x60] sm:$0xf] %v4034
        %4163 = vst [vmem:[%s191 + $0x64] sm:$0xf] %v4035
        %4164 = vst [vmem:[%s191 + $0x68] sm:$0xf] %v4036
        %4165 = vst [vmem:[%s191 + $0x6c] sm:$0xf] %v4037
        %4166 = vst [vmem:[%s191 + $0x70] sm:$0xf] %v4038
        %4167 = vst [vmem:[%s191 + $0x74] sm:$0xf] %v4039
        %4168 = vst [vmem:[%s191 + $0x78] sm:$0xf] %v4040
        %4169 = vst [vmem:[%s191 + $0x7c] sm:$0xf] %v4041
        %4170 = vst [vmem:[%s191 + $0x80] sm:$0xf] %v4042
        %4171 = vst [vmem:[%s191 + $0x84] sm:$0xf] %v4043
        %4172 = vst [vmem:[%s191 + $0x88] sm:$0xf] %v4044
        %4173 = vst [vmem:[%s191 + $0x8c] sm:$0xf] %v4045
        %4174 = vst [vmem:[%s191 + $0x90] sm:$0xf] %v4046
        %4175 = vst [vmem:[%s191 + $0x94] sm:$0xf] %v4047
        %4176 = vst [vmem:[%s191 + $0x98] sm:$0xf] %v4048
        %4177 = vst [vmem:[%s191 + $0x9c] sm:$0xf] %v4049
        %4178 = vst [vmem:[%s191 + $0xa0] sm:$0xf] %v4050
        %4179 = vst [vmem:[%s191 + $0xa4] sm:$0xf] %v4051
        %4180 = vst [vmem:[%s191 + $0xa8] sm:$0xf] %v4052
        %4181 = vst [vmem:[%s191 + $0xac] sm:$0xf] %v4053
        %4182 = vst [vmem:[%s191 + $0xb0] sm:$0xf] %v4054
        %4183 = vst [vmem:[%s191 + $0xb4] sm:$0xf] %v4055
        %4184 = vst [vmem:[%s191 + $0xb8] sm:$0xf] %v4056
        %4185 = vst [vmem:[%s191 + $0xbc] sm:$0xf] %v4057
        %4186 = vst [vmem:[%s191 + $0xc0] sm:$0xf] %v4058
        %4187 = vst [vmem:[%s191 + $0xc4] sm:$0xf] %v4059
        %4188 = vst [vmem:[%s191 + $0xc8] sm:$0xf] %v4060
        %4189 = vst [vmem:[%s191 + $0xcc] sm:$0xf] %v4061
        %4190 = vst [vmem:[%s191 + $0xd0] sm:$0xf] %v4062
        %4191 = vst [vmem:[%s191 + $0xd4] sm:$0xf] %v4063
        %4192 = vst [vmem:[%s191 + $0xd8] sm:$0xf] %v4064
        %4193 = vst [vmem:[%s191 + $0xdc] sm:$0xf] %v4065
        %4194 = vst [vmem:[%s191 + $0xe0] sm:$0xf] %v4066
        %4195 = vst [vmem:[%s191 + $0xe4] sm:$0xf] %v4067
        %4196 = vst [vmem:[%s191 + $0xe8] sm:$0xf] %v4068
        %4197 = vst [vmem:[%s191 + $0xec] sm:$0xf] %v4069
        %4198 = vst [vmem:[%s191 + $0xf0] sm:$0xf] %v4070
        %4199 = vst [vmem:[%s191 + $0xf4] sm:$0xf] %v4071
        %4200 = vst [vmem:[%s191 + $0xf8] sm:$0xf] %v4072
        %4201 = vst [vmem:[%s191 + $0xfc] sm:$0xf] %v4073
        %4202 = vst [vmem:[%s191 + $0x100] sm:$0xf] %v4074
        %4203 = vst [vmem:[%s191 + $0x104] sm:$0xf] %v4075
        %4204 = vst [vmem:[%s191 + $0x108] sm:$0xf] %v4076
        %4205 = vst [vmem:[%s191 + $0x10c] sm:$0xf] %v4077
        %4206 = vst [vmem:[%s191 + $0x110] sm:$0xf] %v4078
        %4207 = vst [vmem:[%s191 + $0x114] sm:$0xf] %v4079
        %4208 = vst [vmem:[%s191 + $0x118] sm:$0xf] %v4080
        %4209 = vst [vmem:[%s191 + $0x11c] sm:$0xf] %v4081
        %4210 = vst [vmem:[%s191 + $0x120] sm:$0xf] %v4082
        %4211 = vst [vmem:[%s191 + $0x124] sm:$0xf] %v4083
        %4212 = vst [vmem:[%s191 + $0x128] sm:$0xf] %v4084
        %4213 = vst [vmem:[%s191 + $0x12c] sm:$0xf] %v4085
        %4214 = vst [vmem:[%s191 + $0x130] sm:$0xf] %v4086
        %4215 = vst [vmem:[%s191 + $0x134] sm:$0xf] %v4087
        %4216 = vst [vmem:[%s191 + $0x138] sm:$0xf] %v4088
        %4217 = vst [vmem:[%s191 + $0x13c] sm:$0xf] %v4089
        %4218 = vst [vmem:[%s191 + $0x140] sm:$0xf] %v4090
        %4219 = vst [vmem:[%s191 + $0x144] sm:$0xf] %v4091
        %4220 = vst [vmem:[%s191 + $0x148] sm:$0xf] %v4092
        %4221 = vst [vmem:[%s191 + $0x14c] sm:$0xf] %v4093
        %4222 = vst [vmem:[%s191 + $0x150] sm:$0xf] %v4094
        %4223 = vst [vmem:[%s191 + $0x154] sm:$0xf] %v4095
        %4224 = vst [vmem:[%s191 + $0x158] sm:$0xf] %v4096
        %4225 = vst [vmem:[%s191 + $0x15c] sm:$0xf] %v4097
        %4226 = vst [vmem:[%s191 + $0x160] sm:$0xf] %v4098
        %4227 = vst [vmem:[%s191 + $0x164] sm:$0xf] %v4099
        %4228 = vst [vmem:[%s191 + $0x168] sm:$0xf] %v4100
        %4229 = vst [vmem:[%s191 + $0x16c] sm:$0xf] %v4101
        %4230 = vst [vmem:[%s191 + $0x170] sm:$0xf] %v4102
        %4231 = vst [vmem:[%s191 + $0x174] sm:$0xf] %v4103
        %4232 = vst [vmem:[%s191 + $0x178] sm:$0xf] %v4104
        %4233 = vst [vmem:[%s191 + $0x17c] sm:$0xf] %v4105
        %4234 = vst [vmem:[%s191 + $0x180] sm:$0xf] %v4106
        %4235 = vst [vmem:[%s191 + $0x184] sm:$0xf] %v4107
        %4236 = vst [vmem:[%s191 + $0x188] sm:$0xf] %v4108
        %4237 = vst [vmem:[%s191 + $0x18c] sm:$0xf] %v4109
        %4238 = vst [vmem:[%s191 + $0x190] sm:$0xf] %v4110
        %4239 = vst [vmem:[%s191 + $0x194] sm:$0xf] %v4111
        %4240 = vst [vmem:[%s191 + $0x198] sm:$0xf] %v4112
        %4241 = vst [vmem:[%s191 + $0x19c] sm:$0xf] %v4113
        %4242 = vst [vmem:[%s191 + $0x1a0] sm:$0xf] %v4114
        %4243 = vst [vmem:[%s191 + $0x1a4] sm:$0xf] %v4115
        %4244 = vst [vmem:[%s191 + $0x1a8] sm:$0xf] %v4116
        %4245 = vst [vmem:[%s191 + $0x1ac] sm:$0xf] %v4117
        %4246 = vst [vmem:[%s191 + $0x1b0] sm:$0xf] %v4118
        %4247 = vst [vmem:[%s191 + $0x1b4] sm:$0xf] %v4119
        %4248 = vst [vmem:[%s191 + $0x1b8] sm:$0xf] %v4120
        %4249 = vst [vmem:[%s191 + $0x1bc] sm:$0xf] %v4121
        %4250 = vst [vmem:[%s191 + $0x1c0] sm:$0xf] %v4122
        %4251 = vst [vmem:[%s191 + $0x1c4] sm:$0xf] %v4123
        %4252 = vst [vmem:[%s191 + $0x1c8] sm:$0xf] %v4124
        %4253 = vst [vmem:[%s191 + $0x1cc] sm:$0xf] %v4125
        %4254 = vst [vmem:[%s191 + $0x1d0] sm:$0xf] %v4126
        %4255 = vst [vmem:[%s191 + $0x1d4] sm:$0xf] %v4127
        %4256 = vst [vmem:[%s191 + $0x1d8] sm:$0xf] %v4128
        %4257 = vst [vmem:[%s191 + $0x1dc] sm:$0xf] %v4129
        %4258 = vst [vmem:[%s191 + $0x1e0] sm:$0xf] %v4130
        %4259 = vst [vmem:[%s191 + $0x1e4] sm:$0xf] %v4131
        %4260 = vst [vmem:[%s191 + $0x1e8] sm:$0xf] %v4132
        %4261 = vst [vmem:[%s191 + $0x1ec] sm:$0xf] %v4133
        %4262 = vst [vmem:[%s191 + $0x1f0] sm:$0xf] %v4134
        %4263 = vst [vmem:[%s191 + $0x1f4] sm:$0xf] %v4135
        %4264 = vst [vmem:[%s191 + $0x1f8] sm:$0xf] %v4136
        %4265 = vst [vmem:[%s191 + $0x1fc] sm:$0xf] %v4137
        %s4266 = sand.u32 %s115, 1
        %s4267 = scalar_lea.sflag [#allocation3], %s4266
        %s4268 = sand.u32 %s115, 1
        %s4269 = smul.addr %s4268, 512
        %s4270 = scalar_lea.vmem [#allocation2], %s4269
        // Predicated region
        $region37: #{tpu_custom_call.1} parent=35 // pred_check
          %p4271 = pneg %p125
        $region38: #{tpu_custom_call.1} parent=35 // pred_check_branch
          %4273 = sbr.rel (%p4271) target = $region40
        $region39: #{tpu_custom_call.1} parent=35 // pred_region
          %s4274 = smul.u32 128, %s18
          %4276 = vsyncadd %s4267, 0
          %s4277 = smul.addr %s4274, 4
          %s4278 = scalar_lea.hbm %s4, %s4277
          %s4279 = sshll.u32 %s4270, 4
          %s4280 = int_to_ptr.vmem [resolvable:$true] %s4279
          %s4281 = sshll.u32 %s4278, 4
          %s4282 = int_to_ptr.hbm [resolvable:$true] %s4281
          %4287 = dma.vmem_to_hbm [thread:$0]  %s4280, 8192, %s4282, %s4267, 64, 64, 4
        $region40: #{tpu_custom_call.1} parent=35 // pred_fallthru
          _
      $region36: #{tpu_custom_call.1} parent=5 // pred_fallthru
        _
      %p4288 = scmp.le.s32.totalorder 2, %s13
      // Predicated region
      $region41: #{tpu_custom_call.1} parent=5 // pred_check
        %p4289 = pneg %p4288
      $region42: #{tpu_custom_call.1} parent=5 // pred_check_branch
        %4291 = sbr.rel (%p4289) target = $region44
      $region43: #{tpu_custom_call.1} parent=5 // pred_region
        %s4292 = ssub.s32 %s13, 2
        // Predicated region
        $region45: #{tpu_custom_call.1} parent=43 // pred_check
          %p4293 = pneg %p131
        $region46: #{tpu_custom_call.1} parent=43 // pred_check_branch
          %4295 = sbr.rel (%p4293) target = $region48
        $region47: #{tpu_custom_call.1} parent=43 // pred_region
          %s4296 = sand.u32 %s116, 1
          %s4297 = scalar_lea.sflag [#allocation3], %s4296
          %s4298 = sand.u32 %s116, 1
          %s4299 = smul.addr %s4298, 512
          %s4300 = scalar_lea.vmem [#allocation2], %s4299
          %4302 = dma.done %s4297, 8192
        $region48: #{tpu_custom_call.1} parent=43 // pred_fallthru
          _
      $region44: #{tpu_custom_call.1} parent=5 // pred_fallthru
        _
    $region6: #{tpu_custom_call.1} parent=1 // loop_footer
      %s17 = sadd.s32 1, %s13
    $region7: #{tpu_custom_call.1} parent=1 // loop_footer_branch
      %12 = sbr.rel target = $region3
    $region8: #{tpu_custom_call.1} parent=1 // loop_exit
      _
    %4303 = vsyncpa [#allocation3], 1
    %s4304 = scalar_lea.sflag [#allocation3], 1
    %4305 = vsyncpa %s4304, 1

</llo_original>
